<compile_context>
chip_gen: v6e
topology: v6e:2x2x1
jax: 0.10.0
libtpu: 0.0.40
codegen_flags: <defaults>
</compile_context>

<pallas_src>
import jax
import jax.numpy as jnp
from jax.experimental import pallas as pl
from jax.experimental.pallas import tpu as pltpu

# ----------------------------------------------------------------------------
# Model dimensions (all feature dims are 128-lane after padding)
# ----------------------------------------------------------------------------
INPUT_SIZE = 128
HIDDEN1 = 128
HIDDEN2 = 128
HIDDEN3 = 128
LATENT = 64
ENC_OUT = 2 * LATENT          # 128, lane-dense encoder output [mu | logvar]
NEG_SLOPE = 0.01              # nn.LeakyReLU default
TILE_B = 256                  # batch rows per grid step (MXU M per matmul)
BATCH = 512                   # example batch: 2 tiles -> both v7x TCs busy


def vae_kernel(xin_ref, w_ref, b_ref, out_ref):
    """xin_ref: (2, TB, 128) f32  -> [0]=x, [1]=eps zero-padded to 128 lanes
       w_ref:   (8, 128, 128) bf16 weights, (in, out) layout;
                layer order = enc1..enc4, dec1(zero-padded K)..dec4
       b_ref:   (8, 128) f32 biases (same layer order)
       out_ref: (3, TB, 128) f32 -> [0]=recon, [1]=[mu|logvar], [2]=[z|0]"""

    def dense(h_bf16, idx):
        # bf16 x bf16 MXU matmul, f32 accumulation, f32 bias add.
        y = jnp.dot(h_bf16, w_ref[idx], preferred_element_type=jnp.float32)
        return y + b_ref[idx:idx + 1, :]

    def leaky_to_bf16(y):
        # LeakyReLU as mul+max; one cast per layer feeding the next MXU op.
        # TODO(synk): on v6e/v7x this elementwise chain could stay bf16; kept f32
        # so the same kernel is correct/fast on v5e (no bf16 VPU/EUP there).
        return jnp.maximum(y, NEG_SLOPE * y).astype(jnp.bfloat16)

    # ---------------- encoder ----------------
    h = leaky_to_bf16(dense(xin_ref[0].astype(jnp.bfloat16), 0))
    h = leaky_to_bf16(dense(h, 1))
    h = leaky_to_bf16(dense(h, 2))
    enc = dense(h, 3)                                   # (TB, 128) = [mu | logvar]
    out_ref[1] = enc                                    # lane-dense store

    # ---------------- reparameterize (all 128-lane, no 64-wide slices) -------
    lane = jax.lax.broadcasted_iota(jnp.int32, enc.shape, 1)
    is_mu_lane = lane < LATENT
    swapped = pltpu.roll(enc, shift=LATENT, axis=1)     # [logvar | mu] via XLU slot
    logvar_lo = jnp.where(is_mu_lane, swapped, 0.0)     # [logvar | 0]
    std_lo = jnp.exp(0.5 * logvar_lo)                   # [std | 1]
    mu_lo = jnp.where(is_mu_lane, enc, 0.0)             # [mu | 0]
    eps = xin_ref[1]                                    # [eps | 0]  (upper lanes 0)
    z_full = mu_lo + eps * std_lo                       # [z | 0]
    out_ref[2] = z_full

    # ---------------- decoder ----------------
    # dec layer-1 weight rows [64:128] are zero-padded, so padded z lanes add 0.
    d = leaky_to_bf16(dense(z_full.astype(jnp.bfloat16), 4))
    d = leaky_to_bf16(dense(d, 5))
    d = leaky_to_bf16(dense(d, 6))
    logits = dense(d, 7)
    # sigmoid: EUP exp + approx EUP reciprocal (~1e-3 rel; within 5e-3 test tol)
    out_ref[0] = pl.reciprocal(1.0 + jnp.exp(-logits), approx=True)


def vae_forward(x, eps, w_slab, b_slab, tile_b=TILE_B):
    """Runs the VAE forward pass. Returns (recon, mu, logvar, z)."""
    B = x.shape[0]
    tb = min(tile_b, max(8, pl.cdiv(B, 8) * 8))         # batch tile, sublane-aligned
    b_pad = pl.cdiv(B, tb) * tb
    grid = (b_pad // tb,)

    # Input slab (2, B_pad, 128) = [x ; eps_pad].
    # Invariant the kernel relies on: eps lanes [64:128] are exactly zero, so
    # z_full's upper lanes come out exactly zero (std=exp(0)=1, mu=0, eps=0).
    eps_pad = jnp.pad(eps, ((0, 0), (0, ENC_OUT - LATENT)))
    xin = jnp.stack([x, eps_pad])                        # (2, B, 128)
    if b_pad != B:
        xin = jnp.pad(xin, ((0, 0), (0, b_pad - B), (0, 0)))

    cost = pl.CostEstimate(
        flops=2 * 8 * b_pad * INPUT_SIZE * INPUT_SIZE + 16 * b_pad * INPUT_SIZE,
        transcendentals=2 * b_pad * INPUT_SIZE,
        bytes_accessed=(xin.size + 3 * b_pad * ENC_OUT + b_slab.size) * 4
                       + w_slab.size * 2,
    )

    out = pl.pallas_call(
        vae_kernel,
        out_shape=jax.ShapeDtypeStruct((3, b_pad, ENC_OUT), jnp.float32),
        grid_spec=pltpu.PrefetchScalarGridSpec(
            num_scalar_prefetch=0,
            grid=grid,
            in_specs=[
                pl.BlockSpec((2, tb, INPUT_SIZE), lambda i: (0, i, 0)),
                # Constant block index -> weight/bias slabs stay VMEM-resident.
                pl.BlockSpec((8, INPUT_SIZE, INPUT_SIZE), lambda i: (0, 0, 0)),
                pl.BlockSpec((8, INPUT_SIZE), lambda i: (0, 0)),
            ],
            out_specs=pl.BlockSpec((3, tb, ENC_OUT), lambda i: (0, i, 0)),
        ),
        compiler_params=pltpu.CompilerParams(
            dimension_semantics=("parallel",)),
        cost_estimate=cost,
    )(xin, w_slab, b_slab)

    recon = out[0, :B, :]                 # free XLA views of the packed output
    enc = out[1, :B, :]
    mu, logvar = enc[:, :LATENT], enc[:, LATENT:]
    z = out[2, :B, :LATENT]
    return recon, mu, logvar, z


# ----------------------------------------------------------------------------
# Deterministic parameter init (PyTorch-Linear-style uniform bounds).
# Weights stored pre-transposed as (in_features, out_features).
# ----------------------------------------------------------------------------
def init_linear(key, fan_in, fan_out):
    kw, kb = jax.random.split(key)
    bound = 1.0 / jnp.sqrt(fan_in)
    w = jax.random.uniform(kw, (fan_in, fan_out), jnp.float32, -bound, bound)
    b = jax.random.uniform(kb, (fan_out,), jnp.float32, -bound, bound)
    return w, b


def init_params(key):
    layer_dims = [
        # encoder
        (INPUT_SIZE, HIDDEN1), (HIDDEN1, HIDDEN2),
        (HIDDEN2, HIDDEN3), (HIDDEN3, ENC_OUT),
        # decoder
        (LATENT, HIDDEN3), (HIDDEN3, HIDDEN2),
        (HIDDEN2, HIDDEN1), (HIDDEN1, INPUT_SIZE),
    ]
    keys = jax.random.split(key, len(layer_dims))
    return [init_linear(k, din, dout) for k, (din, dout) in zip(keys, layer_dims)]


def pack_params(params):
    """Pack 8 layers into one bf16 weight slab + one f32 bias slab.
    Silent invariant the kernel relies on: the decoder's first weight (K=64) is
    zero-padded to K=128 so the padded z lanes contribute exactly 0."""
    ws, bs = [], []
    for w, b in params:
        if w.shape[0] < INPUT_SIZE:
            w = jnp.pad(w, ((0, INPUT_SIZE - w.shape[0]), (0, 0)))
        ws.append(w.astype(jnp.bfloat16))
        bs.append(b.astype(jnp.float32))
    w_slab, b_slab = jnp.stack(ws), jnp.stack(bs)   # (8,128,128) bf16, (8,128) f32
    assert w_slab.shape == (8, INPUT_SIZE, INPUT_SIZE)
    assert b_slab.shape == (8, INPUT_SIZE)
    return w_slab, b_slab


# ----------------------------------------------------------------------------
# Pure-JAX reference mirroring the kernel's precision (bf16 MXU, f32 accum)
# ----------------------------------------------------------------------------
def vae_reference(x, eps, params):
    def dense(h, w, b):
        return jnp.dot(h.astype(jnp.bfloat16), w.astype(jnp.bfloat16),
                       preferred_element_type=jnp.float32) + b[None, :]

    def leaky(v):
        return jnp.maximum(v, NEG_SLOPE * v)

    (we1, be1), (we2, be2), (we3, be3), (we4, be4), \
        (wd1, bd1), (wd2, bd2), (wd3, bd3), (wd4, bd4) = params

    h = leaky(dense(x, we1, be1))
    h = leaky(dense(h, we2, be2))
    h = leaky(dense(h, we3, be3))
    enc = dense(h, we4, be4)
    mu, logvar = enc[:, :LATENT], enc[:, LATENT:]
    z = mu + eps * jnp.exp(0.5 * logvar)
    d = leaky(dense(z, wd1, bd1))
    d = leaky(dense(d, wd2, bd2))
    d = leaky(dense(d, wd3, bd3))
    recon = jax.nn.sigmoid(dense(d, wd4, bd4))
    return recon, mu, logvar, z


if __name__ == "__main__":
    key = jax.random.PRNGKey(0)
    k_param, k_x, k_eps = jax.random.split(key, 3)

    params = init_params(k_param)
    w_slab, b_slab = pack_params(params)

    x = jax.random.uniform(k_x, (BATCH, INPUT_SIZE), jnp.float32)   # sigmoid-range data
    eps = jax.random.normal(k_eps, (BATCH, LATENT), jnp.float32)    # reparam noise

    recon, mu, logvar, z = vae_forward(x, eps, w_slab, b_slab)
    jax.block_until_ready((recon, mu, logvar, z))

    r_recon, r_mu, r_logvar, r_z = vae_reference(x, eps, params)
    assert jnp.allclose(mu, r_mu, atol=5e-3, rtol=5e-3)
    assert jnp.allclose(logvar, r_logvar, atol=5e-3, rtol=5e-3)
    assert jnp.allclose(z, r_z, atol=5e-3, rtol=5e-3)
    assert jnp.allclose(recon, r_recon, atol=5e-3, rtol=5e-3)

    # TODO(synk): loss()/sample()/sample_attack() are host-side utilities outside
    # forward() (data-dependent row filtering); not implemented as kernels.
    print("KERNEL_OK")
</pallas_src>

<mosaic_0001>
module attributes {stable_mosaic.version = 11 : i64} {
  func.func @vae_kernel(%arg0: i32, %arg1: memref<2x256x128xf32, #tpu.memory_space<vmem>>, %arg2: memref<8x128x128xbf16, #tpu.memory_space<vmem>>, %arg3: memref<8x128xf32, #tpu.memory_space<vmem>>, %arg4: memref<3x256x128xf32, #tpu.memory_space<vmem>>) attributes {dimension_semantics = [#tpu.dimension_semantics<parallel>], iteration_bounds = array<i64: 2>, scalar_prefetch = 0 : i64, scratch_operands = 0 : i64, tpu.core_type = #tpu.core_type<tc>, window_params = [{transform_indices = @transform_0, window_bounds = array<i64: 2, 256, 128>}, {pipeline_mode = #tpu.pipeline_mode<synchronous>, transform_indices = @transform_1, window_bounds = array<i64: 8, 128, 128>}, {pipeline_mode = #tpu.pipeline_mode<synchronous>, transform_indices = @transform_2, window_bounds = array<i64: 8, 128>}, {transform_indices = @transform_3, window_bounds = array<i64: 3, 256, 128>}]} {
    %c0 = arith.constant 0 : index
    %c0_0 = arith.constant 0 : index
    %c0_1 = arith.constant 0 : index
    %0 = vector.load %arg1[%c0, %c0_0, %c0_1] : memref<2x256x128xf32, #tpu.memory_space<vmem>>, vector<1x256x128xf32>
    %1 = vector.shape_cast %0 : vector<1x256x128xf32> to vector<256x128xf32>
    %2 = arith.truncf %1 : vector<256x128xf32> to vector<256x128xbf16>
    %c0_2 = arith.constant 0 : index
    %c0_3 = arith.constant 0 : index
    %c0_4 = arith.constant 0 : index
    %3 = vector.load %arg2[%c0_2, %c0_3, %c0_4] : memref<8x128x128xbf16, #tpu.memory_space<vmem>>, vector<1x128x128xbf16>
    %4 = vector.shape_cast %3 : vector<1x128x128xbf16> to vector<128x128xbf16>
    %cst = arith.constant dense<0.000000e+00> : vector<256x128xf32>
    %5 = tpu.matmul %2, %4, %cst {dimension_numbers = #tpu.dot_dimension_numbers<[1], [0], [0], [1], [0, 0, 1, 1], [], []>} : vector<256x128xbf16>, vector<128x128xbf16>, vector<256x128xf32> -> vector<256x128xf32>
    %c0_5 = arith.constant 0 : index
    %c0_6 = arith.constant 0 : index
    %6 = vector.load %arg3[%c0_5, %c0_6] : memref<8x128xf32, #tpu.memory_space<vmem>>, vector<1x128xf32>
    %7 = vector.broadcast %6 : vector<1x128xf32> to vector<256x128xf32>
    %8 = arith.addf %5, %7 : vector<256x128xf32>
    %cst_7 = arith.constant 0.00999999977 : f32
    %9 = vector.broadcast %cst_7 : f32 to vector<256x128xf32>
    %10 = arith.mulf %9, %8 : vector<256x128xf32>
    %11 = arith.maximumf %8, %10 : vector<256x128xf32>
    %12 = arith.truncf %11 : vector<256x128xf32> to vector<256x128xbf16>
    %c1 = arith.constant 1 : index
    %c0_8 = arith.constant 0 : index
    %c0_9 = arith.constant 0 : index
    %13 = vector.load %arg2[%c1, %c0_8, %c0_9] : memref<8x128x128xbf16, #tpu.memory_space<vmem>>, vector<1x128x128xbf16>
    %14 = vector.shape_cast %13 : vector<1x128x128xbf16> to vector<128x128xbf16>
    %cst_10 = arith.constant dense<0.000000e+00> : vector<256x128xf32>
    %15 = tpu.matmul %12, %14, %cst_10 {dimension_numbers = #tpu.dot_dimension_numbers<[1], [0], [0], [1], [0, 0, 1, 1], [], []>} : vector<256x128xbf16>, vector<128x128xbf16>, vector<256x128xf32> -> vector<256x128xf32>
    %c1_11 = arith.constant 1 : index
    %c0_12 = arith.constant 0 : index
    %16 = vector.load %arg3[%c1_11, %c0_12] : memref<8x128xf32, #tpu.memory_space<vmem>>, vector<1x128xf32>
    %17 = vector.broadcast %16 : vector<1x128xf32> to vector<256x128xf32>
    %18 = arith.addf %15, %17 : vector<256x128xf32>
    %cst_13 = arith.constant 0.00999999977 : f32
    %19 = vector.broadcast %cst_13 : f32 to vector<256x128xf32>
    %20 = arith.mulf %19, %18 : vector<256x128xf32>
    %21 = arith.maximumf %18, %20 : vector<256x128xf32>
    %22 = arith.truncf %21 : vector<256x128xf32> to vector<256x128xbf16>
    %c2 = arith.constant 2 : index
    %c0_14 = arith.constant 0 : index
    %c0_15 = arith.constant 0 : index
    %23 = vector.load %arg2[%c2, %c0_14, %c0_15] : memref<8x128x128xbf16, #tpu.memory_space<vmem>>, vector<1x128x128xbf16>
    %24 = vector.shape_cast %23 : vector<1x128x128xbf16> to vector<128x128xbf16>
    %cst_16 = arith.constant dense<0.000000e+00> : vector<256x128xf32>
    %25 = tpu.matmul %22, %24, %cst_16 {dimension_numbers = #tpu.dot_dimension_numbers<[1], [0], [0], [1], [0, 0, 1, 1], [], []>} : vector<256x128xbf16>, vector<128x128xbf16>, vector<256x128xf32> -> vector<256x128xf32>
    %c2_17 = arith.constant 2 : index
    %c0_18 = arith.constant 0 : index
    %26 = vector.load %arg3[%c2_17, %c0_18] : memref<8x128xf32, #tpu.memory_space<vmem>>, vector<1x128xf32>
    %27 = vector.broadcast %26 : vector<1x128xf32> to vector<256x128xf32>
    %28 = arith.addf %25, %27 : vector<256x128xf32>
    %cst_19 = arith.constant 0.00999999977 : f32
    %29 = vector.broadcast %cst_19 : f32 to vector<256x128xf32>
    %30 = arith.mulf %29, %28 : vector<256x128xf32>
    %31 = arith.maximumf %28, %30 : vector<256x128xf32>
    %32 = arith.truncf %31 : vector<256x128xf32> to vector<256x128xbf16>
    %c3 = arith.constant 3 : index
    %c0_20 = arith.constant 0 : index
    %c0_21 = arith.constant 0 : index
    %33 = vector.load %arg2[%c3, %c0_20, %c0_21] : memref<8x128x128xbf16, #tpu.memory_space<vmem>>, vector<1x128x128xbf16>
    %34 = vector.shape_cast %33 : vector<1x128x128xbf16> to vector<128x128xbf16>
    %cst_22 = arith.constant dense<0.000000e+00> : vector<256x128xf32>
    %35 = tpu.matmul %32, %34, %cst_22 {dimension_numbers = #tpu.dot_dimension_numbers<[1], [0], [0], [1], [0, 0, 1, 1], [], []>} : vector<256x128xbf16>, vector<128x128xbf16>, vector<256x128xf32> -> vector<256x128xf32>
    %c3_23 = arith.constant 3 : index
    %c0_24 = arith.constant 0 : index
    %36 = vector.load %arg3[%c3_23, %c0_24] : memref<8x128xf32, #tpu.memory_space<vmem>>, vector<1x128xf32>
    %37 = vector.broadcast %36 : vector<1x128xf32> to vector<256x128xf32>
    %38 = arith.addf %35, %37 : vector<256x128xf32>
    %c1_25 = arith.constant 1 : index
    %c0_26 = arith.constant 0 : index
    %c0_27 = arith.constant 0 : index
    %39 = vector.load %arg4[%c1_25, %c0_26, %c0_27] : memref<3x256x128xf32, #tpu.memory_space<vmem>>, vector<1x256x128xf32>
    %40 = vector.shape_cast %39 : vector<1x256x128xf32> to vector<256x128xf32>
    %41 = vector.shape_cast %38 : vector<256x128xf32> to vector<1x256x128xf32>
    tpu.vector_store %arg4[%c1_25, %c0_26, %c0_27], %41 {strides = array<i32>} : memref<3x256x128xf32, #tpu.memory_space<vmem>>, vector<1x256x128xf32>,
    %42 = tpu.iota {dimensions = array<i32: 1>} : vector<256x128xi32>
    %c64_i32 = arith.constant 64 : i32
    %43 = vector.broadcast %c64_i32 : i32 to vector<256x128xi32>
    %44 = arith.cmpi slt, %42, %43 : vector<256x128xi32>
    %c64_i32_28 = arith.constant 64 : i32
    %45 = tpu.dynamic_rotate %38 by %c64_i32_28 dim 1 : vector<256x128xf32>, i32 -> vector<256x128xf32>
    %cst_29 = arith.constant 0.000000e+00 : f32
    %46 = vector.broadcast %cst_29 : f32 to vector<256x128xf32>
    %47 = arith.select %44, %45, %46 : vector<256x128xi1>, vector<256x128xf32>
    %cst_30 = arith.constant 5.000000e-01 : f32
    %48 = vector.broadcast %cst_30 : f32 to vector<256x128xf32>
    %49 = arith.mulf %48, %47 : vector<256x128xf32>
    %50 = math.exp %49 : vector<256x128xf32>
    %cst_31 = arith.constant 0.000000e+00 : f32
    %51 = vector.broadcast %cst_31 : f32 to vector<256x128xf32>
    %52 = arith.select %44, %38, %51 : vector<256x128xi1>, vector<256x128xf32>
    %c1_32 = arith.constant 1 : index
    %c0_33 = arith.constant 0 : index
    %c0_34 = arith.constant 0 : index
    %53 = vector.load %arg1[%c1_32, %c0_33, %c0_34] : memref<2x256x128xf32, #tpu.memory_space<vmem>>, vector<1x256x128xf32>
    %54 = vector.shape_cast %53 : vector<1x256x128xf32> to vector<256x128xf32>
    %55 = arith.mulf %54, %50 : vector<256x128xf32>
    %56 = arith.addf %52, %55 : vector<256x128xf32>
    %c2_35 = arith.constant 2 : index
    %c0_36 = arith.constant 0 : index
    %c0_37 = arith.constant 0 : index
    %57 = vector.load %arg4[%c2_35, %c0_36, %c0_37] : memref<3x256x128xf32, #tpu.memory_space<vmem>>, vector<1x256x128xf32>
    %58 = vector.shape_cast %57 : vector<1x256x128xf32> to vector<256x128xf32>
    %59 = vector.shape_cast %56 : vector<256x128xf32> to vector<1x256x128xf32>
    tpu.vector_store %arg4[%c2_35, %c0_36, %c0_37], %59 {strides = array<i32>} : memref<3x256x128xf32, #tpu.memory_space<vmem>>, vector<1x256x128xf32>,
    %60 = arith.truncf %56 : vector<256x128xf32> to vector<256x128xbf16>
    %c4 = arith.constant 4 : index
    %c0_38 = arith.constant 0 : index
    %c0_39 = arith.constant 0 : index
    %61 = vector.load %arg2[%c4, %c0_38, %c0_39] : memref<8x128x128xbf16, #tpu.memory_space<vmem>>, vector<1x128x128xbf16>
    %62 = vector.shape_cast %61 : vector<1x128x128xbf16> to vector<128x128xbf16>
    %cst_40 = arith.constant dense<0.000000e+00> : vector<256x128xf32>
    %63 = tpu.matmul %60, %62, %cst_40 {dimension_numbers = #tpu.dot_dimension_numbers<[1], [0], [0], [1], [0, 0, 1, 1], [], []>} : vector<256x128xbf16>, vector<128x128xbf16>, vector<256x128xf32> -> vector<256x128xf32>
    %c4_41 = arith.constant 4 : index
    %c0_42 = arith.constant 0 : index
    %64 = vector.load %arg3[%c4_41, %c0_42] : memref<8x128xf32, #tpu.memory_space<vmem>>, vector<1x128xf32>
    %65 = vector.broadcast %64 : vector<1x128xf32> to vector<256x128xf32>
    %66 = arith.addf %63, %65 : vector<256x128xf32>
    %cst_43 = arith.constant 0.00999999977 : f32
    %67 = vector.broadcast %cst_43 : f32 to vector<256x128xf32>
    %68 = arith.mulf %67, %66 : vector<256x128xf32>
    %69 = arith.maximumf %66, %68 : vector<256x128xf32>
    %70 = arith.truncf %69 : vector<256x128xf32> to vector<256x128xbf16>
    %c5 = arith.constant 5 : index
    %c0_44 = arith.constant 0 : index
    %c0_45 = arith.constant 0 : index
    %71 = vector.load %arg2[%c5, %c0_44, %c0_45] : memref<8x128x128xbf16, #tpu.memory_space<vmem>>, vector<1x128x128xbf16>
    %72 = vector.shape_cast %71 : vector<1x128x128xbf16> to vector<128x128xbf16>
    %cst_46 = arith.constant dense<0.000000e+00> : vector<256x128xf32>
    %73 = tpu.matmul %70, %72, %cst_46 {dimension_numbers = #tpu.dot_dimension_numbers<[1], [0], [0], [1], [0, 0, 1, 1], [], []>} : vector<256x128xbf16>, vector<128x128xbf16>, vector<256x128xf32> -> vector<256x128xf32>
    %c5_47 = arith.constant 5 : index
    %c0_48 = arith.constant 0 : index
    %74 = vector.load %arg3[%c5_47, %c0_48] : memref<8x128xf32, #tpu.memory_space<vmem>>, vector<1x128xf32>
    %75 = vector.broadcast %74 : vector<1x128xf32> to vector<256x128xf32>
    %76 = arith.addf %73, %75 : vector<256x128xf32>
    %cst_49 = arith.constant 0.00999999977 : f32
    %77 = vector.broadcast %cst_49 : f32 to vector<256x128xf32>
    %78 = arith.mulf %77, %76 : vector<256x128xf32>
    %79 = arith.maximumf %76, %78 : vector<256x128xf32>
    %80 = arith.truncf %79 : vector<256x128xf32> to vector<256x128xbf16>
    %c6 = arith.constant 6 : index
    %c0_50 = arith.constant 0 : index
    %c0_51 = arith.constant 0 : index
    %81 = vector.load %arg2[%c6, %c0_50, %c0_51] : memref<8x128x128xbf16, #tpu.memory_space<vmem>>, vector<1x128x128xbf16>
    %82 = vector.shape_cast %81 : vector<1x128x128xbf16> to vector<128x128xbf16>
    %cst_52 = arith.constant dense<0.000000e+00> : vector<256x128xf32>
    %83 = tpu.matmul %80, %82, %cst_52 {dimension_numbers = #tpu.dot_dimension_numbers<[1], [0], [0], [1], [0, 0, 1, 1], [], []>} : vector<256x128xbf16>, vector<128x128xbf16>, vector<256x128xf32> -> vector<256x128xf32>
    %c6_53 = arith.constant 6 : index
    %c0_54 = arith.constant 0 : index
    %84 = vector.load %arg3[%c6_53, %c0_54] : memref<8x128xf32, #tpu.memory_space<vmem>>, vector<1x128xf32>
    %85 = vector.broadcast %84 : vector<1x128xf32> to vector<256x128xf32>
    %86 = arith.addf %83, %85 : vector<256x128xf32>
    %cst_55 = arith.constant 0.00999999977 : f32
    %87 = vector.broadcast %cst_55 : f32 to vector<256x128xf32>
    %88 = arith.mulf %87, %86 : vector<256x128xf32>
    %89 = arith.maximumf %86, %88 : vector<256x128xf32>
    %90 = arith.truncf %89 : vector<256x128xf32> to vector<256x128xbf16>
    %c7 = arith.constant 7 : index
    %c0_56 = arith.constant 0 : index
    %c0_57 = arith.constant 0 : index
    %91 = vector.load %arg2[%c7, %c0_56, %c0_57] : memref<8x128x128xbf16, #tpu.memory_space<vmem>>, vector<1x128x128xbf16>
    %92 = vector.shape_cast %91 : vector<1x128x128xbf16> to vector<128x128xbf16>
    %cst_58 = arith.constant dense<0.000000e+00> : vector<256x128xf32>
    %93 = tpu.matmul %90, %92, %cst_58 {dimension_numbers = #tpu.dot_dimension_numbers<[1], [0], [0], [1], [0, 0, 1, 1], [], []>} : vector<256x128xbf16>, vector<128x128xbf16>, vector<256x128xf32> -> vector<256x128xf32>
    %c7_59 = arith.constant 7 : index
    %c0_60 = arith.constant 0 : index
    %94 = vector.load %arg3[%c7_59, %c0_60] : memref<8x128xf32, #tpu.memory_space<vmem>>, vector<1x128xf32>
    %95 = vector.broadcast %94 : vector<1x128xf32> to vector<256x128xf32>
    %96 = arith.addf %93, %95 : vector<256x128xf32>
    %cst_61 = arith.constant 0.000000e+00 : f32
    %97 = vector.broadcast %cst_61 : f32 to vector<256x128xf32>
    %98 = arith.subf %97, %96 : vector<256x128xf32>
    %99 = math.exp %98 : vector<256x128xf32>
    %cst_62 = arith.constant 1.000000e+00 : f32
    %100 = vector.broadcast %cst_62 : f32 to vector<256x128xf32>
    %101 = arith.addf %100, %99 : vector<256x128xf32>
    %102 = tpu.reciprocal %101 {approx = true} : vector<256x128xf32> -> vector<256x128xf32>
    %c0_63 = arith.constant 0 : index
    %c0_64 = arith.constant 0 : index
    %c0_65 = arith.constant 0 : index
    %103 = vector.load %arg4[%c0_63, %c0_64, %c0_65] : memref<3x256x128xf32, #tpu.memory_space<vmem>>, vector<1x256x128xf32>
    %104 = vector.shape_cast %103 : vector<1x256x128xf32> to vector<256x128xf32>
    %105 = vector.shape_cast %102 : vector<256x128xf32> to vector<1x256x128xf32>
    tpu.vector_store %arg4[%c0_63, %c0_64, %c0_65], %105 {strides = array<i32>} : memref<3x256x128xf32, #tpu.memory_space<vmem>>, vector<1x256x128xf32>,
    return
  }
  func.func @transform_0(%arg0: i32) -> (i32, i32, i32) {
    %c0_i32 = arith.constant 0 : i32
    %c0_i32_0 = arith.constant 0 : i32
    %c0_i32_1 = arith.constant 0 : i32
    return %c0_i32, %arg0, %c0_i32_0 : i32, i32, i32
  }
  func.func @transform_1(%arg0: i32) -> (i32, i32, i32) {
    %c0_i32 = arith.constant 0 : i32
    %c0_i32_0 = arith.constant 0 : i32
    %c0_i32_1 = arith.constant 0 : i32
    %c0_i32_2 = arith.constant 0 : i32
    return %c0_i32, %c0_i32_0, %c0_i32_1 : i32, i32, i32
  }
  func.func @transform_2(%arg0: i32) -> (i32, i32) {
    %c0_i32 = arith.constant 0 : i32
    %c0_i32_0 = arith.constant 0 : i32
    %c0_i32_1 = arith.constant 0 : i32
    return %c0_i32, %c0_i32_0 : i32, i32
  }
  func.func @transform_3(%arg0: i32) -> (i32, i32, i32) {
    %c0_i32 = arith.constant 0 : i32
    %c0_i32_0 = arith.constant 0 : i32
    %c0_i32_1 = arith.constant 0 : i32
    return %c0_i32, %arg0, %c0_i32_0 : i32, i32, i32
  }
}

</mosaic_0001>

<llo_original>
// kernel: tpu_custom_call.1
$region0: #{tpu_custom_call.1}
  #allocation0 [shape = 'u32[]', space=smem, size = 0x4, offset = 0x4, fixed_abs, tag = 'smem constant byte address 0x4 - core index']
  #allocation1 [shape = 'u32[144,128]{1,0:T(1,128)}', space=vmem, size = 0x12000, scoped, tag = 'internal scratch']
  #allocation9 [shape = 's32[]', space=sflag, size = 0x4, offset = 0, fixed_abs, tag = 'sflag constant byte address 0x0 - dummy sync flag']
  #allocation11 [shape = 's32[]', space=sflag, size = 0x4, offset = 0, fixed_abs, tag = 'sflag constant byte address 0x0 - dummy sync flag']
  %s0 = inlined_call_operand.hbm [shape: f32[2,512,128], index: 0, kind: input, shape index: {}]
  %s1 = inlined_call_operand.hbm [shape: bf16[8,128,128], index: 1, kind: input, shape index: {}]
  %s2 = inlined_call_operand.hbm [shape: f32[8,128], index: 2, kind: input, shape index: {}]
  %s3 = inlined_call_operand.hbm [shape: f32[3,512,128], index: 3, kind: output, shape index: {}]
  %s4 = sld [smem:[#allocation0]]
  $region57: #{tpu_custom_call.1} parent=0
    _
  %s6 = ssub.s32 1, %s4
  %s7 = scalar_select 0, %s6, %s4
  $region1: #{tpu_custom_call.1} parent=0
    #allocation2 [shape = 'u8[524288]{0}', space=vmem, size = 0x80000, scoped, tag = 'input window, operand 0']
    #allocation3 [shape = 's32[2]{0}', space=sflag, size = 0x8, scoped, tag = 'scoped memory for tpu_custom_call.1']
    #allocation4 [shape = 's32[2]{0}', space=sflag, size = 0x8, scoped, tag = 'scoped memory for tpu_custom_call.1']
    #allocation5 [shape = 'u8[262144]{0}', space=vmem, size = 0x40000, scoped, tag = 'input window, operand 1, single buffered']
    #allocation6 [shape = 's32[1]{0}', space=sflag, size = 0x4, scoped, tag = 'scoped memory for tpu_custom_call.1']
    #allocation7 [shape = 'u8[4096]{0}', space=vmem, size = 0x1000, scoped, tag = 'input window, operand 2, single buffered']
    #allocation8 [shape = 'u8[786432]{0}', space=vmem, size = 0xc0000, scoped, tag = 'output window, operand 0']
    %8 = vsyncpa [#allocation3], 0
    %s9 = scalar_lea.sflag [#allocation3], 1
    %10 = vsyncpa %s9, 0
    %11 = vsyncpa [#allocation6], 0
    %12 = vsyncpa [#allocation4], 0
    %s13 = scalar_lea.sflag [#allocation4], 1
    %14 = vsyncpa %s13, 0
    loop: start=0, step=1, limit=4
    $region2: #{tpu_custom_call.1} parent=1 // loop_pre_header
      _
    $region3: #{tpu_custom_call.1} parent=1 // loop_header
      %s16 = sphi 0, %s20
      %p17 = scmp.ge.s32.totalorder %s16, 4
      %s26 = sphi 0, %s28
      %s29 = sphi 0, %s26
      %s30 = sphi 0, %s29
      %s46 = sphi 0, %s30
      %s50 = sphi 0, %s50
      %s52 = sphi 0, %s50
      %s53 = sphi 0, %s52
      %s67 = sphi 0, %s53
      %s71 = sphi 0, %s71
      %s73 = sphi 0, %s71
      %s74 = sphi 0, %s73
      %s88 = sphi 0, %s74
      %s94 = sphi 0, %s96
      %s97 = sphi 0, %s94
      %s98 = sphi 0, %s97
      %s114 = sphi 0, %s98
    $region4: #{tpu_custom_call.1} parent=1 // loop_header_branch
      %19 = sbr.rel (%p17) target = $region8
    $region5: #{tpu_custom_call.1} parent=1 // loop_body
      %s21 = ssub.s32 %s16, 1
      %s22 = ssub.s32 %s16, 2
      %s23 = sadd.s32 %s16, 1
      %s24 = ssub.s32 %s16, %s23
      %p25 = scmp.eq.s32.totalorder %s24, 0
      %s27 = sadd.s32 %s26, 1
      %s28 = scalar_select %p25, %s26, %s27
      %p31 = pneg %p25
      %p32 = scmp.eq.s32.totalorder %s16, 1
      %p33 = por %p31, %p32
      %p34 = scmp.ne.s32.totalorder %s26, %s29
      %p35 = scmp.eq.s32.totalorder %s16, 0
      %p36 = por %p34, %p35
      %p37 = scmp.ne.s32.totalorder %s26, %s29
      %p38 = scmp.eq.s32.totalorder %s21, 1
      %p39 = por %p37, %p38
      %p40 = scmp.ne.s32.totalorder %s29, %s30
      %p41 = scmp.eq.s32.totalorder %s21, 0
      %p42 = por %p40, %p41
      %p43 = scmp.ne.s32.totalorder %s29, %s30
      %p44 = scmp.eq.s32.totalorder %s22, 1
      %p45 = por %p43, %p44
      %p47 = scmp.ne.s32.totalorder %s30, %s46
      %p48 = scmp.eq.s32.totalorder %s22, 0
      %p49 = por %p47, %p48
      %s51 = sadd.s32 %s50, 1
      %p54 = scmp.eq.s32.totalorder %s16, 1
      %p55 = scmp.ne.s32.totalorder %s50, %s52
      %p56 = scmp.eq.s32.totalorder %s16, 0
      %p57 = por %p55, %p56
      %p58 = scmp.ne.s32.totalorder %s50, %s52
      %p59 = scmp.eq.s32.totalorder %s21, 1
      %p60 = por %p58, %p59
      %p61 = scmp.ne.s32.totalorder %s52, %s53
      %p62 = scmp.eq.s32.totalorder %s21, 0
      %p63 = por %p61, %p62
      %p64 = scmp.ne.s32.totalorder %s52, %s53
      %p65 = scmp.eq.s32.totalorder %s22, 1
      %p66 = por %p64, %p65
      %p68 = scmp.ne.s32.totalorder %s53, %s67
      %p69 = scmp.eq.s32.totalorder %s22, 0
      %p70 = por %p68, %p69
      %s72 = sadd.s32 %s71, 1
      %p75 = scmp.eq.s32.totalorder %s16, 1
      %p76 = scmp.ne.s32.totalorder %s71, %s73
      %p77 = scmp.eq.s32.totalorder %s16, 0
      %p78 = por %p76, %p77
      %p79 = scmp.ne.s32.totalorder %s71, %s73
      %p80 = scmp.eq.s32.totalorder %s21, 1
      %p81 = por %p79, %p80
      %p82 = scmp.ne.s32.totalorder %s73, %s74
      %p83 = scmp.eq.s32.totalorder %s21, 0
      %p84 = por %p82, %p83
      %p85 = scmp.ne.s32.totalorder %s73, %s74
      %p86 = scmp.eq.s32.totalorder %s22, 1
      %p87 = por %p85, %p86
      %p89 = scmp.ne.s32.totalorder %s74, %s88
      %p90 = scmp.eq.s32.totalorder %s22, 0
      %p91 = por %p89, %p90
      %s92 = ssub.s32 %s16, %s23
      %p93 = scmp.eq.s32.totalorder %s92, 0
      %s95 = sadd.s32 %s94, 1
      %s96 = scalar_select %p93, %s94, %s95
      %p99 = pneg %p93
      %p100 = scmp.eq.s32.totalorder %s16, 1
      %p101 = por %p99, %p100
      %p102 = scmp.ne.s32.totalorder %s94, %s97
      %p103 = scmp.eq.s32.totalorder %s16, 0
      %p104 = por %p102, %p103
      %p105 = scmp.ne.s32.totalorder %s94, %s97
      %p106 = scmp.eq.s32.totalorder %s21, 1
      %p107 = por %p105, %p106
      %p108 = scmp.ne.s32.totalorder %s97, %s98
      %p109 = scmp.eq.s32.totalorder %s21, 0
      %p110 = por %p108, %p109
      %p111 = scmp.ne.s32.totalorder %s97, %s98
      %p112 = scmp.eq.s32.totalorder %s22, 1
      %p113 = por %p111, %p112
      %p115 = scmp.ne.s32.totalorder %s98, %s114
      %p116 = scmp.eq.s32.totalorder %s22, 0
      %p117 = por %p115, %p116
      %p118 = scmp.le.s32.totalorder 1, %s16
      %p119 = scmp.lt.s32.totalorder %s16, 3
      %p120 = pnand %p118, %p119
      %p121 = pneg %p120
      // Predicated region
      $region9: #{tpu_custom_call.1} parent=5 // pred_check
        _
      $region10: #{tpu_custom_call.1} parent=5 // pred_check_branch
        %123 = sbr.rel (%p120) target = $region12
      $region11: #{tpu_custom_call.1} parent=5 // pred_region
        %s124 = ssub.s32 %s16, 1
        // Predicated region
        $region13: #{tpu_custom_call.1} parent=11 // pred_check
          %p125 = pneg %p63
        $region14: #{tpu_custom_call.1} parent=11 // pred_check_branch
          %127 = sbr.rel (%p125) target = $region16
        $region15: #{tpu_custom_call.1} parent=11 // pred_region
          %s129 = ssub.s32 8192, 8192
          %130 = vsyncadd [#allocation6], %s129
          %s131 = sshll.u32 [#allocation5], 4
          %s132 = int_to_ptr.vmem [resolvable:$true] %s131
          %137 = dma.hbm_to_vmem [thread:$0]  %s1, 8192, %s132, [#allocation6], 64, 64, 4
        $region16: #{tpu_custom_call.1} parent=11 // pred_fallthru
          _
        // Predicated region
        $region17: #{tpu_custom_call.1} parent=11 // pred_check
          %p138 = pneg %p84
        $region18: #{tpu_custom_call.1} parent=11 // pred_check_branch
          %140 = sbr.rel (%p138) target = $region20
        $region19: #{tpu_custom_call.1} parent=11 // pred_region
          %s142 = ssub.s32 128, 128
          %143 = vsyncadd [#allocation6], %s142
          %s145 = sshll.u32 [#allocation7], 4
          %s146 = int_to_ptr.vmem [resolvable:$true] %s145
          %148 = dma.hbm_to_vmem [thread:$0]  %s2, 128, %s146, [#allocation6]
        $region20: #{tpu_custom_call.1} parent=11 // pred_fallthru
          _
      $region12: #{tpu_custom_call.1} parent=5 // pred_fallthru
        _
      %p149 = scmp.lt.s32.totalorder %s16, 2
      // Predicated region
      $region21: #{tpu_custom_call.1} parent=5 // pred_check
        %p150 = pneg %p149
      $region22: #{tpu_custom_call.1} parent=5 // pred_check_branch
        %152 = sbr.rel (%p150) target = $region24
      $region23: #{tpu_custom_call.1} parent=5 // pred_region
        // Predicated region
        $region25: #{tpu_custom_call.1} parent=23 // pred_check
          %p153 = pneg %p36
        $region26: #{tpu_custom_call.1} parent=23 // pred_check_branch
          %155 = sbr.rel (%p153) target = $region28
        $region27: #{tpu_custom_call.1} parent=23 // pred_region
          #allocation10 [shape = 'u32[6]{0}', space=smem, size = 0x18, scoped, tag = 'DMA stride descriptor']
          %s156 = sand.u32 %s26, 1
          %s157 = scalar_lea.sflag [#allocation3], %s156
          %s158 = sand.u32 %s26, 1
          %s159 = smul.addr %s158, 512
          %s160 = scalar_lea.vmem [#allocation2], %s159
          %s161 = smul.u32 32, %s16
          %s163 = ssub.s32 8192, 8192
          %164 = vsyncadd %s157, %s163
          %s165 = smul.addr %s161, 128
          %s166 = scalar_lea.hbm %s0, %s165
          %s168 = sshll.u32 1, 14
          %s169 = sxor.u32 4294967295, %s168
          %s171 = sld [smem:[#allocation0]]
          %s172 = sadd.s32 2, %s171
          %s174 = sshll.u32 7, 26
          %s175 = sxor.u32 4294967295, %s174
          %s176 = sand.u32 0, %s175
          %s177 = sshll.u32 %s172, 26
          %s178 = sor.u32 %s176, %s177
          %s179 = sshll.u32 %s160, 4
          %s180 = int_to_ptr.vmem [resolvable:$true] %s179
          %186 = sst [smem:[#allocation10]] 8192
          %s187 = scalar_lea.smem [#allocation10], 1
          %188 = sst [smem:[%s187]] 4096
          %s189 = scalar_lea.smem [#allocation10], 2
          %190 = sst [smem:[%s189]] 32
          %s191 = scalar_lea.smem [#allocation10], 3
          %192 = sst [smem:[%s191]] 128
          %s193 = scalar_lea.smem [#allocation10], 4
          %194 = sst [smem:[%s193]] 128
          %s195 = scalar_lea.smem [#allocation10], 5
          %196 = sst [smem:[%s195]] 8
          %198 = dma.general %s166, 8192, %s180, %s157, 131072, [#allocation10], %s178, 0
        $region28: #{tpu_custom_call.1} parent=23 // pred_fallthru
          _
      $region24: #{tpu_custom_call.1} parent=5 // pred_fallthru
        _
      %p199 = scmp.le.s32.totalorder 1, %s16
      %p200 = scmp.lt.s32.totalorder %s16, 3
      %p201 = pnand %p199, %p200
      %p202 = pneg %p201
      // Predicated region
      $region29: #{tpu_custom_call.1} parent=5 // pred_check
        _
      $region30: #{tpu_custom_call.1} parent=5 // pred_check_branch
        %204 = sbr.rel (%p201) target = $region32
      $region31: #{tpu_custom_call.1} parent=5 // pred_region
        %s205 = ssub.s32 %s16, 1
        %s206 = sand.u32 %s29, 1
        %s207 = scalar_lea.sflag [#allocation3], %s206
        %s208 = sand.u32 %s29, 1
        %s209 = smul.addr %s208, 512
        %s210 = scalar_lea.vmem [#allocation2], %s209
        // Predicated region
        $region33: #{tpu_custom_call.1} parent=31 // pred_check
          %p211 = pneg %p42
        $region34: #{tpu_custom_call.1} parent=31 // pred_check_branch
          %213 = sbr.rel (%p211) target = $region36
        $region35: #{tpu_custom_call.1} parent=31 // pred_region
          %214 = dma.done %s207, 8192
        $region36: #{tpu_custom_call.1} parent=31 // pred_fallthru
          _
        // Predicated region
        $region37: #{tpu_custom_call.1} parent=31 // pred_check
          %p215 = pneg %p63
        $region38: #{tpu_custom_call.1} parent=31 // pred_check_branch
          %217 = sbr.rel (%p215) target = $region40
        $region39: #{tpu_custom_call.1} parent=31 // pred_region
          %218 = dma.done [#allocation6], 8192
        $region40: #{tpu_custom_call.1} parent=31 // pred_fallthru
          _
        // Predicated region
        $region41: #{tpu_custom_call.1} parent=31 // pred_check
          %p219 = pneg %p84
        $region42: #{tpu_custom_call.1} parent=31 // pred_check_branch
          %221 = sbr.rel (%p219) target = $region44
        $region43: #{tpu_custom_call.1} parent=31 // pred_region
          %222 = dma.done [#allocation6], 128
        $region44: #{tpu_custom_call.1} parent=31 // pred_fallthru
          _
        %s223 = sand.u32 %s29, 1
        %s224 = scalar_lea.sflag [#allocation3], %s223
        %s225 = sand.u32 %s29, 1
        %s226 = smul.addr %s225, 512
        %s227 = scalar_lea.vmem [#allocation2], %s226
        %p228 = pneg %p42
        %p229 = pneg %p39
        %p230 = pneg %p63
        %p231 = pneg %p60
        %p232 = pneg %p84
        %p233 = pneg %p81
        %p234 = pneg %p110
        %p235 = pneg %p107
        %s236 = sand.u32 %s97, 1
        %s237 = scalar_lea.sflag [#allocation4], %s236
        %s238 = sand.u32 %s97, 1
        %s239 = smul.addr %s238, 768
        %s240 = scalar_lea.vmem [#allocation8], %s239
        %s241 = smul.u32 32, %s21
        %s242 = smul.u32 32, %s21
        %v244 = vld [vmem:[%s210] sm:$0xff]
        %v245 = vld [vmem:[%s210 + $0x8] sm:$0xff]
        %v246 = vld [vmem:[%s210 + $0x10] sm:$0xff]
        %v247 = vld [vmem:[%s210 + $0x18] sm:$0xff]
        %v248 = vld [vmem:[%s210 + $0x20] sm:$0xff]
        %v249 = vld [vmem:[%s210 + $0x28] sm:$0xff]
        %v250 = vld [vmem:[%s210 + $0x30] sm:$0xff]
        %v251 = vld [vmem:[%s210 + $0x38] sm:$0xff]
        %v252 = vld [vmem:[%s210 + $0x40] sm:$0xff]
        %v253 = vld [vmem:[%s210 + $0x48] sm:$0xff]
        %v254 = vld [vmem:[%s210 + $0x50] sm:$0xff]
        %v255 = vld [vmem:[%s210 + $0x58] sm:$0xff]
        %v256 = vld [vmem:[%s210 + $0x60] sm:$0xff]
        %v257 = vld [vmem:[%s210 + $0x68] sm:$0xff]
        %v258 = vld [vmem:[%s210 + $0x70] sm:$0xff]
        %v259 = vld [vmem:[%s210 + $0x78] sm:$0xff]
        %v260 = vld [vmem:[%s210 + $0x80] sm:$0xff]
        %v261 = vld [vmem:[%s210 + $0x88] sm:$0xff]
        %v262 = vld [vmem:[%s210 + $0x90] sm:$0xff]
        %v263 = vld [vmem:[%s210 + $0x98] sm:$0xff]
        %v264 = vld [vmem:[%s210 + $0xa0] sm:$0xff]
        %v265 = vld [vmem:[%s210 + $0xa8] sm:$0xff]
        %v266 = vld [vmem:[%s210 + $0xb0] sm:$0xff]
        %v267 = vld [vmem:[%s210 + $0xb8] sm:$0xff]
        %v268 = vld [vmem:[%s210 + $0xc0] sm:$0xff]
        %v269 = vld [vmem:[%s210 + $0xc8] sm:$0xff]
        %v270 = vld [vmem:[%s210 + $0xd0] sm:$0xff]
        %v271 = vld [vmem:[%s210 + $0xd8] sm:$0xff]
        %v272 = vld [vmem:[%s210 + $0xe0] sm:$0xff]
        %v273 = vld [vmem:[%s210 + $0xe8] sm:$0xff]
        %v274 = vld [vmem:[%s210 + $0xf0] sm:$0xff]
        %v275 = vld [vmem:[%s210 + $0xf8] sm:$0xff]
        %v276 = vpack.c.bf16 %v245, %v244
        %v277 = vpack.c.bf16 %v247, %v246
        %v278 = vpack.c.bf16 %v249, %v248
        %v279 = vpack.c.bf16 %v251, %v250
        %v280 = vpack.c.bf16 %v253, %v252
        %v281 = vpack.c.bf16 %v255, %v254
        %v282 = vpack.c.bf16 %v257, %v256
        %v283 = vpack.c.bf16 %v259, %v258
        %v284 = vpack.c.bf16 %v261, %v260
        %v285 = vpack.c.bf16 %v263, %v262
        %v286 = vpack.c.bf16 %v265, %v264
        %v287 = vpack.c.bf16 %v267, %v266
        %v288 = vpack.c.bf16 %v269, %v268
        %v289 = vpack.c.bf16 %v271, %v270
        %v290 = vpack.c.bf16 %v273, %v272
        %v291 = vpack.c.bf16 %v275, %v274
        %v292 = vld [vmem:[#allocation5] sm:$0xf]
        %v293 = vld [vmem:[#allocation5 + $0x4] sm:$0xf]
        %v294 = vld [vmem:[#allocation5 + $0x8] sm:$0xf]
        %v295 = vld [vmem:[#allocation5 + $0xc] sm:$0xf]
        %v296 = vld [vmem:[#allocation5 + $0x10] sm:$0xf]
        %v297 = vld [vmem:[#allocation5 + $0x14] sm:$0xf]
        %v298 = vld [vmem:[#allocation5 + $0x18] sm:$0xf]
        %v299 = vld [vmem:[#allocation5 + $0x1c] sm:$0xf]
        %v300 = vld [vmem:[#allocation5 + $0x20] sm:$0xf]
        %v301 = vld [vmem:[#allocation5 + $0x24] sm:$0xf]
        %v302 = vld [vmem:[#allocation5 + $0x28] sm:$0xf]
        %v303 = vld [vmem:[#allocation5 + $0x2c] sm:$0xf]
        %v304 = vld [vmem:[#allocation5 + $0x30] sm:$0xf]
        %v305 = vld [vmem:[#allocation5 + $0x34] sm:$0xf]
        %v306 = vld [vmem:[#allocation5 + $0x38] sm:$0xf]
        %v307 = vld [vmem:[#allocation5 + $0x3c] sm:$0xf]
        %v308 = vld [vmem:[#allocation7] sm:$0x1]
        %v309 = vlaneseq
        %v310 = vshrl.u32 %v309, 7
        %v311 = vsub.s32 0, %v310
        %v312 = vrot.slane %v308, %v311
        %v329 = vunpack.c.l.b16 %v292
        %v330 = vunpack.c.l.b16 %v293
        %v331 = vunpack.c.l.b16 %v294
        %v332 = vunpack.c.l.b16 %v295
        %v333 = vunpack.c.l.b16 %v296
        %v334 = vunpack.c.l.b16 %v297
        %v335 = vunpack.c.l.b16 %v298
        %v336 = vunpack.c.l.b16 %v299
        %v337 = vunpack.c.l.b16 %v300
        %v338 = vunpack.c.l.b16 %v301
        %v339 = vunpack.c.l.b16 %v302
        %v340 = vunpack.c.l.b16 %v303
        %v341 = vunpack.c.l.b16 %v304
        %v342 = vunpack.c.l.b16 %v305
        %v343 = vunpack.c.l.b16 %v306
        %v344 = vunpack.c.l.b16 %v307
        %v345 = vpack.c.b16 %v330, %v329
        %v346 = vpack.c.b16 %v332, %v331
        %v347 = vpack.c.b16 %v334, %v333
        %v348 = vpack.c.b16 %v336, %v335
        %v349 = vpack.c.b16 %v338, %v337
        %v350 = vpack.c.b16 %v340, %v339
        %v351 = vpack.c.b16 %v342, %v341
        %v352 = vpack.c.b16 %v344, %v343
        %361 = vmatprep.subr.bf16.mxu0 0
        %362 = vmatpush1.bf16.msra.mxu0 %v352
        %363 = vmatprep.subr.bf16.mxu0 0
        %364 = vmatpush1.bf16.msra.mxu0 %v351
        %365 = vmatprep.subr.bf16.mxu0 0
        %366 = vmatpush1.bf16.msra.mxu0 %v350
        %367 = vmatprep.subr.bf16.mxu0 0
        %368 = vmatpush1.bf16.msra.mxu0 %v349
        %369 = vmatprep.subr.bf16.mxu0 0
        %370 = vmatpush1.bf16.msra.mxu0 %v348
        %371 = vmatprep.subr.bf16.mxu0 0
        %372 = vmatpush1.bf16.msra.mxu0 %v347
        %373 = vmatprep.subr.bf16.mxu0 0
        %374 = vmatpush1.bf16.msra.mxu0 %v346
        %375 = vmatprep.subr.bf16.mxu0 0
        %376 = vmatpush1.bf16.msra.mxu0 %v345
        %377 = vmatprep.subr.bf16.mxu0 0
        %378 = vmatpush2.bf16.msra.mxu0 0
        %379 = vmatprep.subr.bf16.mxu0 0
        %380 = vmatpush2.bf16.msra.mxu0 0
        %381 = vmatprep.subr.bf16.mxu0 0
        %382 = vmatpush2.bf16.msra.mxu0 0
        %383 = vmatprep.subr.bf16.mxu0 0
        %384 = vmatpush2.bf16.msra.mxu0 0
        %385 = vmatprep.subr.bf16.mxu0 0
        %386 = vmatpush2.bf16.msra.mxu0 0
        %387 = vmatprep.subr.bf16.mxu0 0
        %388 = vmatpush2.bf16.msra.mxu0 0
        %389 = vmatprep.subr.bf16.mxu0 0
        %390 = vmatpush2.bf16.msra.mxu0 0
        %391 = vmatprep.subr.bf16.mxu0 0
        %392 = vmatpush2.bf16.msra.mxu0 0
        %393 = vmatprep.mubr.bf16.mxu0 0
        %394 = vmatmul.mubr.bf16.gmra.mxu0 %v276
        %v395 = vpop.f32.mrf.mxu0
        %v396 = vadd.f32 %v312, %v395
        %v397 = vpop.f32.mrf.mxu0
        %v398 = vpop.f32.mrf.mxu0
        %v399 = vadd.f32 %v312, %v398
        %v400 = vpop.f32.mrf.mxu0
        %401 = vmatprep.mubr.bf16.mxu0 0
        %402 = vmatmul.mubr.bf16.gmra.mxu0 %v277
        %v403 = vpop.f32.mrf.mxu0
        %v404 = vadd.f32 %v312, %v403
        %v405 = vpop.f32.mrf.mxu0
        %v406 = vpop.f32.mrf.mxu0
        %v407 = vadd.f32 %v312, %v406
        %v408 = vpop.f32.mrf.mxu0
        %409 = vmatprep.mubr.bf16.mxu0 0
        %410 = vmatmul.mubr.bf16.gmra.mxu0 %v278
        %v411 = vpop.f32.mrf.mxu0
        %v412 = vadd.f32 %v312, %v411
        %v413 = vpop.f32.mrf.mxu0
        %v414 = vpop.f32.mrf.mxu0
        %v415 = vadd.f32 %v312, %v414
        %v416 = vpop.f32.mrf.mxu0
        %417 = vmatprep.mubr.bf16.mxu0 0
        %418 = vmatmul.mubr.bf16.gmra.mxu0 %v279
        %v419 = vpop.f32.mrf.mxu0
        %v420 = vadd.f32 %v312, %v419
        %v421 = vpop.f32.mrf.mxu0
        %v422 = vpop.f32.mrf.mxu0
        %v423 = vadd.f32 %v312, %v422
        %v424 = vpop.f32.mrf.mxu0
        %425 = vmatprep.mubr.bf16.mxu0 0
        %426 = vmatmul.mubr.bf16.gmra.mxu0 %v280
        %v427 = vpop.f32.mrf.mxu0
        %v428 = vadd.f32 %v312, %v427
        %v429 = vpop.f32.mrf.mxu0
        %v430 = vpop.f32.mrf.mxu0
        %v431 = vadd.f32 %v312, %v430
        %v432 = vpop.f32.mrf.mxu0
        %433 = vmatprep.mubr.bf16.mxu0 0
        %434 = vmatmul.mubr.bf16.gmra.mxu0 %v281
        %v435 = vpop.f32.mrf.mxu0
        %v436 = vadd.f32 %v312, %v435
        %v437 = vpop.f32.mrf.mxu0
        %v438 = vpop.f32.mrf.mxu0
        %v439 = vadd.f32 %v312, %v438
        %v440 = vpop.f32.mrf.mxu0
        %441 = vmatprep.mubr.bf16.mxu0 0
        %442 = vmatmul.mubr.bf16.gmra.mxu0 %v282
        %v443 = vpop.f32.mrf.mxu0
        %v444 = vadd.f32 %v312, %v443
        %v445 = vpop.f32.mrf.mxu0
        %v446 = vpop.f32.mrf.mxu0
        %v447 = vadd.f32 %v312, %v446
        %v448 = vpop.f32.mrf.mxu0
        %449 = vmatprep.mubr.bf16.mxu0 0
        %450 = vmatmul.mubr.bf16.gmra.mxu0 %v283
        %v451 = vpop.f32.mrf.mxu0
        %v452 = vadd.f32 %v312, %v451
        %v453 = vpop.f32.mrf.mxu0
        %v454 = vpop.f32.mrf.mxu0
        %v455 = vadd.f32 %v312, %v454
        %v456 = vpop.f32.mrf.mxu0
        %457 = vmatprep.mubr.bf16.mxu0 0
        %458 = vmatmul.mubr.bf16.gmra.mxu0 %v284
        %v459 = vpop.f32.mrf.mxu0
        %v460 = vadd.f32 %v312, %v459
        %v461 = vpop.f32.mrf.mxu0
        %v462 = vpop.f32.mrf.mxu0
        %v463 = vadd.f32 %v312, %v462
        %v464 = vpop.f32.mrf.mxu0
        %465 = vmatprep.mubr.bf16.mxu0 0
        %466 = vmatmul.mubr.bf16.gmra.mxu0 %v285
        %v467 = vpop.f32.mrf.mxu0
        %v468 = vadd.f32 %v312, %v467
        %v469 = vpop.f32.mrf.mxu0
        %v470 = vpop.f32.mrf.mxu0
        %v471 = vadd.f32 %v312, %v470
        %v472 = vpop.f32.mrf.mxu0
        %473 = vmatprep.mubr.bf16.mxu0 0
        %474 = vmatmul.mubr.bf16.gmra.mxu0 %v286
        %v475 = vpop.f32.mrf.mxu0
        %v476 = vadd.f32 %v312, %v475
        %v477 = vpop.f32.mrf.mxu0
        %v478 = vpop.f32.mrf.mxu0
        %v479 = vadd.f32 %v312, %v478
        %v480 = vpop.f32.mrf.mxu0
        %481 = vmatprep.mubr.bf16.mxu0 0
        %482 = vmatmul.mubr.bf16.gmra.mxu0 %v287
        %v483 = vpop.f32.mrf.mxu0
        %v484 = vadd.f32 %v312, %v483
        %v485 = vpop.f32.mrf.mxu0
        %v486 = vpop.f32.mrf.mxu0
        %v487 = vadd.f32 %v312, %v486
        %v488 = vpop.f32.mrf.mxu0
        %489 = vmatprep.mubr.bf16.mxu0 0
        %490 = vmatmul.mubr.bf16.gmra.mxu0 %v288
        %v491 = vpop.f32.mrf.mxu0
        %v492 = vadd.f32 %v312, %v491
        %v493 = vpop.f32.mrf.mxu0
        %v494 = vpop.f32.mrf.mxu0
        %v495 = vadd.f32 %v312, %v494
        %v496 = vpop.f32.mrf.mxu0
        %497 = vmatprep.mubr.bf16.mxu0 0
        %498 = vmatmul.mubr.bf16.gmra.mxu0 %v289
        %v499 = vpop.f32.mrf.mxu0
        %v500 = vadd.f32 %v312, %v499
        %v501 = vpop.f32.mrf.mxu0
        %v502 = vpop.f32.mrf.mxu0
        %v503 = vadd.f32 %v312, %v502
        %v504 = vpop.f32.mrf.mxu0
        %505 = vmatprep.mubr.bf16.mxu0 0
        %506 = vmatmul.mubr.bf16.gmra.mxu0 %v290
        %v507 = vpop.f32.mrf.mxu0
        %v508 = vadd.f32 %v312, %v507
        %v509 = vpop.f32.mrf.mxu0
        %v510 = vpop.f32.mrf.mxu0
        %v511 = vadd.f32 %v312, %v510
        %v512 = vpop.f32.mrf.mxu0
        %513 = vmatprep.mubr.bf16.mxu0 0
        %514 = vmatmul.mubr.bf16.gmra.mxu0 %v291
        %v515 = vpop.f32.mrf.mxu0
        %v516 = vadd.f32 %v312, %v515
        %v517 = vpop.f32.mrf.mxu0
        %v518 = vpop.f32.mrf.mxu0
        %v519 = vadd.f32 %v312, %v518
        %v520 = vpop.f32.mrf.mxu0
        %521 = vdwg.mxu0
        %v522 = vmul.f32 %v396, 0.01
        %v523 = vmul.f32 %v399, 0.01
        %v524 = vmul.f32 %v404, 0.01
        %v525 = vmul.f32 %v407, 0.01
        %v526 = vmul.f32 %v412, 0.01
        %v527 = vmul.f32 %v415, 0.01
        %v528 = vmul.f32 %v420, 0.01
        %v529 = vmul.f32 %v423, 0.01
        %v530 = vmul.f32 %v428, 0.01
        %v531 = vmul.f32 %v431, 0.01
        %v532 = vmul.f32 %v436, 0.01
        %v533 = vmul.f32 %v439, 0.01
        %v534 = vmul.f32 %v444, 0.01
        %v535 = vmul.f32 %v447, 0.01
        %v536 = vmul.f32 %v452, 0.01
        %v537 = vmul.f32 %v455, 0.01
        %v538 = vmul.f32 %v460, 0.01
        %v539 = vmul.f32 %v463, 0.01
        %v540 = vmul.f32 %v468, 0.01
        %v541 = vmul.f32 %v471, 0.01
        %v542 = vmul.f32 %v476, 0.01
        %v543 = vmul.f32 %v479, 0.01
        %v544 = vmul.f32 %v484, 0.01
        %v545 = vmul.f32 %v487, 0.01
        %v546 = vmul.f32 %v492, 0.01
        %v547 = vmul.f32 %v495, 0.01
        %v548 = vmul.f32 %v500, 0.01
        %v549 = vmul.f32 %v503, 0.01
        %v550 = vmul.f32 %v508, 0.01
        %v551 = vmul.f32 %v511, 0.01
        %v552 = vmul.f32 %v516, 0.01
        %v553 = vmul.f32 %v519, 0.01
        %v554 = vmax.f32 %v396, %v522
        %v555 = vmax.f32 %v399, %v523
        %v556 = vmax.f32 %v404, %v524
        %v557 = vmax.f32 %v407, %v525
        %v558 = vmax.f32 %v412, %v526
        %v559 = vmax.f32 %v415, %v527
        %v560 = vmax.f32 %v420, %v528
        %v561 = vmax.f32 %v423, %v529
        %v562 = vmax.f32 %v428, %v530
        %v563 = vmax.f32 %v431, %v531
        %v564 = vmax.f32 %v436, %v532
        %v565 = vmax.f32 %v439, %v533
        %v566 = vmax.f32 %v444, %v534
        %v567 = vmax.f32 %v447, %v535
        %v568 = vmax.f32 %v452, %v536
        %v569 = vmax.f32 %v455, %v537
        %v570 = vmax.f32 %v460, %v538
        %v571 = vmax.f32 %v463, %v539
        %v572 = vmax.f32 %v468, %v540
        %v573 = vmax.f32 %v471, %v541
        %v574 = vmax.f32 %v476, %v542
        %v575 = vmax.f32 %v479, %v543
        %v576 = vmax.f32 %v484, %v544
        %v577 = vmax.f32 %v487, %v545
        %v578 = vmax.f32 %v492, %v546
        %v579 = vmax.f32 %v495, %v547
        %v580 = vmax.f32 %v500, %v548
        %v581 = vmax.f32 %v503, %v549
        %v582 = vmax.f32 %v508, %v550
        %v583 = vmax.f32 %v511, %v551
        %v584 = vmax.f32 %v516, %v552
        %v585 = vmax.f32 %v519, %v553
        %v586 = vpack.c.bf16 %v555, %v554
        %v587 = vpack.c.bf16 %v557, %v556
        %v588 = vpack.c.bf16 %v559, %v558
        %v589 = vpack.c.bf16 %v561, %v560
        %v590 = vpack.c.bf16 %v563, %v562
        %v591 = vpack.c.bf16 %v565, %v564
        %v592 = vpack.c.bf16 %v567, %v566
        %v593 = vpack.c.bf16 %v569, %v568
        %v594 = vpack.c.bf16 %v571, %v570
        %v595 = vpack.c.bf16 %v573, %v572
        %v596 = vpack.c.bf16 %v575, %v574
        %v597 = vpack.c.bf16 %v577, %v576
        %v598 = vpack.c.bf16 %v579, %v578
        %v599 = vpack.c.bf16 %v581, %v580
        %v600 = vpack.c.bf16 %v583, %v582
        %v601 = vpack.c.bf16 %v585, %v584
        %s602 = scalar_lea.vmem [#allocation5], 64
        %v603 = vld [vmem:[%s602] sm:$0xf]
        %v604 = vld [vmem:[%s602 + $0x4] sm:$0xf]
        %v605 = vld [vmem:[%s602 + $0x8] sm:$0xf]
        %v606 = vld [vmem:[%s602 + $0xc] sm:$0xf]
        %v607 = vld [vmem:[%s602 + $0x10] sm:$0xf]
        %v608 = vld [vmem:[%s602 + $0x14] sm:$0xf]
        %v609 = vld [vmem:[%s602 + $0x18] sm:$0xf]
        %v610 = vld [vmem:[%s602 + $0x1c] sm:$0xf]
        %v611 = vld [vmem:[%s602 + $0x20] sm:$0xf]
        %v612 = vld [vmem:[%s602 + $0x24] sm:$0xf]
        %v613 = vld [vmem:[%s602 + $0x28] sm:$0xf]
        %v614 = vld [vmem:[%s602 + $0x2c] sm:$0xf]
        %v615 = vld [vmem:[%s602 + $0x30] sm:$0xf]
        %v616 = vld [vmem:[%s602 + $0x34] sm:$0xf]
        %v617 = vld [vmem:[%s602 + $0x38] sm:$0xf]
        %v618 = vld [vmem:[%s602 + $0x3c] sm:$0xf]
        %v619 = vld [vmem:[#allocation7 + $0x1] sm:$0x1]
        %v620 = vlaneseq
        %v621 = vshrl.u32 %v620, 7
        %v622 = vsub.s32 0, %v621
        %v623 = vrot.slane %v619, %v622
        %v640 = vunpack.c.l.b16 %v603
        %v641 = vunpack.c.l.b16 %v604
        %v642 = vunpack.c.l.b16 %v605
        %v643 = vunpack.c.l.b16 %v606
        %v644 = vunpack.c.l.b16 %v607
        %v645 = vunpack.c.l.b16 %v608
        %v646 = vunpack.c.l.b16 %v609
        %v647 = vunpack.c.l.b16 %v610
        %v648 = vunpack.c.l.b16 %v611
        %v649 = vunpack.c.l.b16 %v612
        %v650 = vunpack.c.l.b16 %v613
        %v651 = vunpack.c.l.b16 %v614
        %v652 = vunpack.c.l.b16 %v615
        %v653 = vunpack.c.l.b16 %v616
        %v654 = vunpack.c.l.b16 %v617
        %v655 = vunpack.c.l.b16 %v618
        %v656 = vpack.c.b16 %v641, %v640
        %v657 = vpack.c.b16 %v643, %v642
        %v658 = vpack.c.b16 %v645, %v644
        %v659 = vpack.c.b16 %v647, %v646
        %v660 = vpack.c.b16 %v649, %v648
        %v661 = vpack.c.b16 %v651, %v650
        %v662 = vpack.c.b16 %v653, %v652
        %v663 = vpack.c.b16 %v655, %v654
        %672 = vmatprep.subr.bf16.mxu0 0
        %673 = vmatpush1.bf16.msra.mxu0 %v663
        %674 = vmatprep.subr.bf16.mxu0 0
        %675 = vmatpush1.bf16.msra.mxu0 %v662
        %676 = vmatprep.subr.bf16.mxu0 0
        %677 = vmatpush1.bf16.msra.mxu0 %v661
        %678 = vmatprep.subr.bf16.mxu0 0
        %679 = vmatpush1.bf16.msra.mxu0 %v660
        %680 = vmatprep.subr.bf16.mxu0 0
        %681 = vmatpush1.bf16.msra.mxu0 %v659
        %682 = vmatprep.subr.bf16.mxu0 0
        %683 = vmatpush1.bf16.msra.mxu0 %v658
        %684 = vmatprep.subr.bf16.mxu0 0
        %685 = vmatpush1.bf16.msra.mxu0 %v657
        %686 = vmatprep.subr.bf16.mxu0 0
        %687 = vmatpush1.bf16.msra.mxu0 %v656
        %688 = vmatprep.subr.bf16.mxu0 0
        %689 = vmatpush2.bf16.msra.mxu0 0
        %690 = vmatprep.subr.bf16.mxu0 0
        %691 = vmatpush2.bf16.msra.mxu0 0
        %692 = vmatprep.subr.bf16.mxu0 0
        %693 = vmatpush2.bf16.msra.mxu0 0
        %694 = vmatprep.subr.bf16.mxu0 0
        %695 = vmatpush2.bf16.msra.mxu0 0
        %696 = vmatprep.subr.bf16.mxu0 0
        %697 = vmatpush2.bf16.msra.mxu0 0
        %698 = vmatprep.subr.bf16.mxu0 0
        %699 = vmatpush2.bf16.msra.mxu0 0
        %700 = vmatprep.subr.bf16.mxu0 0
        %701 = vmatpush2.bf16.msra.mxu0 0
        %702 = vmatprep.subr.bf16.mxu0 0
        %703 = vmatpush2.bf16.msra.mxu0 0
        %704 = vmatprep.mubr.bf16.mxu0 0
        %705 = vmatmul.mubr.bf16.gmra.mxu0 %v586
        %v706 = vpop.f32.mrf.mxu0
        %v707 = vadd.f32 %v623, %v706
        %v708 = vpop.f32.mrf.mxu0
        %v709 = vpop.f32.mrf.mxu0
        %v710 = vadd.f32 %v623, %v709
        %v711 = vpop.f32.mrf.mxu0
        %712 = vmatprep.mubr.bf16.mxu0 0
        %713 = vmatmul.mubr.bf16.gmra.mxu0 %v587
        %v714 = vpop.f32.mrf.mxu0
        %v715 = vadd.f32 %v623, %v714
        %v716 = vpop.f32.mrf.mxu0
        %v717 = vpop.f32.mrf.mxu0
        %v718 = vadd.f32 %v623, %v717
        %v719 = vpop.f32.mrf.mxu0
        %720 = vmatprep.mubr.bf16.mxu0 0
        %721 = vmatmul.mubr.bf16.gmra.mxu0 %v588
        %v722 = vpop.f32.mrf.mxu0
        %v723 = vadd.f32 %v623, %v722
        %v724 = vpop.f32.mrf.mxu0
        %v725 = vpop.f32.mrf.mxu0
        %v726 = vadd.f32 %v623, %v725
        %v727 = vpop.f32.mrf.mxu0
        %728 = vmatprep.mubr.bf16.mxu0 0
        %729 = vmatmul.mubr.bf16.gmra.mxu0 %v589
        %v730 = vpop.f32.mrf.mxu0
        %v731 = vadd.f32 %v623, %v730
        %v732 = vpop.f32.mrf.mxu0
        %v733 = vpop.f32.mrf.mxu0
        %v734 = vadd.f32 %v623, %v733
        %v735 = vpop.f32.mrf.mxu0
        %736 = vmatprep.mubr.bf16.mxu0 0
        %737 = vmatmul.mubr.bf16.gmra.mxu0 %v590
        %v738 = vpop.f32.mrf.mxu0
        %v739 = vadd.f32 %v623, %v738
        %v740 = vpop.f32.mrf.mxu0
        %v741 = vpop.f32.mrf.mxu0
        %v742 = vadd.f32 %v623, %v741
        %v743 = vpop.f32.mrf.mxu0
        %744 = vmatprep.mubr.bf16.mxu0 0
        %745 = vmatmul.mubr.bf16.gmra.mxu0 %v591
        %v746 = vpop.f32.mrf.mxu0
        %v747 = vadd.f32 %v623, %v746
        %v748 = vpop.f32.mrf.mxu0
        %v749 = vpop.f32.mrf.mxu0
        %v750 = vadd.f32 %v623, %v749
        %v751 = vpop.f32.mrf.mxu0
        %752 = vmatprep.mubr.bf16.mxu0 0
        %753 = vmatmul.mubr.bf16.gmra.mxu0 %v592
        %v754 = vpop.f32.mrf.mxu0
        %v755 = vadd.f32 %v623, %v754
        %v756 = vpop.f32.mrf.mxu0
        %v757 = vpop.f32.mrf.mxu0
        %v758 = vadd.f32 %v623, %v757
        %v759 = vpop.f32.mrf.mxu0
        %760 = vmatprep.mubr.bf16.mxu0 0
        %761 = vmatmul.mubr.bf16.gmra.mxu0 %v593
        %v762 = vpop.f32.mrf.mxu0
        %v763 = vadd.f32 %v623, %v762
        %v764 = vpop.f32.mrf.mxu0
        %v765 = vpop.f32.mrf.mxu0
        %v766 = vadd.f32 %v623, %v765
        %v767 = vpop.f32.mrf.mxu0
        %768 = vmatprep.mubr.bf16.mxu0 0
        %769 = vmatmul.mubr.bf16.gmra.mxu0 %v594
        %v770 = vpop.f32.mrf.mxu0
        %v771 = vadd.f32 %v623, %v770
        %v772 = vpop.f32.mrf.mxu0
        %v773 = vpop.f32.mrf.mxu0
        %v774 = vadd.f32 %v623, %v773
        %v775 = vpop.f32.mrf.mxu0
        %776 = vmatprep.mubr.bf16.mxu0 0
        %777 = vmatmul.mubr.bf16.gmra.mxu0 %v595
        %v778 = vpop.f32.mrf.mxu0
        %v779 = vadd.f32 %v623, %v778
        %v780 = vpop.f32.mrf.mxu0
        %v781 = vpop.f32.mrf.mxu0
        %v782 = vadd.f32 %v623, %v781
        %v783 = vpop.f32.mrf.mxu0
        %784 = vmatprep.mubr.bf16.mxu0 0
        %785 = vmatmul.mubr.bf16.gmra.mxu0 %v596
        %v786 = vpop.f32.mrf.mxu0
        %v787 = vadd.f32 %v623, %v786
        %v788 = vpop.f32.mrf.mxu0
        %v789 = vpop.f32.mrf.mxu0
        %v790 = vadd.f32 %v623, %v789
        %v791 = vpop.f32.mrf.mxu0
        %792 = vmatprep.mubr.bf16.mxu0 0
        %793 = vmatmul.mubr.bf16.gmra.mxu0 %v597
        %v794 = vpop.f32.mrf.mxu0
        %v795 = vadd.f32 %v623, %v794
        %v796 = vpop.f32.mrf.mxu0
        %v797 = vpop.f32.mrf.mxu0
        %v798 = vadd.f32 %v623, %v797
        %v799 = vpop.f32.mrf.mxu0
        %800 = vmatprep.mubr.bf16.mxu0 0
        %801 = vmatmul.mubr.bf16.gmra.mxu0 %v598
        %v802 = vpop.f32.mrf.mxu0
        %v803 = vadd.f32 %v623, %v802
        %v804 = vpop.f32.mrf.mxu0
        %v805 = vpop.f32.mrf.mxu0
        %v806 = vadd.f32 %v623, %v805
        %v807 = vpop.f32.mrf.mxu0
        %808 = vmatprep.mubr.bf16.mxu0 0
        %809 = vmatmul.mubr.bf16.gmra.mxu0 %v599
        %v810 = vpop.f32.mrf.mxu0
        %v811 = vadd.f32 %v623, %v810
        %v812 = vpop.f32.mrf.mxu0
        %v813 = vpop.f32.mrf.mxu0
        %v814 = vadd.f32 %v623, %v813
        %v815 = vpop.f32.mrf.mxu0
        %816 = vmatprep.mubr.bf16.mxu0 0
        %817 = vmatmul.mubr.bf16.gmra.mxu0 %v600
        %v818 = vpop.f32.mrf.mxu0
        %v819 = vadd.f32 %v623, %v818
        %v820 = vpop.f32.mrf.mxu0
        %v821 = vpop.f32.mrf.mxu0
        %v822 = vadd.f32 %v623, %v821
        %v823 = vpop.f32.mrf.mxu0
        %824 = vmatprep.mubr.bf16.mxu0 0
        %825 = vmatmul.mubr.bf16.gmra.mxu0 %v601
        %v826 = vpop.f32.mrf.mxu0
        %v827 = vadd.f32 %v623, %v826
        %v828 = vpop.f32.mrf.mxu0
        %v829 = vpop.f32.mrf.mxu0
        %v830 = vadd.f32 %v623, %v829
        %v831 = vpop.f32.mrf.mxu0
        %832 = vdwg.mxu0
        %v833 = vmul.f32 %v707, 0.01
        %v834 = vmul.f32 %v710, 0.01
        %v835 = vmul.f32 %v715, 0.01
        %v836 = vmul.f32 %v718, 0.01
        %v837 = vmul.f32 %v723, 0.01
        %v838 = vmul.f32 %v726, 0.01
        %v839 = vmul.f32 %v731, 0.01
        %v840 = vmul.f32 %v734, 0.01
        %v841 = vmul.f32 %v739, 0.01
        %v842 = vmul.f32 %v742, 0.01
        %v843 = vmul.f32 %v747, 0.01
        %v844 = vmul.f32 %v750, 0.01
        %v845 = vmul.f32 %v755, 0.01
        %v846 = vmul.f32 %v758, 0.01
        %v847 = vmul.f32 %v763, 0.01
        %v848 = vmul.f32 %v766, 0.01
        %v849 = vmul.f32 %v771, 0.01
        %v850 = vmul.f32 %v774, 0.01
        %v851 = vmul.f32 %v779, 0.01
        %v852 = vmul.f32 %v782, 0.01
        %v853 = vmul.f32 %v787, 0.01
        %v854 = vmul.f32 %v790, 0.01
        %v855 = vmul.f32 %v795, 0.01
        %v856 = vmul.f32 %v798, 0.01
        %v857 = vmul.f32 %v803, 0.01
        %v858 = vmul.f32 %v806, 0.01
        %v859 = vmul.f32 %v811, 0.01
        %v860 = vmul.f32 %v814, 0.01
        %v861 = vmul.f32 %v819, 0.01
        %v862 = vmul.f32 %v822, 0.01
        %v863 = vmul.f32 %v827, 0.01
        %v864 = vmul.f32 %v830, 0.01
        %v865 = vmax.f32 %v707, %v833
        %v866 = vmax.f32 %v710, %v834
        %v867 = vmax.f32 %v715, %v835
        %v868 = vmax.f32 %v718, %v836
        %v869 = vmax.f32 %v723, %v837
        %v870 = vmax.f32 %v726, %v838
        %v871 = vmax.f32 %v731, %v839
        %v872 = vmax.f32 %v734, %v840
        %v873 = vmax.f32 %v739, %v841
        %v874 = vmax.f32 %v742, %v842
        %v875 = vmax.f32 %v747, %v843
        %v876 = vmax.f32 %v750, %v844
        %v877 = vmax.f32 %v755, %v845
        %v878 = vmax.f32 %v758, %v846
        %v879 = vmax.f32 %v763, %v847
        %v880 = vmax.f32 %v766, %v848
        %v881 = vmax.f32 %v771, %v849
        %v882 = vmax.f32 %v774, %v850
        %v883 = vmax.f32 %v779, %v851
        %v884 = vmax.f32 %v782, %v852
        %v885 = vmax.f32 %v787, %v853
        %v886 = vmax.f32 %v790, %v854
        %v887 = vmax.f32 %v795, %v855
        %v888 = vmax.f32 %v798, %v856
        %v889 = vmax.f32 %v803, %v857
        %v890 = vmax.f32 %v806, %v858
        %v891 = vmax.f32 %v811, %v859
        %v892 = vmax.f32 %v814, %v860
        %v893 = vmax.f32 %v819, %v861
        %v894 = vmax.f32 %v822, %v862
        %v895 = vmax.f32 %v827, %v863
        %v896 = vmax.f32 %v830, %v864
        %v897 = vpack.c.bf16 %v866, %v865
        %v898 = vpack.c.bf16 %v868, %v867
        %v899 = vpack.c.bf16 %v870, %v869
        %v900 = vpack.c.bf16 %v872, %v871
        %v901 = vpack.c.bf16 %v874, %v873
        %v902 = vpack.c.bf16 %v876, %v875
        %v903 = vpack.c.bf16 %v878, %v877
        %v904 = vpack.c.bf16 %v880, %v879
        %v905 = vpack.c.bf16 %v882, %v881
        %v906 = vpack.c.bf16 %v884, %v883
        %v907 = vpack.c.bf16 %v886, %v885
        %v908 = vpack.c.bf16 %v888, %v887
        %v909 = vpack.c.bf16 %v890, %v889
        %v910 = vpack.c.bf16 %v892, %v891
        %v911 = vpack.c.bf16 %v894, %v893
        %v912 = vpack.c.bf16 %v896, %v895
        %s913 = scalar_lea.vmem [#allocation5], 128
        %v914 = vld [vmem:[%s913] sm:$0xf]
        %v915 = vld [vmem:[%s913 + $0x4] sm:$0xf]
        %v916 = vld [vmem:[%s913 + $0x8] sm:$0xf]
        %v917 = vld [vmem:[%s913 + $0xc] sm:$0xf]
        %v918 = vld [vmem:[%s913 + $0x10] sm:$0xf]
        %v919 = vld [vmem:[%s913 + $0x14] sm:$0xf]
        %v920 = vld [vmem:[%s913 + $0x18] sm:$0xf]
        %v921 = vld [vmem:[%s913 + $0x1c] sm:$0xf]
        %v922 = vld [vmem:[%s913 + $0x20] sm:$0xf]
        %v923 = vld [vmem:[%s913 + $0x24] sm:$0xf]
        %v924 = vld [vmem:[%s913 + $0x28] sm:$0xf]
        %v925 = vld [vmem:[%s913 + $0x2c] sm:$0xf]
        %v926 = vld [vmem:[%s913 + $0x30] sm:$0xf]
        %v927 = vld [vmem:[%s913 + $0x34] sm:$0xf]
        %v928 = vld [vmem:[%s913 + $0x38] sm:$0xf]
        %v929 = vld [vmem:[%s913 + $0x3c] sm:$0xf]
        %v930 = vld [vmem:[#allocation7 + $0x2] sm:$0x1]
        %v931 = vlaneseq
        %v932 = vshrl.u32 %v931, 7
        %v933 = vsub.s32 0, %v932
        %v934 = vrot.slane %v930, %v933
        %v951 = vunpack.c.l.b16 %v914
        %v952 = vunpack.c.l.b16 %v915
        %v953 = vunpack.c.l.b16 %v916
        %v954 = vunpack.c.l.b16 %v917
        %v955 = vunpack.c.l.b16 %v918
        %v956 = vunpack.c.l.b16 %v919
        %v957 = vunpack.c.l.b16 %v920
        %v958 = vunpack.c.l.b16 %v921
        %v959 = vunpack.c.l.b16 %v922
        %v960 = vunpack.c.l.b16 %v923
        %v961 = vunpack.c.l.b16 %v924
        %v962 = vunpack.c.l.b16 %v925
        %v963 = vunpack.c.l.b16 %v926
        %v964 = vunpack.c.l.b16 %v927
        %v965 = vunpack.c.l.b16 %v928
        %v966 = vunpack.c.l.b16 %v929
        %v967 = vpack.c.b16 %v952, %v951
        %v968 = vpack.c.b16 %v954, %v953
        %v969 = vpack.c.b16 %v956, %v955
        %v970 = vpack.c.b16 %v958, %v957
        %v971 = vpack.c.b16 %v960, %v959
        %v972 = vpack.c.b16 %v962, %v961
        %v973 = vpack.c.b16 %v964, %v963
        %v974 = vpack.c.b16 %v966, %v965
        %983 = vmatprep.subr.bf16.mxu0 0
        %984 = vmatpush1.bf16.msra.mxu0 %v974
        %985 = vmatprep.subr.bf16.mxu0 0
        %986 = vmatpush1.bf16.msra.mxu0 %v973
        %987 = vmatprep.subr.bf16.mxu0 0
        %988 = vmatpush1.bf16.msra.mxu0 %v972
        %989 = vmatprep.subr.bf16.mxu0 0
        %990 = vmatpush1.bf16.msra.mxu0 %v971
        %991 = vmatprep.subr.bf16.mxu0 0
        %992 = vmatpush1.bf16.msra.mxu0 %v970
        %993 = vmatprep.subr.bf16.mxu0 0
        %994 = vmatpush1.bf16.msra.mxu0 %v969
        %995 = vmatprep.subr.bf16.mxu0 0
        %996 = vmatpush1.bf16.msra.mxu0 %v968
        %997 = vmatprep.subr.bf16.mxu0 0
        %998 = vmatpush1.bf16.msra.mxu0 %v967
        %999 = vmatprep.subr.bf16.mxu0 0
        %1000 = vmatpush2.bf16.msra.mxu0 0
        %1001 = vmatprep.subr.bf16.mxu0 0
        %1002 = vmatpush2.bf16.msra.mxu0 0
        %1003 = vmatprep.subr.bf16.mxu0 0
        %1004 = vmatpush2.bf16.msra.mxu0 0
        %1005 = vmatprep.subr.bf16.mxu0 0
        %1006 = vmatpush2.bf16.msra.mxu0 0
        %1007 = vmatprep.subr.bf16.mxu0 0
        %1008 = vmatpush2.bf16.msra.mxu0 0
        %1009 = vmatprep.subr.bf16.mxu0 0
        %1010 = vmatpush2.bf16.msra.mxu0 0
        %1011 = vmatprep.subr.bf16.mxu0 0
        %1012 = vmatpush2.bf16.msra.mxu0 0
        %1013 = vmatprep.subr.bf16.mxu0 0
        %1014 = vmatpush2.bf16.msra.mxu0 0
        %1015 = vmatprep.mubr.bf16.mxu0 0
        %1016 = vmatmul.mubr.bf16.gmra.mxu0 %v897
        %v1017 = vpop.f32.mrf.mxu0
        %v1018 = vadd.f32 %v934, %v1017
        %v1019 = vpop.f32.mrf.mxu0
        %v1020 = vpop.f32.mrf.mxu0
        %v1021 = vadd.f32 %v934, %v1020
        %v1022 = vpop.f32.mrf.mxu0
        %1023 = vmatprep.mubr.bf16.mxu0 0
        %1024 = vmatmul.mubr.bf16.gmra.mxu0 %v898
        %v1025 = vpop.f32.mrf.mxu0
        %v1026 = vadd.f32 %v934, %v1025
        %v1027 = vpop.f32.mrf.mxu0
        %v1028 = vpop.f32.mrf.mxu0
        %v1029 = vadd.f32 %v934, %v1028
        %v1030 = vpop.f32.mrf.mxu0
        %1031 = vmatprep.mubr.bf16.mxu0 0
        %1032 = vmatmul.mubr.bf16.gmra.mxu0 %v899
        %v1033 = vpop.f32.mrf.mxu0
        %v1034 = vadd.f32 %v934, %v1033
        %v1035 = vpop.f32.mrf.mxu0
        %v1036 = vpop.f32.mrf.mxu0
        %v1037 = vadd.f32 %v934, %v1036
        %v1038 = vpop.f32.mrf.mxu0
        %1039 = vmatprep.mubr.bf16.mxu0 0
        %1040 = vmatmul.mubr.bf16.gmra.mxu0 %v900
        %v1041 = vpop.f32.mrf.mxu0
        %v1042 = vadd.f32 %v934, %v1041
        %v1043 = vpop.f32.mrf.mxu0
        %v1044 = vpop.f32.mrf.mxu0
        %v1045 = vadd.f32 %v934, %v1044
        %v1046 = vpop.f32.mrf.mxu0
        %1047 = vmatprep.mubr.bf16.mxu0 0
        %1048 = vmatmul.mubr.bf16.gmra.mxu0 %v901
        %v1049 = vpop.f32.mrf.mxu0
        %v1050 = vadd.f32 %v934, %v1049
        %v1051 = vpop.f32.mrf.mxu0
        %v1052 = vpop.f32.mrf.mxu0
        %v1053 = vadd.f32 %v934, %v1052
        %v1054 = vpop.f32.mrf.mxu0
        %1055 = vmatprep.mubr.bf16.mxu0 0
        %1056 = vmatmul.mubr.bf16.gmra.mxu0 %v902
        %v1057 = vpop.f32.mrf.mxu0
        %v1058 = vadd.f32 %v934, %v1057
        %v1059 = vpop.f32.mrf.mxu0
        %v1060 = vpop.f32.mrf.mxu0
        %v1061 = vadd.f32 %v934, %v1060
        %v1062 = vpop.f32.mrf.mxu0
        %1063 = vmatprep.mubr.bf16.mxu0 0
        %1064 = vmatmul.mubr.bf16.gmra.mxu0 %v903
        %v1065 = vpop.f32.mrf.mxu0
        %v1066 = vadd.f32 %v934, %v1065
        %v1067 = vpop.f32.mrf.mxu0
        %v1068 = vpop.f32.mrf.mxu0
        %v1069 = vadd.f32 %v934, %v1068
        %v1070 = vpop.f32.mrf.mxu0
        %1071 = vmatprep.mubr.bf16.mxu0 0
        %1072 = vmatmul.mubr.bf16.gmra.mxu0 %v904
        %v1073 = vpop.f32.mrf.mxu0
        %v1074 = vadd.f32 %v934, %v1073
        %v1075 = vpop.f32.mrf.mxu0
        %v1076 = vpop.f32.mrf.mxu0
        %v1077 = vadd.f32 %v934, %v1076
        %v1078 = vpop.f32.mrf.mxu0
        %1079 = vmatprep.mubr.bf16.mxu0 0
        %1080 = vmatmul.mubr.bf16.gmra.mxu0 %v905
        %v1081 = vpop.f32.mrf.mxu0
        %v1082 = vadd.f32 %v934, %v1081
        %v1083 = vpop.f32.mrf.mxu0
        %v1084 = vpop.f32.mrf.mxu0
        %v1085 = vadd.f32 %v934, %v1084
        %v1086 = vpop.f32.mrf.mxu0
        %1087 = vmatprep.mubr.bf16.mxu0 0
        %1088 = vmatmul.mubr.bf16.gmra.mxu0 %v906
        %v1089 = vpop.f32.mrf.mxu0
        %v1090 = vadd.f32 %v934, %v1089
        %v1091 = vpop.f32.mrf.mxu0
        %v1092 = vpop.f32.mrf.mxu0
        %v1093 = vadd.f32 %v934, %v1092
        %v1094 = vpop.f32.mrf.mxu0
        %1095 = vmatprep.mubr.bf16.mxu0 0
        %1096 = vmatmul.mubr.bf16.gmra.mxu0 %v907
        %v1097 = vpop.f32.mrf.mxu0
        %v1098 = vadd.f32 %v934, %v1097
        %v1099 = vpop.f32.mrf.mxu0
        %v1100 = vpop.f32.mrf.mxu0
        %v1101 = vadd.f32 %v934, %v1100
        %v1102 = vpop.f32.mrf.mxu0
        %1103 = vmatprep.mubr.bf16.mxu0 0
        %1104 = vmatmul.mubr.bf16.gmra.mxu0 %v908
        %v1105 = vpop.f32.mrf.mxu0
        %v1106 = vadd.f32 %v934, %v1105
        %v1107 = vpop.f32.mrf.mxu0
        %v1108 = vpop.f32.mrf.mxu0
        %v1109 = vadd.f32 %v934, %v1108
        %v1110 = vpop.f32.mrf.mxu0
        %1111 = vmatprep.mubr.bf16.mxu0 0
        %1112 = vmatmul.mubr.bf16.gmra.mxu0 %v909
        %v1113 = vpop.f32.mrf.mxu0
        %v1114 = vadd.f32 %v934, %v1113
        %v1115 = vpop.f32.mrf.mxu0
        %v1116 = vpop.f32.mrf.mxu0
        %v1117 = vadd.f32 %v934, %v1116
        %v1118 = vpop.f32.mrf.mxu0
        %1119 = vmatprep.mubr.bf16.mxu0 0
        %1120 = vmatmul.mubr.bf16.gmra.mxu0 %v910
        %v1121 = vpop.f32.mrf.mxu0
        %v1122 = vadd.f32 %v934, %v1121
        %v1123 = vpop.f32.mrf.mxu0
        %v1124 = vpop.f32.mrf.mxu0
        %v1125 = vadd.f32 %v934, %v1124
        %v1126 = vpop.f32.mrf.mxu0
        %1127 = vmatprep.mubr.bf16.mxu0 0
        %1128 = vmatmul.mubr.bf16.gmra.mxu0 %v911
        %v1129 = vpop.f32.mrf.mxu0
        %v1130 = vadd.f32 %v934, %v1129
        %v1131 = vpop.f32.mrf.mxu0
        %v1132 = vpop.f32.mrf.mxu0
        %v1133 = vadd.f32 %v934, %v1132
        %v1134 = vpop.f32.mrf.mxu0
        %1135 = vmatprep.mubr.bf16.mxu0 0
        %1136 = vmatmul.mubr.bf16.gmra.mxu0 %v912
        %v1137 = vpop.f32.mrf.mxu0
        %v1138 = vadd.f32 %v934, %v1137
        %v1139 = vpop.f32.mrf.mxu0
        %v1140 = vpop.f32.mrf.mxu0
        %v1141 = vadd.f32 %v934, %v1140
        %v1142 = vpop.f32.mrf.mxu0
        %1143 = vdwg.mxu0
        %v1144 = vmul.f32 %v1018, 0.01
        %v1145 = vmul.f32 %v1021, 0.01
        %v1146 = vmul.f32 %v1026, 0.01
        %v1147 = vmul.f32 %v1029, 0.01
        %v1148 = vmul.f32 %v1034, 0.01
        %v1149 = vmul.f32 %v1037, 0.01
        %v1150 = vmul.f32 %v1042, 0.01
        %v1151 = vmul.f32 %v1045, 0.01
        %v1152 = vmul.f32 %v1050, 0.01
        %v1153 = vmul.f32 %v1053, 0.01
        %v1154 = vmul.f32 %v1058, 0.01
        %v1155 = vmul.f32 %v1061, 0.01
        %v1156 = vmul.f32 %v1066, 0.01
        %v1157 = vmul.f32 %v1069, 0.01
        %v1158 = vmul.f32 %v1074, 0.01
        %v1159 = vmul.f32 %v1077, 0.01
        %v1160 = vmul.f32 %v1082, 0.01
        %v1161 = vmul.f32 %v1085, 0.01
        %v1162 = vmul.f32 %v1090, 0.01
        %v1163 = vmul.f32 %v1093, 0.01
        %v1164 = vmul.f32 %v1098, 0.01
        %v1165 = vmul.f32 %v1101, 0.01
        %v1166 = vmul.f32 %v1106, 0.01
        %v1167 = vmul.f32 %v1109, 0.01
        %v1168 = vmul.f32 %v1114, 0.01
        %v1169 = vmul.f32 %v1117, 0.01
        %v1170 = vmul.f32 %v1122, 0.01
        %v1171 = vmul.f32 %v1125, 0.01
        %v1172 = vmul.f32 %v1130, 0.01
        %v1173 = vmul.f32 %v1133, 0.01
        %v1174 = vmul.f32 %v1138, 0.01
        %v1175 = vmul.f32 %v1141, 0.01
        %v1176 = vmax.f32 %v1018, %v1144
        %v1177 = vmax.f32 %v1021, %v1145
        %v1178 = vmax.f32 %v1026, %v1146
        %v1179 = vmax.f32 %v1029, %v1147
        %v1180 = vmax.f32 %v1034, %v1148
        %v1181 = vmax.f32 %v1037, %v1149
        %v1182 = vmax.f32 %v1042, %v1150
        %v1183 = vmax.f32 %v1045, %v1151
        %v1184 = vmax.f32 %v1050, %v1152
        %v1185 = vmax.f32 %v1053, %v1153
        %v1186 = vmax.f32 %v1058, %v1154
        %v1187 = vmax.f32 %v1061, %v1155
        %v1188 = vmax.f32 %v1066, %v1156
        %v1189 = vmax.f32 %v1069, %v1157
        %v1190 = vmax.f32 %v1074, %v1158
        %v1191 = vmax.f32 %v1077, %v1159
        %v1192 = vmax.f32 %v1082, %v1160
        %v1193 = vmax.f32 %v1085, %v1161
        %v1194 = vmax.f32 %v1090, %v1162
        %v1195 = vmax.f32 %v1093, %v1163
        %v1196 = vmax.f32 %v1098, %v1164
        %v1197 = vmax.f32 %v1101, %v1165
        %v1198 = vmax.f32 %v1106, %v1166
        %v1199 = vmax.f32 %v1109, %v1167
        %v1200 = vmax.f32 %v1114, %v1168
        %v1201 = vmax.f32 %v1117, %v1169
        %v1202 = vmax.f32 %v1122, %v1170
        %v1203 = vmax.f32 %v1125, %v1171
        %v1204 = vmax.f32 %v1130, %v1172
        %v1205 = vmax.f32 %v1133, %v1173
        %v1206 = vmax.f32 %v1138, %v1174
        %v1207 = vmax.f32 %v1141, %v1175
        %v1208 = vpack.c.bf16 %v1177, %v1176
        %v1209 = vpack.c.bf16 %v1179, %v1178
        %v1210 = vpack.c.bf16 %v1181, %v1180
        %v1211 = vpack.c.bf16 %v1183, %v1182
        %v1212 = vpack.c.bf16 %v1185, %v1184
        %v1213 = vpack.c.bf16 %v1187, %v1186
        %v1214 = vpack.c.bf16 %v1189, %v1188
        %v1215 = vpack.c.bf16 %v1191, %v1190
        %v1216 = vpack.c.bf16 %v1193, %v1192
        %v1217 = vpack.c.bf16 %v1195, %v1194
        %v1218 = vpack.c.bf16 %v1197, %v1196
        %v1219 = vpack.c.bf16 %v1199, %v1198
        %v1220 = vpack.c.bf16 %v1201, %v1200
        %v1221 = vpack.c.bf16 %v1203, %v1202
        %v1222 = vpack.c.bf16 %v1205, %v1204
        %v1223 = vpack.c.bf16 %v1207, %v1206
        %s1224 = scalar_lea.vmem [#allocation5], 192
        %v1225 = vld [vmem:[%s1224] sm:$0xf]
        %v1226 = vld [vmem:[%s1224 + $0x4] sm:$0xf]
        %v1227 = vld [vmem:[%s1224 + $0x8] sm:$0xf]
        %v1228 = vld [vmem:[%s1224 + $0xc] sm:$0xf]
        %v1229 = vld [vmem:[%s1224 + $0x10] sm:$0xf]
        %v1230 = vld [vmem:[%s1224 + $0x14] sm:$0xf]
        %v1231 = vld [vmem:[%s1224 + $0x18] sm:$0xf]
        %v1232 = vld [vmem:[%s1224 + $0x1c] sm:$0xf]
        %v1233 = vld [vmem:[%s1224 + $0x20] sm:$0xf]
        %v1234 = vld [vmem:[%s1224 + $0x24] sm:$0xf]
        %v1235 = vld [vmem:[%s1224 + $0x28] sm:$0xf]
        %v1236 = vld [vmem:[%s1224 + $0x2c] sm:$0xf]
        %v1237 = vld [vmem:[%s1224 + $0x30] sm:$0xf]
        %v1238 = vld [vmem:[%s1224 + $0x34] sm:$0xf]
        %v1239 = vld [vmem:[%s1224 + $0x38] sm:$0xf]
        %v1240 = vld [vmem:[%s1224 + $0x3c] sm:$0xf]
        %v1241 = vld [vmem:[#allocation7 + $0x3] sm:$0x1]
        %v1242 = vlaneseq
        %v1243 = vshrl.u32 %v1242, 7
        %v1244 = vsub.s32 0, %v1243
        %v1245 = vrot.slane %v1241, %v1244
        %v1262 = vunpack.c.l.b16 %v1225
        %v1263 = vunpack.c.l.b16 %v1226
        %v1264 = vunpack.c.l.b16 %v1227
        %v1265 = vunpack.c.l.b16 %v1228
        %v1266 = vunpack.c.l.b16 %v1229
        %v1267 = vunpack.c.l.b16 %v1230
        %v1268 = vunpack.c.l.b16 %v1231
        %v1269 = vunpack.c.l.b16 %v1232
        %v1270 = vunpack.c.l.b16 %v1233
        %v1271 = vunpack.c.l.b16 %v1234
        %v1272 = vunpack.c.l.b16 %v1235
        %v1273 = vunpack.c.l.b16 %v1236
        %v1274 = vunpack.c.l.b16 %v1237
        %v1275 = vunpack.c.l.b16 %v1238
        %v1276 = vunpack.c.l.b16 %v1239
        %v1277 = vunpack.c.l.b16 %v1240
        %v1278 = vpack.c.b16 %v1263, %v1262
        %v1279 = vpack.c.b16 %v1265, %v1264
        %v1280 = vpack.c.b16 %v1267, %v1266
        %v1281 = vpack.c.b16 %v1269, %v1268
        %v1282 = vpack.c.b16 %v1271, %v1270
        %v1283 = vpack.c.b16 %v1273, %v1272
        %v1284 = vpack.c.b16 %v1275, %v1274
        %v1285 = vpack.c.b16 %v1277, %v1276
        %1294 = vmatprep.subr.bf16.mxu0 0
        %1295 = vmatpush1.bf16.msra.mxu0 %v1285
        %1296 = vmatprep.subr.bf16.mxu0 0
        %1297 = vmatpush1.bf16.msra.mxu0 %v1284
        %1298 = vmatprep.subr.bf16.mxu0 0
        %1299 = vmatpush1.bf16.msra.mxu0 %v1283
        %1300 = vmatprep.subr.bf16.mxu0 0
        %1301 = vmatpush1.bf16.msra.mxu0 %v1282
        %1302 = vmatprep.subr.bf16.mxu0 0
        %1303 = vmatpush1.bf16.msra.mxu0 %v1281
        %1304 = vmatprep.subr.bf16.mxu0 0
        %1305 = vmatpush1.bf16.msra.mxu0 %v1280
        %1306 = vmatprep.subr.bf16.mxu0 0
        %1307 = vmatpush1.bf16.msra.mxu0 %v1279
        %1308 = vmatprep.subr.bf16.mxu0 0
        %1309 = vmatpush1.bf16.msra.mxu0 %v1278
        %1310 = vmatprep.subr.bf16.mxu0 0
        %1311 = vmatpush2.bf16.msra.mxu0 0
        %1312 = vmatprep.subr.bf16.mxu0 0
        %1313 = vmatpush2.bf16.msra.mxu0 0
        %1314 = vmatprep.subr.bf16.mxu0 0
        %1315 = vmatpush2.bf16.msra.mxu0 0
        %1316 = vmatprep.subr.bf16.mxu0 0
        %1317 = vmatpush2.bf16.msra.mxu0 0
        %1318 = vmatprep.subr.bf16.mxu0 0
        %1319 = vmatpush2.bf16.msra.mxu0 0
        %1320 = vmatprep.subr.bf16.mxu0 0
        %1321 = vmatpush2.bf16.msra.mxu0 0
        %1322 = vmatprep.subr.bf16.mxu0 0
        %1323 = vmatpush2.bf16.msra.mxu0 0
        %1324 = vmatprep.subr.bf16.mxu0 0
        %1325 = vmatpush2.bf16.msra.mxu0 0
        %1326 = vmatprep.mubr.bf16.mxu0 0
        %1327 = vmatmul.mubr.bf16.gmra.mxu0 %v1208
        %v1328 = vpop.f32.mrf.mxu0
        %v1329 = vadd.f32 %v1245, %v1328
        %v1330 = vpop.f32.mrf.mxu0
        %v1331 = vpop.f32.mrf.mxu0
        %v1332 = vadd.f32 %v1245, %v1331
        %v1333 = vpop.f32.mrf.mxu0
        %1334 = vmatprep.mubr.bf16.mxu0 0
        %1335 = vmatmul.mubr.bf16.gmra.mxu0 %v1209
        %v1336 = vpop.f32.mrf.mxu0
        %v1337 = vadd.f32 %v1245, %v1336
        %v1338 = vpop.f32.mrf.mxu0
        %v1339 = vpop.f32.mrf.mxu0
        %v1340 = vadd.f32 %v1245, %v1339
        %v1341 = vpop.f32.mrf.mxu0
        %1342 = vmatprep.mubr.bf16.mxu0 0
        %1343 = vmatmul.mubr.bf16.gmra.mxu0 %v1210
        %v1344 = vpop.f32.mrf.mxu0
        %v1345 = vadd.f32 %v1245, %v1344
        %v1346 = vpop.f32.mrf.mxu0
        %v1347 = vpop.f32.mrf.mxu0
        %v1348 = vadd.f32 %v1245, %v1347
        %v1349 = vpop.f32.mrf.mxu0
        %1350 = vmatprep.mubr.bf16.mxu0 0
        %1351 = vmatmul.mubr.bf16.gmra.mxu0 %v1211
        %v1352 = vpop.f32.mrf.mxu0
        %v1353 = vadd.f32 %v1245, %v1352
        %v1354 = vpop.f32.mrf.mxu0
        %v1355 = vpop.f32.mrf.mxu0
        %v1356 = vadd.f32 %v1245, %v1355
        %v1357 = vpop.f32.mrf.mxu0
        %1358 = vmatprep.mubr.bf16.mxu0 0
        %1359 = vmatmul.mubr.bf16.gmra.mxu0 %v1212
        %v1360 = vpop.f32.mrf.mxu0
        %v1361 = vadd.f32 %v1245, %v1360
        %v1362 = vpop.f32.mrf.mxu0
        %v1363 = vpop.f32.mrf.mxu0
        %v1364 = vadd.f32 %v1245, %v1363
        %v1365 = vpop.f32.mrf.mxu0
        %1366 = vmatprep.mubr.bf16.mxu0 0
        %1367 = vmatmul.mubr.bf16.gmra.mxu0 %v1213
        %v1368 = vpop.f32.mrf.mxu0
        %v1369 = vadd.f32 %v1245, %v1368
        %v1370 = vpop.f32.mrf.mxu0
        %v1371 = vpop.f32.mrf.mxu0
        %v1372 = vadd.f32 %v1245, %v1371
        %v1373 = vpop.f32.mrf.mxu0
        %1374 = vmatprep.mubr.bf16.mxu0 0
        %1375 = vmatmul.mubr.bf16.gmra.mxu0 %v1214
        %v1376 = vpop.f32.mrf.mxu0
        %v1377 = vadd.f32 %v1245, %v1376
        %v1378 = vpop.f32.mrf.mxu0
        %v1379 = vpop.f32.mrf.mxu0
        %v1380 = vadd.f32 %v1245, %v1379
        %v1381 = vpop.f32.mrf.mxu0
        %1382 = vmatprep.mubr.bf16.mxu0 0
        %1383 = vmatmul.mubr.bf16.gmra.mxu0 %v1215
        %v1384 = vpop.f32.mrf.mxu0
        %v1385 = vadd.f32 %v1245, %v1384
        %v1386 = vpop.f32.mrf.mxu0
        %v1387 = vpop.f32.mrf.mxu0
        %v1388 = vadd.f32 %v1245, %v1387
        %v1389 = vpop.f32.mrf.mxu0
        %1390 = vmatprep.mubr.bf16.mxu0 0
        %1391 = vmatmul.mubr.bf16.gmra.mxu0 %v1216
        %v1392 = vpop.f32.mrf.mxu0
        %v1393 = vadd.f32 %v1245, %v1392
        %v1394 = vpop.f32.mrf.mxu0
        %v1395 = vpop.f32.mrf.mxu0
        %v1396 = vadd.f32 %v1245, %v1395
        %v1397 = vpop.f32.mrf.mxu0
        %1398 = vmatprep.mubr.bf16.mxu0 0
        %1399 = vmatmul.mubr.bf16.gmra.mxu0 %v1217
        %v1400 = vpop.f32.mrf.mxu0
        %v1401 = vadd.f32 %v1245, %v1400
        %v1402 = vpop.f32.mrf.mxu0
        %v1403 = vpop.f32.mrf.mxu0
        %v1404 = vadd.f32 %v1245, %v1403
        %v1405 = vpop.f32.mrf.mxu0
        %1406 = vmatprep.mubr.bf16.mxu0 0
        %1407 = vmatmul.mubr.bf16.gmra.mxu0 %v1218
        %v1408 = vpop.f32.mrf.mxu0
        %v1409 = vadd.f32 %v1245, %v1408
        %v1410 = vpop.f32.mrf.mxu0
        %v1411 = vpop.f32.mrf.mxu0
        %v1412 = vadd.f32 %v1245, %v1411
        %v1413 = vpop.f32.mrf.mxu0
        %1414 = vmatprep.mubr.bf16.mxu0 0
        %1415 = vmatmul.mubr.bf16.gmra.mxu0 %v1219
        %v1416 = vpop.f32.mrf.mxu0
        %v1417 = vadd.f32 %v1245, %v1416
        %v1418 = vpop.f32.mrf.mxu0
        %v1419 = vpop.f32.mrf.mxu0
        %v1420 = vadd.f32 %v1245, %v1419
        %v1421 = vpop.f32.mrf.mxu0
        %1422 = vmatprep.mubr.bf16.mxu0 0
        %1423 = vmatmul.mubr.bf16.gmra.mxu0 %v1220
        %v1424 = vpop.f32.mrf.mxu0
        %v1425 = vadd.f32 %v1245, %v1424
        %v1426 = vpop.f32.mrf.mxu0
        %v1427 = vpop.f32.mrf.mxu0
        %v1428 = vadd.f32 %v1245, %v1427
        %v1429 = vpop.f32.mrf.mxu0
        %1430 = vmatprep.mubr.bf16.mxu0 0
        %1431 = vmatmul.mubr.bf16.gmra.mxu0 %v1221
        %v1432 = vpop.f32.mrf.mxu0
        %v1433 = vadd.f32 %v1245, %v1432
        %v1434 = vpop.f32.mrf.mxu0
        %v1435 = vpop.f32.mrf.mxu0
        %v1436 = vadd.f32 %v1245, %v1435
        %v1437 = vpop.f32.mrf.mxu0
        %1438 = vmatprep.mubr.bf16.mxu0 0
        %1439 = vmatmul.mubr.bf16.gmra.mxu0 %v1222
        %v1440 = vpop.f32.mrf.mxu0
        %v1441 = vadd.f32 %v1245, %v1440
        %v1442 = vpop.f32.mrf.mxu0
        %v1443 = vpop.f32.mrf.mxu0
        %v1444 = vadd.f32 %v1245, %v1443
        %v1445 = vpop.f32.mrf.mxu0
        %1446 = vmatprep.mubr.bf16.mxu0 0
        %1447 = vmatmul.mubr.bf16.gmra.mxu0 %v1223
        %v1448 = vpop.f32.mrf.mxu0
        %v1449 = vadd.f32 %v1245, %v1448
        %v1450 = vpop.f32.mrf.mxu0
        %v1451 = vpop.f32.mrf.mxu0
        %v1452 = vadd.f32 %v1245, %v1451
        %v1453 = vpop.f32.mrf.mxu0
        %1454 = vdwg.mxu0
        %s1455 = scalar_lea.vmem %s240, 256 [#allocation8]
        %1456 = vst [vmem:[%s1455] sm:$0xff] %v1329
        %1457 = vst [vmem:[%s1455 + $0x8] sm:$0xff] %v1332
        %1458 = vst [vmem:[%s1455 + $0x10] sm:$0xff] %v1337
        %1459 = vst [vmem:[%s1455 + $0x18] sm:$0xff] %v1340
        %1460 = vst [vmem:[%s1455 + $0x20] sm:$0xff] %v1345
        %1461 = vst [vmem:[%s1455 + $0x28] sm:$0xff] %v1348
        %1462 = vst [vmem:[%s1455 + $0x30] sm:$0xff] %v1353
        %1463 = vst [vmem:[%s1455 + $0x38] sm:$0xff] %v1356
        %1464 = vst [vmem:[%s1455 + $0x40] sm:$0xff] %v1361
        %1465 = vst [vmem:[%s1455 + $0x48] sm:$0xff] %v1364
        %1466 = vst [vmem:[%s1455 + $0x50] sm:$0xff] %v1369
        %1467 = vst [vmem:[%s1455 + $0x58] sm:$0xff] %v1372
        %1468 = vst [vmem:[%s1455 + $0x60] sm:$0xff] %v1377
        %1469 = vst [vmem:[%s1455 + $0x68] sm:$0xff] %v1380
        %1470 = vst [vmem:[%s1455 + $0x70] sm:$0xff] %v1385
        %1471 = vst [vmem:[%s1455 + $0x78] sm:$0xff] %v1388
        %1472 = vst [vmem:[%s1455 + $0x80] sm:$0xff] %v1393
        %1473 = vst [vmem:[%s1455 + $0x88] sm:$0xff] %v1396
        %1474 = vst [vmem:[%s1455 + $0x90] sm:$0xff] %v1401
        %1475 = vst [vmem:[%s1455 + $0x98] sm:$0xff] %v1404
        %1476 = vst [vmem:[%s1455 + $0xa0] sm:$0xff] %v1409
        %1477 = vst [vmem:[%s1455 + $0xa8] sm:$0xff] %v1412
        %1478 = vst [vmem:[%s1455 + $0xb0] sm:$0xff] %v1417
        %1479 = vst [vmem:[%s1455 + $0xb8] sm:$0xff] %v1420
        %1480 = vst [vmem:[%s1455 + $0xc0] sm:$0xff] %v1425
        %1481 = vst [vmem:[%s1455 + $0xc8] sm:$0xff] %v1428
        %1482 = vst [vmem:[%s1455 + $0xd0] sm:$0xff] %v1433
        %1483 = vst [vmem:[%s1455 + $0xd8] sm:$0xff] %v1436
        %1484 = vst [vmem:[%s1455 + $0xe0] sm:$0xff] %v1441
        %1485 = vst [vmem:[%s1455 + $0xe8] sm:$0xff] %v1444
        %1486 = vst [vmem:[%s1455 + $0xf0] sm:$0xff] %v1449
        %1487 = vst [vmem:[%s1455 + $0xf8] sm:$0xff] %v1452
        %v1488 = vlaneseq
        %v1489 = vand.u32 %v1488, 127
        %vm1490 = vcmp.lt.s32.totalorder %v1489, 64
        %1491 = vrot.lane.b32.xlu0 %v1329, 64
        %v1492 = vpop.permute.xlu0 %1491
        %1493 = vrot.lane.b32.xlu0 %v1332, 64
        %v1494 = vpop.permute.xlu0 %1493
        %1495 = vrot.lane.b32.xlu0 %v1337, 64
        %v1496 = vpop.permute.xlu0 %1495
        %1497 = vrot.lane.b32.xlu0 %v1340, 64
        %v1498 = vpop.permute.xlu0 %1497
        %1499 = vrot.lane.b32.xlu0 %v1345, 64
        %v1500 = vpop.permute.xlu0 %1499
        %1501 = vrot.lane.b32.xlu0 %v1348, 64
        %v1502 = vpop.permute.xlu0 %1501
        %1503 = vrot.lane.b32.xlu0 %v1353, 64
        %v1504 = vpop.permute.xlu0 %1503
        %1505 = vrot.lane.b32.xlu0 %v1356, 64
        %v1506 = vpop.permute.xlu0 %1505
        %1507 = vrot.lane.b32.xlu0 %v1361, 64
        %v1508 = vpop.permute.xlu0 %1507
        %1509 = vrot.lane.b32.xlu0 %v1364, 64
        %v1510 = vpop.permute.xlu0 %1509
        %1511 = vrot.lane.b32.xlu0 %v1369, 64
        %v1512 = vpop.permute.xlu0 %1511
        %1513 = vrot.lane.b32.xlu0 %v1372, 64
        %v1514 = vpop.permute.xlu0 %1513
        %1515 = vrot.lane.b32.xlu0 %v1377, 64
        %v1516 = vpop.permute.xlu0 %1515
        %1517 = vrot.lane.b32.xlu0 %v1380, 64
        %v1518 = vpop.permute.xlu0 %1517
        %1519 = vrot.lane.b32.xlu0 %v1385, 64
        %v1520 = vpop.permute.xlu0 %1519
        %1521 = vrot.lane.b32.xlu0 %v1388, 64
        %v1522 = vpop.permute.xlu0 %1521
        %1523 = vrot.lane.b32.xlu0 %v1393, 64
        %v1524 = vpop.permute.xlu0 %1523
        %1525 = vrot.lane.b32.xlu0 %v1396, 64
        %v1526 = vpop.permute.xlu0 %1525
        %1527 = vrot.lane.b32.xlu0 %v1401, 64
        %v1528 = vpop.permute.xlu0 %1527
        %1529 = vrot.lane.b32.xlu0 %v1404, 64
        %v1530 = vpop.permute.xlu0 %1529
        %1531 = vrot.lane.b32.xlu0 %v1409, 64
        %v1532 = vpop.permute.xlu0 %1531
        %1533 = vrot.lane.b32.xlu0 %v1412, 64
        %v1534 = vpop.permute.xlu0 %1533
        %1535 = vrot.lane.b32.xlu0 %v1417, 64
        %v1536 = vpop.permute.xlu0 %1535
        %1537 = vrot.lane.b32.xlu0 %v1420, 64
        %v1538 = vpop.permute.xlu0 %1537
        %1539 = vrot.lane.b32.xlu0 %v1425, 64
        %v1540 = vpop.permute.xlu0 %1539
        %1541 = vrot.lane.b32.xlu0 %v1428, 64
        %v1542 = vpop.permute.xlu0 %1541
        %1543 = vrot.lane.b32.xlu0 %v1433, 64
        %v1544 = vpop.permute.xlu0 %1543
        %1545 = vrot.lane.b32.xlu0 %v1436, 64
        %v1546 = vpop.permute.xlu0 %1545
        %1547 = vrot.lane.b32.xlu0 %v1441, 64
        %v1548 = vpop.permute.xlu0 %1547
        %1549 = vrot.lane.b32.xlu0 %v1444, 64
        %v1550 = vpop.permute.xlu0 %1549
        %1551 = vrot.lane.b32.xlu0 %v1449, 64
        %v1552 = vpop.permute.xlu0 %1551
        %1553 = vrot.lane.b32.xlu0 %v1452, 64
        %v1554 = vpop.permute.xlu0 %1553
        %v1555 = vsel %vm1490, %v1492, 0.0
        %v1556 = vsel %vm1490, %v1494, 0.0
        %v1557 = vsel %vm1490, %v1496, 0.0
        %v1558 = vsel %vm1490, %v1498, 0.0
        %v1559 = vsel %vm1490, %v1500, 0.0
        %v1560 = vsel %vm1490, %v1502, 0.0
        %v1561 = vsel %vm1490, %v1504, 0.0
        %v1562 = vsel %vm1490, %v1506, 0.0
        %v1563 = vsel %vm1490, %v1508, 0.0
        %v1564 = vsel %vm1490, %v1510, 0.0
        %v1565 = vsel %vm1490, %v1512, 0.0
        %v1566 = vsel %vm1490, %v1514, 0.0
        %v1567 = vsel %vm1490, %v1516, 0.0
        %v1568 = vsel %vm1490, %v1518, 0.0
        %v1569 = vsel %vm1490, %v1520, 0.0
        %v1570 = vsel %vm1490, %v1522, 0.0
        %v1571 = vsel %vm1490, %v1524, 0.0
        %v1572 = vsel %vm1490, %v1526, 0.0
        %v1573 = vsel %vm1490, %v1528, 0.0
        %v1574 = vsel %vm1490, %v1530, 0.0
        %v1575 = vsel %vm1490, %v1532, 0.0
        %v1576 = vsel %vm1490, %v1534, 0.0
        %v1577 = vsel %vm1490, %v1536, 0.0
        %v1578 = vsel %vm1490, %v1538, 0.0
        %v1579 = vsel %vm1490, %v1540, 0.0
        %v1580 = vsel %vm1490, %v1542, 0.0
        %v1581 = vsel %vm1490, %v1544, 0.0
        %v1582 = vsel %vm1490, %v1546, 0.0
        %v1583 = vsel %vm1490, %v1548, 0.0
        %v1584 = vsel %vm1490, %v1550, 0.0
        %v1585 = vsel %vm1490, %v1552, 0.0
        %v1586 = vsel %vm1490, %v1554, 0.0
        %v1587 = vmul.f32 %v1555, 0.5
        %v1588 = vmul.f32 %v1556, 0.5
        %v1589 = vmul.f32 %v1557, 0.5
        %v1590 = vmul.f32 %v1558, 0.5
        %v1591 = vmul.f32 %v1559, 0.5
        %v1592 = vmul.f32 %v1560, 0.5
        %v1593 = vmul.f32 %v1561, 0.5
        %v1594 = vmul.f32 %v1562, 0.5
        %v1595 = vmul.f32 %v1563, 0.5
        %v1596 = vmul.f32 %v1564, 0.5
        %v1597 = vmul.f32 %v1565, 0.5
        %v1598 = vmul.f32 %v1566, 0.5
        %v1599 = vmul.f32 %v1567, 0.5
        %v1600 = vmul.f32 %v1568, 0.5
        %v1601 = vmul.f32 %v1569, 0.5
        %v1602 = vmul.f32 %v1570, 0.5
        %v1603 = vmul.f32 %v1571, 0.5
        %v1604 = vmul.f32 %v1572, 0.5
        %v1605 = vmul.f32 %v1573, 0.5
        %v1606 = vmul.f32 %v1574, 0.5
        %v1607 = vmul.f32 %v1575, 0.5
        %v1608 = vmul.f32 %v1576, 0.5
        %v1609 = vmul.f32 %v1577, 0.5
        %v1610 = vmul.f32 %v1578, 0.5
        %v1611 = vmul.f32 %v1579, 0.5
        %v1612 = vmul.f32 %v1580, 0.5
        %v1613 = vmul.f32 %v1581, 0.5
        %v1614 = vmul.f32 %v1582, 0.5
        %v1615 = vmul.f32 %v1583, 0.5
        %v1616 = vmul.f32 %v1584, 0.5
        %v1617 = vmul.f32 %v1585, 0.5
        %v1618 = vmul.f32 %v1586, 0.5
        %v1619 = vmul.f32 %v1587, 1.442695
        %v1620 = vpow.pop %v1619
        %v1621 = vmul.f32 %v1588, 1.442695
        %v1622 = vpow.pop %v1621
        %v1623 = vmul.f32 %v1589, 1.442695
        %v1624 = vpow.pop %v1623
        %v1625 = vmul.f32 %v1590, 1.442695
        %v1626 = vpow.pop %v1625
        %v1627 = vmul.f32 %v1591, 1.442695
        %v1628 = vpow.pop %v1627
        %v1629 = vmul.f32 %v1592, 1.442695
        %v1630 = vpow.pop %v1629
        %v1631 = vmul.f32 %v1593, 1.442695
        %v1632 = vpow.pop %v1631
        %v1633 = vmul.f32 %v1594, 1.442695
        %v1634 = vpow.pop %v1633
        %v1635 = vmul.f32 %v1595, 1.442695
        %v1636 = vpow.pop %v1635
        %v1637 = vmul.f32 %v1596, 1.442695
        %v1638 = vpow.pop %v1637
        %v1639 = vmul.f32 %v1597, 1.442695
        %v1640 = vpow.pop %v1639
        %v1641 = vmul.f32 %v1598, 1.442695
        %v1642 = vpow.pop %v1641
        %v1643 = vmul.f32 %v1599, 1.442695
        %v1644 = vpow.pop %v1643
        %v1645 = vmul.f32 %v1600, 1.442695
        %v1646 = vpow.pop %v1645
        %v1647 = vmul.f32 %v1601, 1.442695
        %v1648 = vpow.pop %v1647
        %v1649 = vmul.f32 %v1602, 1.442695
        %v1650 = vpow.pop %v1649
        %v1651 = vmul.f32 %v1603, 1.442695
        %v1652 = vpow.pop %v1651
        %v1653 = vmul.f32 %v1604, 1.442695
        %v1654 = vpow.pop %v1653
        %v1655 = vmul.f32 %v1605, 1.442695
        %v1656 = vpow.pop %v1655
        %v1657 = vmul.f32 %v1606, 1.442695
        %v1658 = vpow.pop %v1657
        %v1659 = vmul.f32 %v1607, 1.442695
        %v1660 = vpow.pop %v1659
        %v1661 = vmul.f32 %v1608, 1.442695
        %v1662 = vpow.pop %v1661
        %v1663 = vmul.f32 %v1609, 1.442695
        %v1664 = vpow.pop %v1663
        %v1665 = vmul.f32 %v1610, 1.442695
        %v1666 = vpow.pop %v1665
        %v1667 = vmul.f32 %v1611, 1.442695
        %v1668 = vpow.pop %v1667
        %v1669 = vmul.f32 %v1612, 1.442695
        %v1670 = vpow.pop %v1669
        %v1671 = vmul.f32 %v1613, 1.442695
        %v1672 = vpow.pop %v1671
        %v1673 = vmul.f32 %v1614, 1.442695
        %v1674 = vpow.pop %v1673
        %v1675 = vmul.f32 %v1615, 1.442695
        %v1676 = vpow.pop %v1675
        %v1677 = vmul.f32 %v1616, 1.442695
        %v1678 = vpow.pop %v1677
        %v1679 = vmul.f32 %v1617, 1.442695
        %v1680 = vpow.pop %v1679
        %v1681 = vmul.f32 %v1618, 1.442695
        %v1682 = vpow.pop %v1681
        %v1683 = vsel %vm1490, %v1329, 0.0
        %v1684 = vsel %vm1490, %v1332, 0.0
        %v1685 = vsel %vm1490, %v1337, 0.0
        %v1686 = vsel %vm1490, %v1340, 0.0
        %v1687 = vsel %vm1490, %v1345, 0.0
        %v1688 = vsel %vm1490, %v1348, 0.0
        %v1689 = vsel %vm1490, %v1353, 0.0
        %v1690 = vsel %vm1490, %v1356, 0.0
        %v1691 = vsel %vm1490, %v1361, 0.0
        %v1692 = vsel %vm1490, %v1364, 0.0
        %v1693 = vsel %vm1490, %v1369, 0.0
        %v1694 = vsel %vm1490, %v1372, 0.0
        %v1695 = vsel %vm1490, %v1377, 0.0
        %v1696 = vsel %vm1490, %v1380, 0.0
        %v1697 = vsel %vm1490, %v1385, 0.0
        %v1698 = vsel %vm1490, %v1388, 0.0
        %v1699 = vsel %vm1490, %v1393, 0.0
        %v1700 = vsel %vm1490, %v1396, 0.0
        %v1701 = vsel %vm1490, %v1401, 0.0
        %v1702 = vsel %vm1490, %v1404, 0.0
        %v1703 = vsel %vm1490, %v1409, 0.0
        %v1704 = vsel %vm1490, %v1412, 0.0
        %v1705 = vsel %vm1490, %v1417, 0.0
        %v1706 = vsel %vm1490, %v1420, 0.0
        %v1707 = vsel %vm1490, %v1425, 0.0
        %v1708 = vsel %vm1490, %v1428, 0.0
        %v1709 = vsel %vm1490, %v1433, 0.0
        %v1710 = vsel %vm1490, %v1436, 0.0
        %v1711 = vsel %vm1490, %v1441, 0.0
        %v1712 = vsel %vm1490, %v1444, 0.0
        %v1713 = vsel %vm1490, %v1449, 0.0
        %v1714 = vsel %vm1490, %v1452, 0.0
        %s1715 = scalar_lea.vmem %s210, 256 [#allocation2]
        %v1716 = vld [vmem:[%s1715] sm:$0xff]
        %v1717 = vld [vmem:[%s1715 + $0x8] sm:$0xff]
        %v1718 = vld [vmem:[%s1715 + $0x10] sm:$0xff]
        %v1719 = vld [vmem:[%s1715 + $0x18] sm:$0xff]
        %v1720 = vld [vmem:[%s1715 + $0x20] sm:$0xff]
        %v1721 = vld [vmem:[%s1715 + $0x28] sm:$0xff]
        %v1722 = vld [vmem:[%s1715 + $0x30] sm:$0xff]
        %v1723 = vld [vmem:[%s1715 + $0x38] sm:$0xff]
        %v1724 = vld [vmem:[%s1715 + $0x40] sm:$0xff]
        %v1725 = vld [vmem:[%s1715 + $0x48] sm:$0xff]
        %v1726 = vld [vmem:[%s1715 + $0x50] sm:$0xff]
        %v1727 = vld [vmem:[%s1715 + $0x58] sm:$0xff]
        %v1728 = vld [vmem:[%s1715 + $0x60] sm:$0xff]
        %v1729 = vld [vmem:[%s1715 + $0x68] sm:$0xff]
        %v1730 = vld [vmem:[%s1715 + $0x70] sm:$0xff]
        %v1731 = vld [vmem:[%s1715 + $0x78] sm:$0xff]
        %v1732 = vld [vmem:[%s1715 + $0x80] sm:$0xff]
        %v1733 = vld [vmem:[%s1715 + $0x88] sm:$0xff]
        %v1734 = vld [vmem:[%s1715 + $0x90] sm:$0xff]
        %v1735 = vld [vmem:[%s1715 + $0x98] sm:$0xff]
        %v1736 = vld [vmem:[%s1715 + $0xa0] sm:$0xff]
        %v1737 = vld [vmem:[%s1715 + $0xa8] sm:$0xff]
        %v1738 = vld [vmem:[%s1715 + $0xb0] sm:$0xff]
        %v1739 = vld [vmem:[%s1715 + $0xb8] sm:$0xff]
        %v1740 = vld [vmem:[%s1715 + $0xc0] sm:$0xff]
        %v1741 = vld [vmem:[%s1715 + $0xc8] sm:$0xff]
        %v1742 = vld [vmem:[%s1715 + $0xd0] sm:$0xff]
        %v1743 = vld [vmem:[%s1715 + $0xd8] sm:$0xff]
        %v1744 = vld [vmem:[%s1715 + $0xe0] sm:$0xff]
        %v1745 = vld [vmem:[%s1715 + $0xe8] sm:$0xff]
        %v1746 = vld [vmem:[%s1715 + $0xf0] sm:$0xff]
        %v1747 = vld [vmem:[%s1715 + $0xf8] sm:$0xff]
        %v1748 = vmul.f32 %v1716, %v1620
        %v1749 = vmul.f32 %v1717, %v1622
        %v1750 = vmul.f32 %v1718, %v1624
        %v1751 = vmul.f32 %v1719, %v1626
        %v1752 = vmul.f32 %v1720, %v1628
        %v1753 = vmul.f32 %v1721, %v1630
        %v1754 = vmul.f32 %v1722, %v1632
        %v1755 = vmul.f32 %v1723, %v1634
        %v1756 = vmul.f32 %v1724, %v1636
        %v1757 = vmul.f32 %v1725, %v1638
        %v1758 = vmul.f32 %v1726, %v1640
        %v1759 = vmul.f32 %v1727, %v1642
        %v1760 = vmul.f32 %v1728, %v1644
        %v1761 = vmul.f32 %v1729, %v1646
        %v1762 = vmul.f32 %v1730, %v1648
        %v1763 = vmul.f32 %v1731, %v1650
        %v1764 = vmul.f32 %v1732, %v1652
        %v1765 = vmul.f32 %v1733, %v1654
        %v1766 = vmul.f32 %v1734, %v1656
        %v1767 = vmul.f32 %v1735, %v1658
        %v1768 = vmul.f32 %v1736, %v1660
        %v1769 = vmul.f32 %v1737, %v1662
        %v1770 = vmul.f32 %v1738, %v1664
        %v1771 = vmul.f32 %v1739, %v1666
        %v1772 = vmul.f32 %v1740, %v1668
        %v1773 = vmul.f32 %v1741, %v1670
        %v1774 = vmul.f32 %v1742, %v1672
        %v1775 = vmul.f32 %v1743, %v1674
        %v1776 = vmul.f32 %v1744, %v1676
        %v1777 = vmul.f32 %v1745, %v1678
        %v1778 = vmul.f32 %v1746, %v1680
        %v1779 = vmul.f32 %v1747, %v1682
        %v1780 = vadd.f32 %v1683, %v1748
        %v1781 = vadd.f32 %v1684, %v1749
        %v1782 = vadd.f32 %v1685, %v1750
        %v1783 = vadd.f32 %v1686, %v1751
        %v1784 = vadd.f32 %v1687, %v1752
        %v1785 = vadd.f32 %v1688, %v1753
        %v1786 = vadd.f32 %v1689, %v1754
        %v1787 = vadd.f32 %v1690, %v1755
        %v1788 = vadd.f32 %v1691, %v1756
        %v1789 = vadd.f32 %v1692, %v1757
        %v1790 = vadd.f32 %v1693, %v1758
        %v1791 = vadd.f32 %v1694, %v1759
        %v1792 = vadd.f32 %v1695, %v1760
        %v1793 = vadd.f32 %v1696, %v1761
        %v1794 = vadd.f32 %v1697, %v1762
        %v1795 = vadd.f32 %v1698, %v1763
        %v1796 = vadd.f32 %v1699, %v1764
        %v1797 = vadd.f32 %v1700, %v1765
        %v1798 = vadd.f32 %v1701, %v1766
        %v1799 = vadd.f32 %v1702, %v1767
        %v1800 = vadd.f32 %v1703, %v1768
        %v1801 = vadd.f32 %v1704, %v1769
        %v1802 = vadd.f32 %v1705, %v1770
        %v1803 = vadd.f32 %v1706, %v1771
        %v1804 = vadd.f32 %v1707, %v1772
        %v1805 = vadd.f32 %v1708, %v1773
        %v1806 = vadd.f32 %v1709, %v1774
        %v1807 = vadd.f32 %v1710, %v1775
        %v1808 = vadd.f32 %v1711, %v1776
        %v1809 = vadd.f32 %v1712, %v1777
        %v1810 = vadd.f32 %v1713, %v1778
        %v1811 = vadd.f32 %v1714, %v1779
        %s1812 = scalar_lea.vmem %s240, 512 [#allocation8]
        %1813 = vst [vmem:[%s1812] sm:$0xff] %v1780
        %1814 = vst [vmem:[%s1812 + $0x8] sm:$0xff] %v1781
        %1815 = vst [vmem:[%s1812 + $0x10] sm:$0xff] %v1782
        %1816 = vst [vmem:[%s1812 + $0x18] sm:$0xff] %v1783
        %1817 = vst [vmem:[%s1812 + $0x20] sm:$0xff] %v1784
        %1818 = vst [vmem:[%s1812 + $0x28] sm:$0xff] %v1785
        %1819 = vst [vmem:[%s1812 + $0x30] sm:$0xff] %v1786
        %1820 = vst [vmem:[%s1812 + $0x38] sm:$0xff] %v1787
        %1821 = vst [vmem:[%s1812 + $0x40] sm:$0xff] %v1788
        %1822 = vst [vmem:[%s1812 + $0x48] sm:$0xff] %v1789
        %1823 = vst [vmem:[%s1812 + $0x50] sm:$0xff] %v1790
        %1824 = vst [vmem:[%s1812 + $0x58] sm:$0xff] %v1791
        %1825 = vst [vmem:[%s1812 + $0x60] sm:$0xff] %v1792
        %1826 = vst [vmem:[%s1812 + $0x68] sm:$0xff] %v1793
        %1827 = vst [vmem:[%s1812 + $0x70] sm:$0xff] %v1794
        %1828 = vst [vmem:[%s1812 + $0x78] sm:$0xff] %v1795
        %1829 = vst [vmem:[%s1812 + $0x80] sm:$0xff] %v1796
        %1830 = vst [vmem:[%s1812 + $0x88] sm:$0xff] %v1797
        %1831 = vst [vmem:[%s1812 + $0x90] sm:$0xff] %v1798
        %1832 = vst [vmem:[%s1812 + $0x98] sm:$0xff] %v1799
        %1833 = vst [vmem:[%s1812 + $0xa0] sm:$0xff] %v1800
        %1834 = vst [vmem:[%s1812 + $0xa8] sm:$0xff] %v1801
        %1835 = vst [vmem:[%s1812 + $0xb0] sm:$0xff] %v1802
        %1836 = vst [vmem:[%s1812 + $0xb8] sm:$0xff] %v1803
        %1837 = vst [vmem:[%s1812 + $0xc0] sm:$0xff] %v1804
        %1838 = vst [vmem:[%s1812 + $0xc8] sm:$0xff] %v1805
        %1839 = vst [vmem:[%s1812 + $0xd0] sm:$0xff] %v1806
        %1840 = vst [vmem:[%s1812 + $0xd8] sm:$0xff] %v1807
        %1841 = vst [vmem:[%s1812 + $0xe0] sm:$0xff] %v1808
        %1842 = vst [vmem:[%s1812 + $0xe8] sm:$0xff] %v1809
        %1843 = vst [vmem:[%s1812 + $0xf0] sm:$0xff] %v1810
        %1844 = vst [vmem:[%s1812 + $0xf8] sm:$0xff] %v1811
        %v1845 = vpack.c.bf16 %v1781, %v1780
        %v1846 = vpack.c.bf16 %v1783, %v1782
        %v1847 = vpack.c.bf16 %v1785, %v1784
        %v1848 = vpack.c.bf16 %v1787, %v1786
        %v1849 = vpack.c.bf16 %v1789, %v1788
        %v1850 = vpack.c.bf16 %v1791, %v1790
        %v1851 = vpack.c.bf16 %v1793, %v1792
        %v1852 = vpack.c.bf16 %v1795, %v1794
        %v1853 = vpack.c.bf16 %v1797, %v1796
        %v1854 = vpack.c.bf16 %v1799, %v1798
        %v1855 = vpack.c.bf16 %v1801, %v1800
        %v1856 = vpack.c.bf16 %v1803, %v1802
        %v1857 = vpack.c.bf16 %v1805, %v1804
        %v1858 = vpack.c.bf16 %v1807, %v1806
        %v1859 = vpack.c.bf16 %v1809, %v1808
        %v1860 = vpack.c.bf16 %v1811, %v1810
        %s1861 = scalar_lea.vmem [#allocation5], 256
        %v1862 = vld [vmem:[%s1861] sm:$0xf]
        %v1863 = vld [vmem:[%s1861 + $0x4] sm:$0xf]
        %v1864 = vld [vmem:[%s1861 + $0x8] sm:$0xf]
        %v1865 = vld [vmem:[%s1861 + $0xc] sm:$0xf]
        %v1866 = vld [vmem:[%s1861 + $0x10] sm:$0xf]
        %v1867 = vld [vmem:[%s1861 + $0x14] sm:$0xf]
        %v1868 = vld [vmem:[%s1861 + $0x18] sm:$0xf]
        %v1869 = vld [vmem:[%s1861 + $0x1c] sm:$0xf]
        %v1870 = vld [vmem:[%s1861 + $0x20] sm:$0xf]
        %v1871 = vld [vmem:[%s1861 + $0x24] sm:$0xf]
        %v1872 = vld [vmem:[%s1861 + $0x28] sm:$0xf]
        %v1873 = vld [vmem:[%s1861 + $0x2c] sm:$0xf]
        %v1874 = vld [vmem:[%s1861 + $0x30] sm:$0xf]
        %v1875 = vld [vmem:[%s1861 + $0x34] sm:$0xf]
        %v1876 = vld [vmem:[%s1861 + $0x38] sm:$0xf]
        %v1877 = vld [vmem:[%s1861 + $0x3c] sm:$0xf]
        %v1878 = vld [vmem:[#allocation7 + $0x4] sm:$0x1]
        %v1879 = vlaneseq
        %v1880 = vshrl.u32 %v1879, 7
        %v1881 = vsub.s32 0, %v1880
        %v1882 = vrot.slane %v1878, %v1881
        %v1899 = vunpack.c.l.b16 %v1862
        %v1900 = vunpack.c.l.b16 %v1863
        %v1901 = vunpack.c.l.b16 %v1864
        %v1902 = vunpack.c.l.b16 %v1865
        %v1903 = vunpack.c.l.b16 %v1866
        %v1904 = vunpack.c.l.b16 %v1867
        %v1905 = vunpack.c.l.b16 %v1868
        %v1906 = vunpack.c.l.b16 %v1869
        %v1907 = vunpack.c.l.b16 %v1870
        %v1908 = vunpack.c.l.b16 %v1871
        %v1909 = vunpack.c.l.b16 %v1872
        %v1910 = vunpack.c.l.b16 %v1873
        %v1911 = vunpack.c.l.b16 %v1874
        %v1912 = vunpack.c.l.b16 %v1875
        %v1913 = vunpack.c.l.b16 %v1876
        %v1914 = vunpack.c.l.b16 %v1877
        %v1915 = vpack.c.b16 %v1900, %v1899
        %v1916 = vpack.c.b16 %v1902, %v1901
        %v1917 = vpack.c.b16 %v1904, %v1903
        %v1918 = vpack.c.b16 %v1906, %v1905
        %v1919 = vpack.c.b16 %v1908, %v1907
        %v1920 = vpack.c.b16 %v1910, %v1909
        %v1921 = vpack.c.b16 %v1912, %v1911
        %v1922 = vpack.c.b16 %v1914, %v1913
        %1931 = vmatprep.subr.bf16.mxu0 0
        %1932 = vmatpush1.bf16.msra.mxu0 %v1922
        %1933 = vmatprep.subr.bf16.mxu0 0
        %1934 = vmatpush1.bf16.msra.mxu0 %v1921
        %1935 = vmatprep.subr.bf16.mxu0 0
        %1936 = vmatpush1.bf16.msra.mxu0 %v1920
        %1937 = vmatprep.subr.bf16.mxu0 0
        %1938 = vmatpush1.bf16.msra.mxu0 %v1919
        %1939 = vmatprep.subr.bf16.mxu0 0
        %1940 = vmatpush1.bf16.msra.mxu0 %v1918
        %1941 = vmatprep.subr.bf16.mxu0 0
        %1942 = vmatpush1.bf16.msra.mxu0 %v1917
        %1943 = vmatprep.subr.bf16.mxu0 0
        %1944 = vmatpush1.bf16.msra.mxu0 %v1916
        %1945 = vmatprep.subr.bf16.mxu0 0
        %1946 = vmatpush1.bf16.msra.mxu0 %v1915
        %1947 = vmatprep.subr.bf16.mxu0 0
        %1948 = vmatpush2.bf16.msra.mxu0 0
        %1949 = vmatprep.subr.bf16.mxu0 0
        %1950 = vmatpush2.bf16.msra.mxu0 0
        %1951 = vmatprep.subr.bf16.mxu0 0
        %1952 = vmatpush2.bf16.msra.mxu0 0
        %1953 = vmatprep.subr.bf16.mxu0 0
        %1954 = vmatpush2.bf16.msra.mxu0 0
        %1955 = vmatprep.subr.bf16.mxu0 0
        %1956 = vmatpush2.bf16.msra.mxu0 0
        %1957 = vmatprep.subr.bf16.mxu0 0
        %1958 = vmatpush2.bf16.msra.mxu0 0
        %1959 = vmatprep.subr.bf16.mxu0 0
        %1960 = vmatpush2.bf16.msra.mxu0 0
        %1961 = vmatprep.subr.bf16.mxu0 0
        %1962 = vmatpush2.bf16.msra.mxu0 0
        %1963 = vmatprep.mubr.bf16.mxu0 0
        %1964 = vmatmul.mubr.bf16.gmra.mxu0 %v1845
        %v1965 = vpop.f32.mrf.mxu0
        %v1966 = vadd.f32 %v1882, %v1965
        %v1967 = vpop.f32.mrf.mxu0
        %v1968 = vpop.f32.mrf.mxu0
        %v1969 = vadd.f32 %v1882, %v1968
        %v1970 = vpop.f32.mrf.mxu0
        %1971 = vmatprep.mubr.bf16.mxu0 0
        %1972 = vmatmul.mubr.bf16.gmra.mxu0 %v1846
        %v1973 = vpop.f32.mrf.mxu0
        %v1974 = vadd.f32 %v1882, %v1973
        %v1975 = vpop.f32.mrf.mxu0
        %v1976 = vpop.f32.mrf.mxu0
        %v1977 = vadd.f32 %v1882, %v1976
        %v1978 = vpop.f32.mrf.mxu0
        %1979 = vmatprep.mubr.bf16.mxu0 0
        %1980 = vmatmul.mubr.bf16.gmra.mxu0 %v1847
        %v1981 = vpop.f32.mrf.mxu0
        %v1982 = vadd.f32 %v1882, %v1981
        %v1983 = vpop.f32.mrf.mxu0
        %v1984 = vpop.f32.mrf.mxu0
        %v1985 = vadd.f32 %v1882, %v1984
        %v1986 = vpop.f32.mrf.mxu0
        %1987 = vmatprep.mubr.bf16.mxu0 0
        %1988 = vmatmul.mubr.bf16.gmra.mxu0 %v1848
        %v1989 = vpop.f32.mrf.mxu0
        %v1990 = vadd.f32 %v1882, %v1989
        %v1991 = vpop.f32.mrf.mxu0
        %v1992 = vpop.f32.mrf.mxu0
        %v1993 = vadd.f32 %v1882, %v1992
        %v1994 = vpop.f32.mrf.mxu0
        %1995 = vmatprep.mubr.bf16.mxu0 0
        %1996 = vmatmul.mubr.bf16.gmra.mxu0 %v1849
        %v1997 = vpop.f32.mrf.mxu0
        %v1998 = vadd.f32 %v1882, %v1997
        %v1999 = vpop.f32.mrf.mxu0
        %v2000 = vpop.f32.mrf.mxu0
        %v2001 = vadd.f32 %v1882, %v2000
        %v2002 = vpop.f32.mrf.mxu0
        %2003 = vmatprep.mubr.bf16.mxu0 0
        %2004 = vmatmul.mubr.bf16.gmra.mxu0 %v1850
        %v2005 = vpop.f32.mrf.mxu0
        %v2006 = vadd.f32 %v1882, %v2005
        %v2007 = vpop.f32.mrf.mxu0
        %v2008 = vpop.f32.mrf.mxu0
        %v2009 = vadd.f32 %v1882, %v2008
        %v2010 = vpop.f32.mrf.mxu0
        %2011 = vmatprep.mubr.bf16.mxu0 0
        %2012 = vmatmul.mubr.bf16.gmra.mxu0 %v1851
        %v2013 = vpop.f32.mrf.mxu0
        %v2014 = vadd.f32 %v1882, %v2013
        %v2015 = vpop.f32.mrf.mxu0
        %v2016 = vpop.f32.mrf.mxu0
        %v2017 = vadd.f32 %v1882, %v2016
        %v2018 = vpop.f32.mrf.mxu0
        %2019 = vmatprep.mubr.bf16.mxu0 0
        %2020 = vmatmul.mubr.bf16.gmra.mxu0 %v1852
        %v2021 = vpop.f32.mrf.mxu0
        %v2022 = vadd.f32 %v1882, %v2021
        %v2023 = vpop.f32.mrf.mxu0
        %v2024 = vpop.f32.mrf.mxu0
        %v2025 = vadd.f32 %v1882, %v2024
        %v2026 = vpop.f32.mrf.mxu0
        %2027 = vmatprep.mubr.bf16.mxu0 0
        %2028 = vmatmul.mubr.bf16.gmra.mxu0 %v1853
        %v2029 = vpop.f32.mrf.mxu0
        %v2030 = vadd.f32 %v1882, %v2029
        %v2031 = vpop.f32.mrf.mxu0
        %v2032 = vpop.f32.mrf.mxu0
        %v2033 = vadd.f32 %v1882, %v2032
        %v2034 = vpop.f32.mrf.mxu0
        %2035 = vmatprep.mubr.bf16.mxu0 0
        %2036 = vmatmul.mubr.bf16.gmra.mxu0 %v1854
        %v2037 = vpop.f32.mrf.mxu0
        %v2038 = vadd.f32 %v1882, %v2037
        %v2039 = vpop.f32.mrf.mxu0
        %v2040 = vpop.f32.mrf.mxu0
        %v2041 = vadd.f32 %v1882, %v2040
        %v2042 = vpop.f32.mrf.mxu0
        %2043 = vmatprep.mubr.bf16.mxu0 0
        %2044 = vmatmul.mubr.bf16.gmra.mxu0 %v1855
        %v2045 = vpop.f32.mrf.mxu0
        %v2046 = vadd.f32 %v1882, %v2045
        %v2047 = vpop.f32.mrf.mxu0
        %v2048 = vpop.f32.mrf.mxu0
        %v2049 = vadd.f32 %v1882, %v2048
        %v2050 = vpop.f32.mrf.mxu0
        %2051 = vmatprep.mubr.bf16.mxu0 0
        %2052 = vmatmul.mubr.bf16.gmra.mxu0 %v1856
        %v2053 = vpop.f32.mrf.mxu0
        %v2054 = vadd.f32 %v1882, %v2053
        %v2055 = vpop.f32.mrf.mxu0
        %v2056 = vpop.f32.mrf.mxu0
        %v2057 = vadd.f32 %v1882, %v2056
        %v2058 = vpop.f32.mrf.mxu0
        %2059 = vmatprep.mubr.bf16.mxu0 0
        %2060 = vmatmul.mubr.bf16.gmra.mxu0 %v1857
        %v2061 = vpop.f32.mrf.mxu0
        %v2062 = vadd.f32 %v1882, %v2061
        %v2063 = vpop.f32.mrf.mxu0
        %v2064 = vpop.f32.mrf.mxu0
        %v2065 = vadd.f32 %v1882, %v2064
        %v2066 = vpop.f32.mrf.mxu0
        %2067 = vmatprep.mubr.bf16.mxu0 0
        %2068 = vmatmul.mubr.bf16.gmra.mxu0 %v1858
        %v2069 = vpop.f32.mrf.mxu0
        %v2070 = vadd.f32 %v1882, %v2069
        %v2071 = vpop.f32.mrf.mxu0
        %v2072 = vpop.f32.mrf.mxu0
        %v2073 = vadd.f32 %v1882, %v2072
        %v2074 = vpop.f32.mrf.mxu0
        %2075 = vmatprep.mubr.bf16.mxu0 0
        %2076 = vmatmul.mubr.bf16.gmra.mxu0 %v1859
        %v2077 = vpop.f32.mrf.mxu0
        %v2078 = vadd.f32 %v1882, %v2077
        %v2079 = vpop.f32.mrf.mxu0
        %v2080 = vpop.f32.mrf.mxu0
        %v2081 = vadd.f32 %v1882, %v2080
        %v2082 = vpop.f32.mrf.mxu0
        %2083 = vmatprep.mubr.bf16.mxu0 0
        %2084 = vmatmul.mubr.bf16.gmra.mxu0 %v1860
        %v2085 = vpop.f32.mrf.mxu0
        %v2086 = vadd.f32 %v1882, %v2085
        %v2087 = vpop.f32.mrf.mxu0
        %v2088 = vpop.f32.mrf.mxu0
        %v2089 = vadd.f32 %v1882, %v2088
        %v2090 = vpop.f32.mrf.mxu0
        %2091 = vdwg.mxu0
        %v2092 = vmul.f32 %v1966, 0.01
        %v2093 = vmul.f32 %v1969, 0.01
        %v2094 = vmul.f32 %v1974, 0.01
        %v2095 = vmul.f32 %v1977, 0.01
        %v2096 = vmul.f32 %v1982, 0.01
        %v2097 = vmul.f32 %v1985, 0.01
        %v2098 = vmul.f32 %v1990, 0.01
        %v2099 = vmul.f32 %v1993, 0.01
        %v2100 = vmul.f32 %v1998, 0.01
        %v2101 = vmul.f32 %v2001, 0.01
        %v2102 = vmul.f32 %v2006, 0.01
        %v2103 = vmul.f32 %v2009, 0.01
        %v2104 = vmul.f32 %v2014, 0.01
        %v2105 = vmul.f32 %v2017, 0.01
        %v2106 = vmul.f32 %v2022, 0.01
        %v2107 = vmul.f32 %v2025, 0.01
        %v2108 = vmul.f32 %v2030, 0.01
        %v2109 = vmul.f32 %v2033, 0.01
        %v2110 = vmul.f32 %v2038, 0.01
        %v2111 = vmul.f32 %v2041, 0.01
        %v2112 = vmul.f32 %v2046, 0.01
        %v2113 = vmul.f32 %v2049, 0.01
        %v2114 = vmul.f32 %v2054, 0.01
        %v2115 = vmul.f32 %v2057, 0.01
        %v2116 = vmul.f32 %v2062, 0.01
        %v2117 = vmul.f32 %v2065, 0.01
        %v2118 = vmul.f32 %v2070, 0.01
        %v2119 = vmul.f32 %v2073, 0.01
        %v2120 = vmul.f32 %v2078, 0.01
        %v2121 = vmul.f32 %v2081, 0.01
        %v2122 = vmul.f32 %v2086, 0.01
        %v2123 = vmul.f32 %v2089, 0.01
        %v2124 = vmax.f32 %v1966, %v2092
        %v2125 = vmax.f32 %v1969, %v2093
        %v2126 = vmax.f32 %v1974, %v2094
        %v2127 = vmax.f32 %v1977, %v2095
        %v2128 = vmax.f32 %v1982, %v2096
        %v2129 = vmax.f32 %v1985, %v2097
        %v2130 = vmax.f32 %v1990, %v2098
        %v2131 = vmax.f32 %v1993, %v2099
        %v2132 = vmax.f32 %v1998, %v2100
        %v2133 = vmax.f32 %v2001, %v2101
        %v2134 = vmax.f32 %v2006, %v2102
        %v2135 = vmax.f32 %v2009, %v2103
        %v2136 = vmax.f32 %v2014, %v2104
        %v2137 = vmax.f32 %v2017, %v2105
        %v2138 = vmax.f32 %v2022, %v2106
        %v2139 = vmax.f32 %v2025, %v2107
        %v2140 = vmax.f32 %v2030, %v2108
        %v2141 = vmax.f32 %v2033, %v2109
        %v2142 = vmax.f32 %v2038, %v2110
        %v2143 = vmax.f32 %v2041, %v2111
        %v2144 = vmax.f32 %v2046, %v2112
        %v2145 = vmax.f32 %v2049, %v2113
        %v2146 = vmax.f32 %v2054, %v2114
        %v2147 = vmax.f32 %v2057, %v2115
        %v2148 = vmax.f32 %v2062, %v2116
        %v2149 = vmax.f32 %v2065, %v2117
        %v2150 = vmax.f32 %v2070, %v2118
        %v2151 = vmax.f32 %v2073, %v2119
        %v2152 = vmax.f32 %v2078, %v2120
        %v2153 = vmax.f32 %v2081, %v2121
        %v2154 = vmax.f32 %v2086, %v2122
        %v2155 = vmax.f32 %v2089, %v2123
        %v2156 = vpack.c.bf16 %v2125, %v2124
        %v2157 = vpack.c.bf16 %v2127, %v2126
        %v2158 = vpack.c.bf16 %v2129, %v2128
        %v2159 = vpack.c.bf16 %v2131, %v2130
        %v2160 = vpack.c.bf16 %v2133, %v2132
        %v2161 = vpack.c.bf16 %v2135, %v2134
        %v2162 = vpack.c.bf16 %v2137, %v2136
        %v2163 = vpack.c.bf16 %v2139, %v2138
        %v2164 = vpack.c.bf16 %v2141, %v2140
        %v2165 = vpack.c.bf16 %v2143, %v2142
        %v2166 = vpack.c.bf16 %v2145, %v2144
        %v2167 = vpack.c.bf16 %v2147, %v2146
        %v2168 = vpack.c.bf16 %v2149, %v2148
        %v2169 = vpack.c.bf16 %v2151, %v2150
        %v2170 = vpack.c.bf16 %v2153, %v2152
        %v2171 = vpack.c.bf16 %v2155, %v2154
        %s2172 = scalar_lea.vmem [#allocation5], 320
        %v2173 = vld [vmem:[%s2172] sm:$0xf]
        %v2174 = vld [vmem:[%s2172 + $0x4] sm:$0xf]
        %v2175 = vld [vmem:[%s2172 + $0x8] sm:$0xf]
        %v2176 = vld [vmem:[%s2172 + $0xc] sm:$0xf]
        %v2177 = vld [vmem:[%s2172 + $0x10] sm:$0xf]
        %v2178 = vld [vmem:[%s2172 + $0x14] sm:$0xf]
        %v2179 = vld [vmem:[%s2172 + $0x18] sm:$0xf]
        %v2180 = vld [vmem:[%s2172 + $0x1c] sm:$0xf]
        %v2181 = vld [vmem:[%s2172 + $0x20] sm:$0xf]
        %v2182 = vld [vmem:[%s2172 + $0x24] sm:$0xf]
        %v2183 = vld [vmem:[%s2172 + $0x28] sm:$0xf]
        %v2184 = vld [vmem:[%s2172 + $0x2c] sm:$0xf]
        %v2185 = vld [vmem:[%s2172 + $0x30] sm:$0xf]
        %v2186 = vld [vmem:[%s2172 + $0x34] sm:$0xf]
        %v2187 = vld [vmem:[%s2172 + $0x38] sm:$0xf]
        %v2188 = vld [vmem:[%s2172 + $0x3c] sm:$0xf]
        %v2189 = vld [vmem:[#allocation7 + $0x5] sm:$0x1]
        %v2190 = vlaneseq
        %v2191 = vshrl.u32 %v2190, 7
        %v2192 = vsub.s32 0, %v2191
        %v2193 = vrot.slane %v2189, %v2192
        %v2210 = vunpack.c.l.b16 %v2173
        %v2211 = vunpack.c.l.b16 %v2174
        %v2212 = vunpack.c.l.b16 %v2175
        %v2213 = vunpack.c.l.b16 %v2176
        %v2214 = vunpack.c.l.b16 %v2177
        %v2215 = vunpack.c.l.b16 %v2178
        %v2216 = vunpack.c.l.b16 %v2179
        %v2217 = vunpack.c.l.b16 %v2180
        %v2218 = vunpack.c.l.b16 %v2181
        %v2219 = vunpack.c.l.b16 %v2182
        %v2220 = vunpack.c.l.b16 %v2183
        %v2221 = vunpack.c.l.b16 %v2184
        %v2222 = vunpack.c.l.b16 %v2185
        %v2223 = vunpack.c.l.b16 %v2186
        %v2224 = vunpack.c.l.b16 %v2187
        %v2225 = vunpack.c.l.b16 %v2188
        %v2226 = vpack.c.b16 %v2211, %v2210
        %v2227 = vpack.c.b16 %v2213, %v2212
        %v2228 = vpack.c.b16 %v2215, %v2214
        %v2229 = vpack.c.b16 %v2217, %v2216
        %v2230 = vpack.c.b16 %v2219, %v2218
        %v2231 = vpack.c.b16 %v2221, %v2220
        %v2232 = vpack.c.b16 %v2223, %v2222
        %v2233 = vpack.c.b16 %v2225, %v2224
        %2242 = vmatprep.subr.bf16.mxu0 0
        %2243 = vmatpush1.bf16.msra.mxu0 %v2233
        %2244 = vmatprep.subr.bf16.mxu0 0
        %2245 = vmatpush1.bf16.msra.mxu0 %v2232
        %2246 = vmatprep.subr.bf16.mxu0 0
        %2247 = vmatpush1.bf16.msra.mxu0 %v2231
        %2248 = vmatprep.subr.bf16.mxu0 0
        %2249 = vmatpush1.bf16.msra.mxu0 %v2230
        %2250 = vmatprep.subr.bf16.mxu0 0
        %2251 = vmatpush1.bf16.msra.mxu0 %v2229
        %2252 = vmatprep.subr.bf16.mxu0 0
        %2253 = vmatpush1.bf16.msra.mxu0 %v2228
        %2254 = vmatprep.subr.bf16.mxu0 0
        %2255 = vmatpush1.bf16.msra.mxu0 %v2227
        %2256 = vmatprep.subr.bf16.mxu0 0
        %2257 = vmatpush1.bf16.msra.mxu0 %v2226
        %2258 = vmatprep.subr.bf16.mxu0 0
        %2259 = vmatpush2.bf16.msra.mxu0 0
        %2260 = vmatprep.subr.bf16.mxu0 0
        %2261 = vmatpush2.bf16.msra.mxu0 0
        %2262 = vmatprep.subr.bf16.mxu0 0
        %2263 = vmatpush2.bf16.msra.mxu0 0
        %2264 = vmatprep.subr.bf16.mxu0 0
        %2265 = vmatpush2.bf16.msra.mxu0 0
        %2266 = vmatprep.subr.bf16.mxu0 0
        %2267 = vmatpush2.bf16.msra.mxu0 0
        %2268 = vmatprep.subr.bf16.mxu0 0
        %2269 = vmatpush2.bf16.msra.mxu0 0
        %2270 = vmatprep.subr.bf16.mxu0 0
        %2271 = vmatpush2.bf16.msra.mxu0 0
        %2272 = vmatprep.subr.bf16.mxu0 0
        %2273 = vmatpush2.bf16.msra.mxu0 0
        %2274 = vmatprep.mubr.bf16.mxu0 0
        %2275 = vmatmul.mubr.bf16.gmra.mxu0 %v2156
        %v2276 = vpop.f32.mrf.mxu0
        %v2277 = vadd.f32 %v2193, %v2276
        %v2278 = vpop.f32.mrf.mxu0
        %v2279 = vpop.f32.mrf.mxu0
        %v2280 = vadd.f32 %v2193, %v2279
        %v2281 = vpop.f32.mrf.mxu0
        %2282 = vmatprep.mubr.bf16.mxu0 0
        %2283 = vmatmul.mubr.bf16.gmra.mxu0 %v2157
        %v2284 = vpop.f32.mrf.mxu0
        %v2285 = vadd.f32 %v2193, %v2284
        %v2286 = vpop.f32.mrf.mxu0
        %v2287 = vpop.f32.mrf.mxu0
        %v2288 = vadd.f32 %v2193, %v2287
        %v2289 = vpop.f32.mrf.mxu0
        %2290 = vmatprep.mubr.bf16.mxu0 0
        %2291 = vmatmul.mubr.bf16.gmra.mxu0 %v2158
        %v2292 = vpop.f32.mrf.mxu0
        %v2293 = vadd.f32 %v2193, %v2292
        %v2294 = vpop.f32.mrf.mxu0
        %v2295 = vpop.f32.mrf.mxu0
        %v2296 = vadd.f32 %v2193, %v2295
        %v2297 = vpop.f32.mrf.mxu0
        %2298 = vmatprep.mubr.bf16.mxu0 0
        %2299 = vmatmul.mubr.bf16.gmra.mxu0 %v2159
        %v2300 = vpop.f32.mrf.mxu0
        %v2301 = vadd.f32 %v2193, %v2300
        %v2302 = vpop.f32.mrf.mxu0
        %v2303 = vpop.f32.mrf.mxu0
        %v2304 = vadd.f32 %v2193, %v2303
        %v2305 = vpop.f32.mrf.mxu0
        %2306 = vmatprep.mubr.bf16.mxu0 0
        %2307 = vmatmul.mubr.bf16.gmra.mxu0 %v2160
        %v2308 = vpop.f32.mrf.mxu0
        %v2309 = vadd.f32 %v2193, %v2308
        %v2310 = vpop.f32.mrf.mxu0
        %v2311 = vpop.f32.mrf.mxu0
        %v2312 = vadd.f32 %v2193, %v2311
        %v2313 = vpop.f32.mrf.mxu0
        %2314 = vmatprep.mubr.bf16.mxu0 0
        %2315 = vmatmul.mubr.bf16.gmra.mxu0 %v2161
        %v2316 = vpop.f32.mrf.mxu0
        %v2317 = vadd.f32 %v2193, %v2316
        %v2318 = vpop.f32.mrf.mxu0
        %v2319 = vpop.f32.mrf.mxu0
        %v2320 = vadd.f32 %v2193, %v2319
        %v2321 = vpop.f32.mrf.mxu0
        %2322 = vmatprep.mubr.bf16.mxu0 0
        %2323 = vmatmul.mubr.bf16.gmra.mxu0 %v2162
        %v2324 = vpop.f32.mrf.mxu0
        %v2325 = vadd.f32 %v2193, %v2324
        %v2326 = vpop.f32.mrf.mxu0
        %v2327 = vpop.f32.mrf.mxu0
        %v2328 = vadd.f32 %v2193, %v2327
        %v2329 = vpop.f32.mrf.mxu0
        %2330 = vmatprep.mubr.bf16.mxu0 0
        %2331 = vmatmul.mubr.bf16.gmra.mxu0 %v2163
        %v2332 = vpop.f32.mrf.mxu0
        %v2333 = vadd.f32 %v2193, %v2332
        %v2334 = vpop.f32.mrf.mxu0
        %v2335 = vpop.f32.mrf.mxu0
        %v2336 = vadd.f32 %v2193, %v2335
        %v2337 = vpop.f32.mrf.mxu0
        %2338 = vmatprep.mubr.bf16.mxu0 0
        %2339 = vmatmul.mubr.bf16.gmra.mxu0 %v2164
        %v2340 = vpop.f32.mrf.mxu0
        %v2341 = vadd.f32 %v2193, %v2340
        %v2342 = vpop.f32.mrf.mxu0
        %v2343 = vpop.f32.mrf.mxu0
        %v2344 = vadd.f32 %v2193, %v2343
        %v2345 = vpop.f32.mrf.mxu0
        %2346 = vmatprep.mubr.bf16.mxu0 0
        %2347 = vmatmul.mubr.bf16.gmra.mxu0 %v2165
        %v2348 = vpop.f32.mrf.mxu0
        %v2349 = vadd.f32 %v2193, %v2348
        %v2350 = vpop.f32.mrf.mxu0
        %v2351 = vpop.f32.mrf.mxu0
        %v2352 = vadd.f32 %v2193, %v2351
        %v2353 = vpop.f32.mrf.mxu0
        %2354 = vmatprep.mubr.bf16.mxu0 0
        %2355 = vmatmul.mubr.bf16.gmra.mxu0 %v2166
        %v2356 = vpop.f32.mrf.mxu0
        %v2357 = vadd.f32 %v2193, %v2356
        %v2358 = vpop.f32.mrf.mxu0
        %v2359 = vpop.f32.mrf.mxu0
        %v2360 = vadd.f32 %v2193, %v2359
        %v2361 = vpop.f32.mrf.mxu0
        %2362 = vmatprep.mubr.bf16.mxu0 0
        %2363 = vmatmul.mubr.bf16.gmra.mxu0 %v2167
        %v2364 = vpop.f32.mrf.mxu0
        %v2365 = vadd.f32 %v2193, %v2364
        %v2366 = vpop.f32.mrf.mxu0
        %v2367 = vpop.f32.mrf.mxu0
        %v2368 = vadd.f32 %v2193, %v2367
        %v2369 = vpop.f32.mrf.mxu0
        %2370 = vmatprep.mubr.bf16.mxu0 0
        %2371 = vmatmul.mubr.bf16.gmra.mxu0 %v2168
        %v2372 = vpop.f32.mrf.mxu0
        %v2373 = vadd.f32 %v2193, %v2372
        %v2374 = vpop.f32.mrf.mxu0
        %v2375 = vpop.f32.mrf.mxu0
        %v2376 = vadd.f32 %v2193, %v2375
        %v2377 = vpop.f32.mrf.mxu0
        %2378 = vmatprep.mubr.bf16.mxu0 0
        %2379 = vmatmul.mubr.bf16.gmra.mxu0 %v2169
        %v2380 = vpop.f32.mrf.mxu0
        %v2381 = vadd.f32 %v2193, %v2380
        %v2382 = vpop.f32.mrf.mxu0
        %v2383 = vpop.f32.mrf.mxu0
        %v2384 = vadd.f32 %v2193, %v2383
        %v2385 = vpop.f32.mrf.mxu0
        %2386 = vmatprep.mubr.bf16.mxu0 0
        %2387 = vmatmul.mubr.bf16.gmra.mxu0 %v2170
        %v2388 = vpop.f32.mrf.mxu0
        %v2389 = vadd.f32 %v2193, %v2388
        %v2390 = vpop.f32.mrf.mxu0
        %v2391 = vpop.f32.mrf.mxu0
        %v2392 = vadd.f32 %v2193, %v2391
        %v2393 = vpop.f32.mrf.mxu0
        %2394 = vmatprep.mubr.bf16.mxu0 0
        %2395 = vmatmul.mubr.bf16.gmra.mxu0 %v2171
        %v2396 = vpop.f32.mrf.mxu0
        %v2397 = vadd.f32 %v2193, %v2396
        %v2398 = vpop.f32.mrf.mxu0
        %v2399 = vpop.f32.mrf.mxu0
        %v2400 = vadd.f32 %v2193, %v2399
        %v2401 = vpop.f32.mrf.mxu0
        %2402 = vdwg.mxu0
        %v2403 = vmul.f32 %v2277, 0.01
        %v2404 = vmul.f32 %v2280, 0.01
        %v2405 = vmul.f32 %v2285, 0.01
        %v2406 = vmul.f32 %v2288, 0.01
        %v2407 = vmul.f32 %v2293, 0.01
        %v2408 = vmul.f32 %v2296, 0.01
        %v2409 = vmul.f32 %v2301, 0.01
        %v2410 = vmul.f32 %v2304, 0.01
        %v2411 = vmul.f32 %v2309, 0.01
        %v2412 = vmul.f32 %v2312, 0.01
        %v2413 = vmul.f32 %v2317, 0.01
        %v2414 = vmul.f32 %v2320, 0.01
        %v2415 = vmul.f32 %v2325, 0.01
        %v2416 = vmul.f32 %v2328, 0.01
        %v2417 = vmul.f32 %v2333, 0.01
        %v2418 = vmul.f32 %v2336, 0.01
        %v2419 = vmul.f32 %v2341, 0.01
        %v2420 = vmul.f32 %v2344, 0.01
        %v2421 = vmul.f32 %v2349, 0.01
        %v2422 = vmul.f32 %v2352, 0.01
        %v2423 = vmul.f32 %v2357, 0.01
        %v2424 = vmul.f32 %v2360, 0.01
        %v2425 = vmul.f32 %v2365, 0.01
        %v2426 = vmul.f32 %v2368, 0.01
        %v2427 = vmul.f32 %v2373, 0.01
        %v2428 = vmul.f32 %v2376, 0.01
        %v2429 = vmul.f32 %v2381, 0.01
        %v2430 = vmul.f32 %v2384, 0.01
        %v2431 = vmul.f32 %v2389, 0.01
        %v2432 = vmul.f32 %v2392, 0.01
        %v2433 = vmul.f32 %v2397, 0.01
        %v2434 = vmul.f32 %v2400, 0.01
        %v2435 = vmax.f32 %v2277, %v2403
        %v2436 = vmax.f32 %v2280, %v2404
        %v2437 = vmax.f32 %v2285, %v2405
        %v2438 = vmax.f32 %v2288, %v2406
        %v2439 = vmax.f32 %v2293, %v2407
        %v2440 = vmax.f32 %v2296, %v2408
        %v2441 = vmax.f32 %v2301, %v2409
        %v2442 = vmax.f32 %v2304, %v2410
        %v2443 = vmax.f32 %v2309, %v2411
        %v2444 = vmax.f32 %v2312, %v2412
        %v2445 = vmax.f32 %v2317, %v2413
        %v2446 = vmax.f32 %v2320, %v2414
        %v2447 = vmax.f32 %v2325, %v2415
        %v2448 = vmax.f32 %v2328, %v2416
        %v2449 = vmax.f32 %v2333, %v2417
        %v2450 = vmax.f32 %v2336, %v2418
        %v2451 = vmax.f32 %v2341, %v2419
        %v2452 = vmax.f32 %v2344, %v2420
        %v2453 = vmax.f32 %v2349, %v2421
        %v2454 = vmax.f32 %v2352, %v2422
        %v2455 = vmax.f32 %v2357, %v2423
        %v2456 = vmax.f32 %v2360, %v2424
        %v2457 = vmax.f32 %v2365, %v2425
        %v2458 = vmax.f32 %v2368, %v2426
        %v2459 = vmax.f32 %v2373, %v2427
        %v2460 = vmax.f32 %v2376, %v2428
        %v2461 = vmax.f32 %v2381, %v2429
        %v2462 = vmax.f32 %v2384, %v2430
        %v2463 = vmax.f32 %v2389, %v2431
        %v2464 = vmax.f32 %v2392, %v2432
        %v2465 = vmax.f32 %v2397, %v2433
        %v2466 = vmax.f32 %v2400, %v2434
        %v2467 = vpack.c.bf16 %v2436, %v2435
        %v2468 = vpack.c.bf16 %v2438, %v2437
        %v2469 = vpack.c.bf16 %v2440, %v2439
        %v2470 = vpack.c.bf16 %v2442, %v2441
        %v2471 = vpack.c.bf16 %v2444, %v2443
        %v2472 = vpack.c.bf16 %v2446, %v2445
        %v2473 = vpack.c.bf16 %v2448, %v2447
        %v2474 = vpack.c.bf16 %v2450, %v2449
        %v2475 = vpack.c.bf16 %v2452, %v2451
        %v2476 = vpack.c.bf16 %v2454, %v2453
        %v2477 = vpack.c.bf16 %v2456, %v2455
        %v2478 = vpack.c.bf16 %v2458, %v2457
        %v2479 = vpack.c.bf16 %v2460, %v2459
        %v2480 = vpack.c.bf16 %v2462, %v2461
        %v2481 = vpack.c.bf16 %v2464, %v2463
        %v2482 = vpack.c.bf16 %v2466, %v2465
        %s2483 = scalar_lea.vmem [#allocation5], 384
        %v2484 = vld [vmem:[%s2483] sm:$0xf]
        %v2485 = vld [vmem:[%s2483 + $0x4] sm:$0xf]
        %v2486 = vld [vmem:[%s2483 + $0x8] sm:$0xf]
        %v2487 = vld [vmem:[%s2483 + $0xc] sm:$0xf]
        %v2488 = vld [vmem:[%s2483 + $0x10] sm:$0xf]
        %v2489 = vld [vmem:[%s2483 + $0x14] sm:$0xf]
        %v2490 = vld [vmem:[%s2483 + $0x18] sm:$0xf]
        %v2491 = vld [vmem:[%s2483 + $0x1c] sm:$0xf]
        %v2492 = vld [vmem:[%s2483 + $0x20] sm:$0xf]
        %v2493 = vld [vmem:[%s2483 + $0x24] sm:$0xf]
        %v2494 = vld [vmem:[%s2483 + $0x28] sm:$0xf]
        %v2495 = vld [vmem:[%s2483 + $0x2c] sm:$0xf]
        %v2496 = vld [vmem:[%s2483 + $0x30] sm:$0xf]
        %v2497 = vld [vmem:[%s2483 + $0x34] sm:$0xf]
        %v2498 = vld [vmem:[%s2483 + $0x38] sm:$0xf]
        %v2499 = vld [vmem:[%s2483 + $0x3c] sm:$0xf]
        %v2500 = vld [vmem:[#allocation7 + $0x6] sm:$0x1]
        %v2501 = vlaneseq
        %v2502 = vshrl.u32 %v2501, 7
        %v2503 = vsub.s32 0, %v2502
        %v2504 = vrot.slane %v2500, %v2503
        %v2521 = vunpack.c.l.b16 %v2484
        %v2522 = vunpack.c.l.b16 %v2485
        %v2523 = vunpack.c.l.b16 %v2486
        %v2524 = vunpack.c.l.b16 %v2487
        %v2525 = vunpack.c.l.b16 %v2488
        %v2526 = vunpack.c.l.b16 %v2489
        %v2527 = vunpack.c.l.b16 %v2490
        %v2528 = vunpack.c.l.b16 %v2491
        %v2529 = vunpack.c.l.b16 %v2492
        %v2530 = vunpack.c.l.b16 %v2493
        %v2531 = vunpack.c.l.b16 %v2494
        %v2532 = vunpack.c.l.b16 %v2495
        %v2533 = vunpack.c.l.b16 %v2496
        %v2534 = vunpack.c.l.b16 %v2497
        %v2535 = vunpack.c.l.b16 %v2498
        %v2536 = vunpack.c.l.b16 %v2499
        %v2537 = vpack.c.b16 %v2522, %v2521
        %v2538 = vpack.c.b16 %v2524, %v2523
        %v2539 = vpack.c.b16 %v2526, %v2525
        %v2540 = vpack.c.b16 %v2528, %v2527
        %v2541 = vpack.c.b16 %v2530, %v2529
        %v2542 = vpack.c.b16 %v2532, %v2531
        %v2543 = vpack.c.b16 %v2534, %v2533
        %v2544 = vpack.c.b16 %v2536, %v2535
        %2553 = vmatprep.subr.bf16.mxu0 0
        %2554 = vmatpush1.bf16.msra.mxu0 %v2544
        %2555 = vmatprep.subr.bf16.mxu0 0
        %2556 = vmatpush1.bf16.msra.mxu0 %v2543
        %2557 = vmatprep.subr.bf16.mxu0 0
        %2558 = vmatpush1.bf16.msra.mxu0 %v2542
        %2559 = vmatprep.subr.bf16.mxu0 0
        %2560 = vmatpush1.bf16.msra.mxu0 %v2541
        %2561 = vmatprep.subr.bf16.mxu0 0
        %2562 = vmatpush1.bf16.msra.mxu0 %v2540
        %2563 = vmatprep.subr.bf16.mxu0 0
        %2564 = vmatpush1.bf16.msra.mxu0 %v2539
        %2565 = vmatprep.subr.bf16.mxu0 0
        %2566 = vmatpush1.bf16.msra.mxu0 %v2538
        %2567 = vmatprep.subr.bf16.mxu0 0
        %2568 = vmatpush1.bf16.msra.mxu0 %v2537
        %2569 = vmatprep.subr.bf16.mxu0 0
        %2570 = vmatpush2.bf16.msra.mxu0 0
        %2571 = vmatprep.subr.bf16.mxu0 0
        %2572 = vmatpush2.bf16.msra.mxu0 0
        %2573 = vmatprep.subr.bf16.mxu0 0
        %2574 = vmatpush2.bf16.msra.mxu0 0
        %2575 = vmatprep.subr.bf16.mxu0 0
        %2576 = vmatpush2.bf16.msra.mxu0 0
        %2577 = vmatprep.subr.bf16.mxu0 0
        %2578 = vmatpush2.bf16.msra.mxu0 0
        %2579 = vmatprep.subr.bf16.mxu0 0
        %2580 = vmatpush2.bf16.msra.mxu0 0
        %2581 = vmatprep.subr.bf16.mxu0 0
        %2582 = vmatpush2.bf16.msra.mxu0 0
        %2583 = vmatprep.subr.bf16.mxu0 0
        %2584 = vmatpush2.bf16.msra.mxu0 0
        %2585 = vmatprep.mubr.bf16.mxu0 0
        %2586 = vmatmul.mubr.bf16.gmra.mxu0 %v2467
        %v2587 = vpop.f32.mrf.mxu0
        %v2588 = vadd.f32 %v2504, %v2587
        %v2589 = vpop.f32.mrf.mxu0
        %v2590 = vpop.f32.mrf.mxu0
        %v2591 = vadd.f32 %v2504, %v2590
        %v2592 = vpop.f32.mrf.mxu0
        %2593 = vmatprep.mubr.bf16.mxu0 0
        %2594 = vmatmul.mubr.bf16.gmra.mxu0 %v2468
        %v2595 = vpop.f32.mrf.mxu0
        %v2596 = vadd.f32 %v2504, %v2595
        %v2597 = vpop.f32.mrf.mxu0
        %v2598 = vpop.f32.mrf.mxu0
        %v2599 = vadd.f32 %v2504, %v2598
        %v2600 = vpop.f32.mrf.mxu0
        %2601 = vmatprep.mubr.bf16.mxu0 0
        %2602 = vmatmul.mubr.bf16.gmra.mxu0 %v2469
        %v2603 = vpop.f32.mrf.mxu0
        %v2604 = vadd.f32 %v2504, %v2603
        %v2605 = vpop.f32.mrf.mxu0
        %v2606 = vpop.f32.mrf.mxu0
        %v2607 = vadd.f32 %v2504, %v2606
        %v2608 = vpop.f32.mrf.mxu0
        %2609 = vmatprep.mubr.bf16.mxu0 0
        %2610 = vmatmul.mubr.bf16.gmra.mxu0 %v2470
        %v2611 = vpop.f32.mrf.mxu0
        %v2612 = vadd.f32 %v2504, %v2611
        %v2613 = vpop.f32.mrf.mxu0
        %v2614 = vpop.f32.mrf.mxu0
        %v2615 = vadd.f32 %v2504, %v2614
        %v2616 = vpop.f32.mrf.mxu0
        %2617 = vmatprep.mubr.bf16.mxu0 0
        %2618 = vmatmul.mubr.bf16.gmra.mxu0 %v2471
        %v2619 = vpop.f32.mrf.mxu0
        %v2620 = vadd.f32 %v2504, %v2619
        %v2621 = vpop.f32.mrf.mxu0
        %v2622 = vpop.f32.mrf.mxu0
        %v2623 = vadd.f32 %v2504, %v2622
        %v2624 = vpop.f32.mrf.mxu0
        %2625 = vmatprep.mubr.bf16.mxu0 0
        %2626 = vmatmul.mubr.bf16.gmra.mxu0 %v2472
        %v2627 = vpop.f32.mrf.mxu0
        %v2628 = vadd.f32 %v2504, %v2627
        %v2629 = vpop.f32.mrf.mxu0
        %v2630 = vpop.f32.mrf.mxu0
        %v2631 = vadd.f32 %v2504, %v2630
        %v2632 = vpop.f32.mrf.mxu0
        %2633 = vmatprep.mubr.bf16.mxu0 0
        %2634 = vmatmul.mubr.bf16.gmra.mxu0 %v2473
        %v2635 = vpop.f32.mrf.mxu0
        %v2636 = vadd.f32 %v2504, %v2635
        %v2637 = vpop.f32.mrf.mxu0
        %v2638 = vpop.f32.mrf.mxu0
        %v2639 = vadd.f32 %v2504, %v2638
        %v2640 = vpop.f32.mrf.mxu0
        %2641 = vmatprep.mubr.bf16.mxu0 0
        %2642 = vmatmul.mubr.bf16.gmra.mxu0 %v2474
        %v2643 = vpop.f32.mrf.mxu0
        %v2644 = vadd.f32 %v2504, %v2643
        %v2645 = vpop.f32.mrf.mxu0
        %v2646 = vpop.f32.mrf.mxu0
        %v2647 = vadd.f32 %v2504, %v2646
        %v2648 = vpop.f32.mrf.mxu0
        %2649 = vmatprep.mubr.bf16.mxu0 0
        %2650 = vmatmul.mubr.bf16.gmra.mxu0 %v2475
        %v2651 = vpop.f32.mrf.mxu0
        %v2652 = vadd.f32 %v2504, %v2651
        %v2653 = vpop.f32.mrf.mxu0
        %v2654 = vpop.f32.mrf.mxu0
        %v2655 = vadd.f32 %v2504, %v2654
        %v2656 = vpop.f32.mrf.mxu0
        %2657 = vmatprep.mubr.bf16.mxu0 0
        %2658 = vmatmul.mubr.bf16.gmra.mxu0 %v2476
        %v2659 = vpop.f32.mrf.mxu0
        %v2660 = vadd.f32 %v2504, %v2659
        %v2661 = vpop.f32.mrf.mxu0
        %v2662 = vpop.f32.mrf.mxu0
        %v2663 = vadd.f32 %v2504, %v2662
        %v2664 = vpop.f32.mrf.mxu0
        %2665 = vmatprep.mubr.bf16.mxu0 0
        %2666 = vmatmul.mubr.bf16.gmra.mxu0 %v2477
        %v2667 = vpop.f32.mrf.mxu0
        %v2668 = vadd.f32 %v2504, %v2667
        %v2669 = vpop.f32.mrf.mxu0
        %v2670 = vpop.f32.mrf.mxu0
        %v2671 = vadd.f32 %v2504, %v2670
        %v2672 = vpop.f32.mrf.mxu0
        %2673 = vmatprep.mubr.bf16.mxu0 0
        %2674 = vmatmul.mubr.bf16.gmra.mxu0 %v2478
        %v2675 = vpop.f32.mrf.mxu0
        %v2676 = vadd.f32 %v2504, %v2675
        %v2677 = vpop.f32.mrf.mxu0
        %v2678 = vpop.f32.mrf.mxu0
        %v2679 = vadd.f32 %v2504, %v2678
        %v2680 = vpop.f32.mrf.mxu0
        %2681 = vmatprep.mubr.bf16.mxu0 0
        %2682 = vmatmul.mubr.bf16.gmra.mxu0 %v2479
        %v2683 = vpop.f32.mrf.mxu0
        %v2684 = vadd.f32 %v2504, %v2683
        %v2685 = vpop.f32.mrf.mxu0
        %v2686 = vpop.f32.mrf.mxu0
        %v2687 = vadd.f32 %v2504, %v2686
        %v2688 = vpop.f32.mrf.mxu0
        %2689 = vmatprep.mubr.bf16.mxu0 0
        %2690 = vmatmul.mubr.bf16.gmra.mxu0 %v2480
        %v2691 = vpop.f32.mrf.mxu0
        %v2692 = vadd.f32 %v2504, %v2691
        %v2693 = vpop.f32.mrf.mxu0
        %v2694 = vpop.f32.mrf.mxu0
        %v2695 = vadd.f32 %v2504, %v2694
        %v2696 = vpop.f32.mrf.mxu0
        %2697 = vmatprep.mubr.bf16.mxu0 0
        %2698 = vmatmul.mubr.bf16.gmra.mxu0 %v2481
        %v2699 = vpop.f32.mrf.mxu0
        %v2700 = vadd.f32 %v2504, %v2699
        %v2701 = vpop.f32.mrf.mxu0
        %v2702 = vpop.f32.mrf.mxu0
        %v2703 = vadd.f32 %v2504, %v2702
        %v2704 = vpop.f32.mrf.mxu0
        %2705 = vmatprep.mubr.bf16.mxu0 0
        %2706 = vmatmul.mubr.bf16.gmra.mxu0 %v2482
        %v2707 = vpop.f32.mrf.mxu0
        %v2708 = vadd.f32 %v2504, %v2707
        %v2709 = vpop.f32.mrf.mxu0
        %v2710 = vpop.f32.mrf.mxu0
        %v2711 = vadd.f32 %v2504, %v2710
        %v2712 = vpop.f32.mrf.mxu0
        %2713 = vdwg.mxu0
        %v2714 = vmul.f32 %v2588, 0.01
        %v2715 = vmul.f32 %v2591, 0.01
        %v2716 = vmul.f32 %v2596, 0.01
        %v2717 = vmul.f32 %v2599, 0.01
        %v2718 = vmul.f32 %v2604, 0.01
        %v2719 = vmul.f32 %v2607, 0.01
        %v2720 = vmul.f32 %v2612, 0.01
        %v2721 = vmul.f32 %v2615, 0.01
        %v2722 = vmul.f32 %v2620, 0.01
        %v2723 = vmul.f32 %v2623, 0.01
        %v2724 = vmul.f32 %v2628, 0.01
        %v2725 = vmul.f32 %v2631, 0.01
        %v2726 = vmul.f32 %v2636, 0.01
        %v2727 = vmul.f32 %v2639, 0.01
        %v2728 = vmul.f32 %v2644, 0.01
        %v2729 = vmul.f32 %v2647, 0.01
        %v2730 = vmul.f32 %v2652, 0.01
        %v2731 = vmul.f32 %v2655, 0.01
        %v2732 = vmul.f32 %v2660, 0.01
        %v2733 = vmul.f32 %v2663, 0.01
        %v2734 = vmul.f32 %v2668, 0.01
        %v2735 = vmul.f32 %v2671, 0.01
        %v2736 = vmul.f32 %v2676, 0.01
        %v2737 = vmul.f32 %v2679, 0.01
        %v2738 = vmul.f32 %v2684, 0.01
        %v2739 = vmul.f32 %v2687, 0.01
        %v2740 = vmul.f32 %v2692, 0.01
        %v2741 = vmul.f32 %v2695, 0.01
        %v2742 = vmul.f32 %v2700, 0.01
        %v2743 = vmul.f32 %v2703, 0.01
        %v2744 = vmul.f32 %v2708, 0.01
        %v2745 = vmul.f32 %v2711, 0.01
        %v2746 = vmax.f32 %v2588, %v2714
        %v2747 = vmax.f32 %v2591, %v2715
        %v2748 = vmax.f32 %v2596, %v2716
        %v2749 = vmax.f32 %v2599, %v2717
        %v2750 = vmax.f32 %v2604, %v2718
        %v2751 = vmax.f32 %v2607, %v2719
        %v2752 = vmax.f32 %v2612, %v2720
        %v2753 = vmax.f32 %v2615, %v2721
        %v2754 = vmax.f32 %v2620, %v2722
        %v2755 = vmax.f32 %v2623, %v2723
        %v2756 = vmax.f32 %v2628, %v2724
        %v2757 = vmax.f32 %v2631, %v2725
        %v2758 = vmax.f32 %v2636, %v2726
        %v2759 = vmax.f32 %v2639, %v2727
        %v2760 = vmax.f32 %v2644, %v2728
        %v2761 = vmax.f32 %v2647, %v2729
        %v2762 = vmax.f32 %v2652, %v2730
        %v2763 = vmax.f32 %v2655, %v2731
        %v2764 = vmax.f32 %v2660, %v2732
        %v2765 = vmax.f32 %v2663, %v2733
        %v2766 = vmax.f32 %v2668, %v2734
        %v2767 = vmax.f32 %v2671, %v2735
        %v2768 = vmax.f32 %v2676, %v2736
        %v2769 = vmax.f32 %v2679, %v2737
        %v2770 = vmax.f32 %v2684, %v2738
        %v2771 = vmax.f32 %v2687, %v2739
        %v2772 = vmax.f32 %v2692, %v2740
        %v2773 = vmax.f32 %v2695, %v2741
        %v2774 = vmax.f32 %v2700, %v2742
        %v2775 = vmax.f32 %v2703, %v2743
        %v2776 = vmax.f32 %v2708, %v2744
        %v2777 = vmax.f32 %v2711, %v2745
        %v2778 = vpack.c.bf16 %v2747, %v2746
        %v2779 = vpack.c.bf16 %v2749, %v2748
        %v2780 = vpack.c.bf16 %v2751, %v2750
        %v2781 = vpack.c.bf16 %v2753, %v2752
        %v2782 = vpack.c.bf16 %v2755, %v2754
        %v2783 = vpack.c.bf16 %v2757, %v2756
        %v2784 = vpack.c.bf16 %v2759, %v2758
        %v2785 = vpack.c.bf16 %v2761, %v2760
        %v2786 = vpack.c.bf16 %v2763, %v2762
        %v2787 = vpack.c.bf16 %v2765, %v2764
        %v2788 = vpack.c.bf16 %v2767, %v2766
        %v2789 = vpack.c.bf16 %v2769, %v2768
        %v2790 = vpack.c.bf16 %v2771, %v2770
        %v2791 = vpack.c.bf16 %v2773, %v2772
        %v2792 = vpack.c.bf16 %v2775, %v2774
        %v2793 = vpack.c.bf16 %v2777, %v2776
        %s2794 = scalar_lea.vmem [#allocation5], 448
        %v2795 = vld [vmem:[%s2794] sm:$0xf]
        %v2796 = vld [vmem:[%s2794 + $0x4] sm:$0xf]
        %v2797 = vld [vmem:[%s2794 + $0x8] sm:$0xf]
        %v2798 = vld [vmem:[%s2794 + $0xc] sm:$0xf]
        %v2799 = vld [vmem:[%s2794 + $0x10] sm:$0xf]
        %v2800 = vld [vmem:[%s2794 + $0x14] sm:$0xf]
        %v2801 = vld [vmem:[%s2794 + $0x18] sm:$0xf]
        %v2802 = vld [vmem:[%s2794 + $0x1c] sm:$0xf]
        %v2803 = vld [vmem:[%s2794 + $0x20] sm:$0xf]
        %v2804 = vld [vmem:[%s2794 + $0x24] sm:$0xf]
        %v2805 = vld [vmem:[%s2794 + $0x28] sm:$0xf]
        %v2806 = vld [vmem:[%s2794 + $0x2c] sm:$0xf]
        %v2807 = vld [vmem:[%s2794 + $0x30] sm:$0xf]
        %v2808 = vld [vmem:[%s2794 + $0x34] sm:$0xf]
        %v2809 = vld [vmem:[%s2794 + $0x38] sm:$0xf]
        %v2810 = vld [vmem:[%s2794 + $0x3c] sm:$0xf]
        %v2811 = vld [vmem:[#allocation7 + $0x7] sm:$0x1]
        %v2812 = vlaneseq
        %v2813 = vshrl.u32 %v2812, 7
        %v2814 = vsub.s32 0, %v2813
        %v2815 = vrot.slane %v2811, %v2814
        %v2832 = vunpack.c.l.b16 %v2795
        %v2833 = vunpack.c.l.b16 %v2796
        %v2834 = vunpack.c.l.b16 %v2797
        %v2835 = vunpack.c.l.b16 %v2798
        %v2836 = vunpack.c.l.b16 %v2799
        %v2837 = vunpack.c.l.b16 %v2800
        %v2838 = vunpack.c.l.b16 %v2801
        %v2839 = vunpack.c.l.b16 %v2802
        %v2840 = vunpack.c.l.b16 %v2803
        %v2841 = vunpack.c.l.b16 %v2804
        %v2842 = vunpack.c.l.b16 %v2805
        %v2843 = vunpack.c.l.b16 %v2806
        %v2844 = vunpack.c.l.b16 %v2807
        %v2845 = vunpack.c.l.b16 %v2808
        %v2846 = vunpack.c.l.b16 %v2809
        %v2847 = vunpack.c.l.b16 %v2810
        %v2848 = vpack.c.b16 %v2833, %v2832
        %v2849 = vpack.c.b16 %v2835, %v2834
        %v2850 = vpack.c.b16 %v2837, %v2836
        %v2851 = vpack.c.b16 %v2839, %v2838
        %v2852 = vpack.c.b16 %v2841, %v2840
        %v2853 = vpack.c.b16 %v2843, %v2842
        %v2854 = vpack.c.b16 %v2845, %v2844
        %v2855 = vpack.c.b16 %v2847, %v2846
        %2864 = vmatprep.subr.bf16.mxu0 0
        %2865 = vmatpush1.bf16.msra.mxu0 %v2855
        %2866 = vmatprep.subr.bf16.mxu0 0
        %2867 = vmatpush1.bf16.msra.mxu0 %v2854
        %2868 = vmatprep.subr.bf16.mxu0 0
        %2869 = vmatpush1.bf16.msra.mxu0 %v2853
        %2870 = vmatprep.subr.bf16.mxu0 0
        %2871 = vmatpush1.bf16.msra.mxu0 %v2852
        %2872 = vmatprep.subr.bf16.mxu0 0
        %2873 = vmatpush1.bf16.msra.mxu0 %v2851
        %2874 = vmatprep.subr.bf16.mxu0 0
        %2875 = vmatpush1.bf16.msra.mxu0 %v2850
        %2876 = vmatprep.subr.bf16.mxu0 0
        %2877 = vmatpush1.bf16.msra.mxu0 %v2849
        %2878 = vmatprep.subr.bf16.mxu0 0
        %2879 = vmatpush1.bf16.msra.mxu0 %v2848
        %2880 = vmatprep.subr.bf16.mxu0 0
        %2881 = vmatpush2.bf16.msra.mxu0 0
        %2882 = vmatprep.subr.bf16.mxu0 0
        %2883 = vmatpush2.bf16.msra.mxu0 0
        %2884 = vmatprep.subr.bf16.mxu0 0
        %2885 = vmatpush2.bf16.msra.mxu0 0
        %2886 = vmatprep.subr.bf16.mxu0 0
        %2887 = vmatpush2.bf16.msra.mxu0 0
        %2888 = vmatprep.subr.bf16.mxu0 0
        %2889 = vmatpush2.bf16.msra.mxu0 0
        %2890 = vmatprep.subr.bf16.mxu0 0
        %2891 = vmatpush2.bf16.msra.mxu0 0
        %2892 = vmatprep.subr.bf16.mxu0 0
        %2893 = vmatpush2.bf16.msra.mxu0 0
        %2894 = vmatprep.subr.bf16.mxu0 0
        %2895 = vmatpush2.bf16.msra.mxu0 0
        %2896 = vmatprep.mubr.bf16.mxu0 0
        %2897 = vmatmul.mubr.bf16.gmra.mxu0 %v2778
        %v2898 = vpop.f32.mrf.mxu0
        %v2899 = vadd.f32 %v2815, %v2898
        %v2900 = vpop.f32.mrf.mxu0
        %v2901 = vpop.f32.mrf.mxu0
        %v2902 = vadd.f32 %v2815, %v2901
        %v2903 = vpop.f32.mrf.mxu0
        %2904 = vmatprep.mubr.bf16.mxu0 0
        %2905 = vmatmul.mubr.bf16.gmra.mxu0 %v2779
        %v2906 = vpop.f32.mrf.mxu0
        %v2907 = vadd.f32 %v2815, %v2906
        %v2908 = vpop.f32.mrf.mxu0
        %v2909 = vpop.f32.mrf.mxu0
        %v2910 = vadd.f32 %v2815, %v2909
        %v2911 = vpop.f32.mrf.mxu0
        %2912 = vmatprep.mubr.bf16.mxu0 0
        %2913 = vmatmul.mubr.bf16.gmra.mxu0 %v2780
        %v2914 = vpop.f32.mrf.mxu0
        %v2915 = vadd.f32 %v2815, %v2914
        %v2916 = vpop.f32.mrf.mxu0
        %v2917 = vpop.f32.mrf.mxu0
        %v2918 = vadd.f32 %v2815, %v2917
        %v2919 = vpop.f32.mrf.mxu0
        %2920 = vmatprep.mubr.bf16.mxu0 0
        %2921 = vmatmul.mubr.bf16.gmra.mxu0 %v2781
        %v2922 = vpop.f32.mrf.mxu0
        %v2923 = vadd.f32 %v2815, %v2922
        %v2924 = vpop.f32.mrf.mxu0
        %v2925 = vpop.f32.mrf.mxu0
        %v2926 = vadd.f32 %v2815, %v2925
        %v2927 = vpop.f32.mrf.mxu0
        %2928 = vmatprep.mubr.bf16.mxu0 0
        %2929 = vmatmul.mubr.bf16.gmra.mxu0 %v2782
        %v2930 = vpop.f32.mrf.mxu0
        %v2931 = vadd.f32 %v2815, %v2930
        %v2932 = vpop.f32.mrf.mxu0
        %v2933 = vpop.f32.mrf.mxu0
        %v2934 = vadd.f32 %v2815, %v2933
        %v2935 = vpop.f32.mrf.mxu0
        %2936 = vmatprep.mubr.bf16.mxu0 0
        %2937 = vmatmul.mubr.bf16.gmra.mxu0 %v2783
        %v2938 = vpop.f32.mrf.mxu0
        %v2939 = vadd.f32 %v2815, %v2938
        %v2940 = vpop.f32.mrf.mxu0
        %v2941 = vpop.f32.mrf.mxu0
        %v2942 = vadd.f32 %v2815, %v2941
        %v2943 = vpop.f32.mrf.mxu0
        %2944 = vmatprep.mubr.bf16.mxu0 0
        %2945 = vmatmul.mubr.bf16.gmra.mxu0 %v2784
        %v2946 = vpop.f32.mrf.mxu0
        %v2947 = vadd.f32 %v2815, %v2946
        %v2948 = vpop.f32.mrf.mxu0
        %v2949 = vpop.f32.mrf.mxu0
        %v2950 = vadd.f32 %v2815, %v2949
        %v2951 = vpop.f32.mrf.mxu0
        %2952 = vmatprep.mubr.bf16.mxu0 0
        %2953 = vmatmul.mubr.bf16.gmra.mxu0 %v2785
        %v2954 = vpop.f32.mrf.mxu0
        %v2955 = vadd.f32 %v2815, %v2954
        %v2956 = vpop.f32.mrf.mxu0
        %v2957 = vpop.f32.mrf.mxu0
        %v2958 = vadd.f32 %v2815, %v2957
        %v2959 = vpop.f32.mrf.mxu0
        %2960 = vmatprep.mubr.bf16.mxu0 0
        %2961 = vmatmul.mubr.bf16.gmra.mxu0 %v2786
        %v2962 = vpop.f32.mrf.mxu0
        %v2963 = vadd.f32 %v2815, %v2962
        %v2964 = vpop.f32.mrf.mxu0
        %v2965 = vpop.f32.mrf.mxu0
        %v2966 = vadd.f32 %v2815, %v2965
        %v2967 = vpop.f32.mrf.mxu0
        %2968 = vmatprep.mubr.bf16.mxu0 0
        %2969 = vmatmul.mubr.bf16.gmra.mxu0 %v2787
        %v2970 = vpop.f32.mrf.mxu0
        %v2971 = vadd.f32 %v2815, %v2970
        %v2972 = vpop.f32.mrf.mxu0
        %v2973 = vpop.f32.mrf.mxu0
        %v2974 = vadd.f32 %v2815, %v2973
        %v2975 = vpop.f32.mrf.mxu0
        %2976 = vmatprep.mubr.bf16.mxu0 0
        %2977 = vmatmul.mubr.bf16.gmra.mxu0 %v2788
        %v2978 = vpop.f32.mrf.mxu0
        %v2979 = vadd.f32 %v2815, %v2978
        %v2980 = vpop.f32.mrf.mxu0
        %v2981 = vpop.f32.mrf.mxu0
        %v2982 = vadd.f32 %v2815, %v2981
        %v2983 = vpop.f32.mrf.mxu0
        %2984 = vmatprep.mubr.bf16.mxu0 0
        %2985 = vmatmul.mubr.bf16.gmra.mxu0 %v2789
        %v2986 = vpop.f32.mrf.mxu0
        %v2987 = vadd.f32 %v2815, %v2986
        %v2988 = vpop.f32.mrf.mxu0
        %v2989 = vpop.f32.mrf.mxu0
        %v2990 = vadd.f32 %v2815, %v2989
        %v2991 = vpop.f32.mrf.mxu0
        %2992 = vmatprep.mubr.bf16.mxu0 0
        %2993 = vmatmul.mubr.bf16.gmra.mxu0 %v2790
        %v2994 = vpop.f32.mrf.mxu0
        %v2995 = vadd.f32 %v2815, %v2994
        %v2996 = vpop.f32.mrf.mxu0
        %v2997 = vpop.f32.mrf.mxu0
        %v2998 = vadd.f32 %v2815, %v2997
        %v2999 = vpop.f32.mrf.mxu0
        %3000 = vmatprep.mubr.bf16.mxu0 0
        %3001 = vmatmul.mubr.bf16.gmra.mxu0 %v2791
        %v3002 = vpop.f32.mrf.mxu0
        %v3003 = vadd.f32 %v2815, %v3002
        %v3004 = vpop.f32.mrf.mxu0
        %v3005 = vpop.f32.mrf.mxu0
        %v3006 = vadd.f32 %v2815, %v3005
        %v3007 = vpop.f32.mrf.mxu0
        %3008 = vmatprep.mubr.bf16.mxu0 0
        %3009 = vmatmul.mubr.bf16.gmra.mxu0 %v2792
        %v3010 = vpop.f32.mrf.mxu0
        %v3011 = vadd.f32 %v2815, %v3010
        %v3012 = vpop.f32.mrf.mxu0
        %v3013 = vpop.f32.mrf.mxu0
        %v3014 = vadd.f32 %v2815, %v3013
        %v3015 = vpop.f32.mrf.mxu0
        %3016 = vmatprep.mubr.bf16.mxu0 0
        %3017 = vmatmul.mubr.bf16.gmra.mxu0 %v2793
        %v3018 = vpop.f32.mrf.mxu0
        %v3019 = vadd.f32 %v2815, %v3018
        %v3020 = vpop.f32.mrf.mxu0
        %v3021 = vpop.f32.mrf.mxu0
        %v3022 = vadd.f32 %v2815, %v3021
        %v3023 = vpop.f32.mrf.mxu0
        %3024 = vdwg.mxu0
        %v3025 = vsub.f32 0.0, %v2899
        %v3026 = vsub.f32 0.0, %v2902
        %v3027 = vsub.f32 0.0, %v2907
        %v3028 = vsub.f32 0.0, %v2910
        %v3029 = vsub.f32 0.0, %v2915
        %v3030 = vsub.f32 0.0, %v2918
        %v3031 = vsub.f32 0.0, %v2923
        %v3032 = vsub.f32 0.0, %v2926
        %v3033 = vsub.f32 0.0, %v2931
        %v3034 = vsub.f32 0.0, %v2934
        %v3035 = vsub.f32 0.0, %v2939
        %v3036 = vsub.f32 0.0, %v2942
        %v3037 = vsub.f32 0.0, %v2947
        %v3038 = vsub.f32 0.0, %v2950
        %v3039 = vsub.f32 0.0, %v2955
        %v3040 = vsub.f32 0.0, %v2958
        %v3041 = vsub.f32 0.0, %v2963
        %v3042 = vsub.f32 0.0, %v2966
        %v3043 = vsub.f32 0.0, %v2971
        %v3044 = vsub.f32 0.0, %v2974
        %v3045 = vsub.f32 0.0, %v2979
        %v3046 = vsub.f32 0.0, %v2982
        %v3047 = vsub.f32 0.0, %v2987
        %v3048 = vsub.f32 0.0, %v2990
        %v3049 = vsub.f32 0.0, %v2995
        %v3050 = vsub.f32 0.0, %v2998
        %v3051 = vsub.f32 0.0, %v3003
        %v3052 = vsub.f32 0.0, %v3006
        %v3053 = vsub.f32 0.0, %v3011
        %v3054 = vsub.f32 0.0, %v3014
        %v3055 = vsub.f32 0.0, %v3019
        %v3056 = vsub.f32 0.0, %v3022
        %v3057 = vmul.f32 %v3025, 1.442695
        %v3058 = vpow.pop %v3057
        %v3059 = vmul.f32 %v3026, 1.442695
        %v3060 = vpow.pop %v3059
        %v3061 = vmul.f32 %v3027, 1.442695
        %v3062 = vpow.pop %v3061
        %v3063 = vmul.f32 %v3028, 1.442695
        %v3064 = vpow.pop %v3063
        %v3065 = vmul.f32 %v3029, 1.442695
        %v3066 = vpow.pop %v3065
        %v3067 = vmul.f32 %v3030, 1.442695
        %v3068 = vpow.pop %v3067
        %v3069 = vmul.f32 %v3031, 1.442695
        %v3070 = vpow.pop %v3069
        %v3071 = vmul.f32 %v3032, 1.442695
        %v3072 = vpow.pop %v3071
        %v3073 = vmul.f32 %v3033, 1.442695
        %v3074 = vpow.pop %v3073
        %v3075 = vmul.f32 %v3034, 1.442695
        %v3076 = vpow.pop %v3075
        %v3077 = vmul.f32 %v3035, 1.442695
        %v3078 = vpow.pop %v3077
        %v3079 = vmul.f32 %v3036, 1.442695
        %v3080 = vpow.pop %v3079
        %v3081 = vmul.f32 %v3037, 1.442695
        %v3082 = vpow.pop %v3081
        %v3083 = vmul.f32 %v3038, 1.442695
        %v3084 = vpow.pop %v3083
        %v3085 = vmul.f32 %v3039, 1.442695
        %v3086 = vpow.pop %v3085
        %v3087 = vmul.f32 %v3040, 1.442695
        %v3088 = vpow.pop %v3087
        %v3089 = vmul.f32 %v3041, 1.442695
        %v3090 = vpow.pop %v3089
        %v3091 = vmul.f32 %v3042, 1.442695
        %v3092 = vpow.pop %v3091
        %v3093 = vmul.f32 %v3043, 1.442695
        %v3094 = vpow.pop %v3093
        %v3095 = vmul.f32 %v3044, 1.442695
        %v3096 = vpow.pop %v3095
        %v3097 = vmul.f32 %v3045, 1.442695
        %v3098 = vpow.pop %v3097
        %v3099 = vmul.f32 %v3046, 1.442695
        %v3100 = vpow.pop %v3099
        %v3101 = vmul.f32 %v3047, 1.442695
        %v3102 = vpow.pop %v3101
        %v3103 = vmul.f32 %v3048, 1.442695
        %v3104 = vpow.pop %v3103
        %v3105 = vmul.f32 %v3049, 1.442695
        %v3106 = vpow.pop %v3105
        %v3107 = vmul.f32 %v3050, 1.442695
        %v3108 = vpow.pop %v3107
        %v3109 = vmul.f32 %v3051, 1.442695
        %v3110 = vpow.pop %v3109
        %v3111 = vmul.f32 %v3052, 1.442695
        %v3112 = vpow.pop %v3111
        %v3113 = vmul.f32 %v3053, 1.442695
        %v3114 = vpow.pop %v3113
        %v3115 = vmul.f32 %v3054, 1.442695
        %v3116 = vpow.pop %v3115
        %v3117 = vmul.f32 %v3055, 1.442695
        %v3118 = vpow.pop %v3117
        %v3119 = vmul.f32 %v3056, 1.442695
        %v3120 = vpow.pop %v3119
        %v3121 = vadd.f32 %v3058, 1.0
        %v3122 = vadd.f32 %v3060, 1.0
        %v3123 = vadd.f32 %v3062, 1.0
        %v3124 = vadd.f32 %v3064, 1.0
        %v3125 = vadd.f32 %v3066, 1.0
        %v3126 = vadd.f32 %v3068, 1.0
        %v3127 = vadd.f32 %v3070, 1.0
        %v3128 = vadd.f32 %v3072, 1.0
        %v3129 = vadd.f32 %v3074, 1.0
        %v3130 = vadd.f32 %v3076, 1.0
        %v3131 = vadd.f32 %v3078, 1.0
        %v3132 = vadd.f32 %v3080, 1.0
        %v3133 = vadd.f32 %v3082, 1.0
        %v3134 = vadd.f32 %v3084, 1.0
        %v3135 = vadd.f32 %v3086, 1.0
        %v3136 = vadd.f32 %v3088, 1.0
        %v3137 = vadd.f32 %v3090, 1.0
        %v3138 = vadd.f32 %v3092, 1.0
        %v3139 = vadd.f32 %v3094, 1.0
        %v3140 = vadd.f32 %v3096, 1.0
        %v3141 = vadd.f32 %v3098, 1.0
        %v3142 = vadd.f32 %v3100, 1.0
        %v3143 = vadd.f32 %v3102, 1.0
        %v3144 = vadd.f32 %v3104, 1.0
        %v3145 = vadd.f32 %v3106, 1.0
        %v3146 = vadd.f32 %v3108, 1.0
        %v3147 = vadd.f32 %v3110, 1.0
        %v3148 = vadd.f32 %v3112, 1.0
        %v3149 = vadd.f32 %v3114, 1.0
        %v3150 = vadd.f32 %v3116, 1.0
        %v3151 = vadd.f32 %v3118, 1.0
        %v3152 = vadd.f32 %v3120, 1.0
        %v3153 = vrcp.pop %v3121
        %v3154 = vrcp.pop %v3122
        %v3155 = vrcp.pop %v3123
        %v3156 = vrcp.pop %v3124
        %v3157 = vrcp.pop %v3125
        %v3158 = vrcp.pop %v3126
        %v3159 = vrcp.pop %v3127
        %v3160 = vrcp.pop %v3128
        %v3161 = vrcp.pop %v3129
        %v3162 = vrcp.pop %v3130
        %v3163 = vrcp.pop %v3131
        %v3164 = vrcp.pop %v3132
        %v3165 = vrcp.pop %v3133
        %v3166 = vrcp.pop %v3134
        %v3167 = vrcp.pop %v3135
        %v3168 = vrcp.pop %v3136
        %v3169 = vrcp.pop %v3137
        %v3170 = vrcp.pop %v3138
        %v3171 = vrcp.pop %v3139
        %v3172 = vrcp.pop %v3140
        %v3173 = vrcp.pop %v3141
        %v3174 = vrcp.pop %v3142
        %v3175 = vrcp.pop %v3143
        %v3176 = vrcp.pop %v3144
        %v3177 = vrcp.pop %v3145
        %v3178 = vrcp.pop %v3146
        %v3179 = vrcp.pop %v3147
        %v3180 = vrcp.pop %v3148
        %v3181 = vrcp.pop %v3149
        %v3182 = vrcp.pop %v3150
        %v3183 = vrcp.pop %v3151
        %v3184 = vrcp.pop %v3152
        %3185 = vst [vmem:[%s240] sm:$0xff] %v3153
        %3186 = vst [vmem:[%s240 + $0x8] sm:$0xff] %v3154
        %3187 = vst [vmem:[%s240 + $0x10] sm:$0xff] %v3155
        %3188 = vst [vmem:[%s240 + $0x18] sm:$0xff] %v3156
        %3189 = vst [vmem:[%s240 + $0x20] sm:$0xff] %v3157
        %3190 = vst [vmem:[%s240 + $0x28] sm:$0xff] %v3158
        %3191 = vst [vmem:[%s240 + $0x30] sm:$0xff] %v3159
        %3192 = vst [vmem:[%s240 + $0x38] sm:$0xff] %v3160
        %3193 = vst [vmem:[%s240 + $0x40] sm:$0xff] %v3161
        %3194 = vst [vmem:[%s240 + $0x48] sm:$0xff] %v3162
        %3195 = vst [vmem:[%s240 + $0x50] sm:$0xff] %v3163
        %3196 = vst [vmem:[%s240 + $0x58] sm:$0xff] %v3164
        %3197 = vst [vmem:[%s240 + $0x60] sm:$0xff] %v3165
        %3198 = vst [vmem:[%s240 + $0x68] sm:$0xff] %v3166
        %3199 = vst [vmem:[%s240 + $0x70] sm:$0xff] %v3167
        %3200 = vst [vmem:[%s240 + $0x78] sm:$0xff] %v3168
        %3201 = vst [vmem:[%s240 + $0x80] sm:$0xff] %v3169
        %3202 = vst [vmem:[%s240 + $0x88] sm:$0xff] %v3170
        %3203 = vst [vmem:[%s240 + $0x90] sm:$0xff] %v3171
        %3204 = vst [vmem:[%s240 + $0x98] sm:$0xff] %v3172
        %3205 = vst [vmem:[%s240 + $0xa0] sm:$0xff] %v3173
        %3206 = vst [vmem:[%s240 + $0xa8] sm:$0xff] %v3174
        %3207 = vst [vmem:[%s240 + $0xb0] sm:$0xff] %v3175
        %3208 = vst [vmem:[%s240 + $0xb8] sm:$0xff] %v3176
        %3209 = vst [vmem:[%s240 + $0xc0] sm:$0xff] %v3177
        %3210 = vst [vmem:[%s240 + $0xc8] sm:$0xff] %v3178
        %3211 = vst [vmem:[%s240 + $0xd0] sm:$0xff] %v3179
        %3212 = vst [vmem:[%s240 + $0xd8] sm:$0xff] %v3180
        %3213 = vst [vmem:[%s240 + $0xe0] sm:$0xff] %v3181
        %3214 = vst [vmem:[%s240 + $0xe8] sm:$0xff] %v3182
        %3215 = vst [vmem:[%s240 + $0xf0] sm:$0xff] %v3183
        %3216 = vst [vmem:[%s240 + $0xf8] sm:$0xff] %v3184
        %s3217 = sand.u32 %s97, 1
        %s3218 = scalar_lea.sflag [#allocation4], %s3217
        %s3219 = sand.u32 %s97, 1
        %s3220 = smul.addr %s3219, 768
        %s3221 = scalar_lea.vmem [#allocation8], %s3220
        // Predicated region
        $region45: #{tpu_custom_call.1} parent=31 // pred_check
          %p3222 = pneg %p107
        $region46: #{tpu_custom_call.1} parent=31 // pred_check_branch
          %3224 = sbr.rel (%p3222) target = $region48
        $region47: #{tpu_custom_call.1} parent=31 // pred_region
          #allocation12 [shape = 'u32[6]{0}', space=smem, size = 0x18, scoped, tag = 'DMA stride descriptor']
          %s3225 = smul.u32 32, %s21
          %s3227 = ssub.s32 12288, 12288
          %3228 = vsyncadd %s3218, %s3227
          %s3229 = smul.addr %s3225, 128
          %s3230 = scalar_lea.hbm %s3, %s3229
          %s3232 = sshll.u32 1, 14
          %s3233 = sxor.u32 4294967295, %s3232
          %s3236 = sshll.u32 7, 18
          %s3237 = sxor.u32 4294967295, %s3236
          %s3238 = sand.u32 0, %s3237
          %s3240 = sor.u32 %s3238, 0
          %s3241 = sshll.u32 %s3221, 4
          %s3242 = int_to_ptr.vmem [resolvable:$true] %s3241
          %3248 = sst [smem:[#allocation12]] 4096
          %s3249 = scalar_lea.smem [#allocation12], 1
          %3250 = sst [smem:[%s3249]] 8192
          %s3251 = scalar_lea.smem [#allocation12], 2
          %3252 = sst [smem:[%s3251]] 32
          %s3253 = scalar_lea.smem [#allocation12], 3
          %3254 = sst [smem:[%s3253]] 128
          %s3255 = scalar_lea.smem [#allocation12], 4
          %3256 = sst [smem:[%s3255]] 128
          %s3257 = scalar_lea.smem [#allocation12], 5
          %3258 = sst [smem:[%s3257]] 8
          %3260 = dma.general %s3242, 12288, %s3230, %s3218, 131072, [#allocation12], %s3240, 0
        $region48: #{tpu_custom_call.1} parent=31 // pred_fallthru
          _
      $region32: #{tpu_custom_call.1} parent=5 // pred_fallthru
        _
      %p3261 = scmp.le.s32.totalorder 2, %s16
      // Predicated region
      $region49: #{tpu_custom_call.1} parent=5 // pred_check
        %p3262 = pneg %p3261
      $region50: #{tpu_custom_call.1} parent=5 // pred_check_branch
        %3264 = sbr.rel (%p3262) target = $region52
      $region51: #{tpu_custom_call.1} parent=5 // pred_region
        %s3265 = ssub.s32 %s16, 2
        // Predicated region
        $region53: #{tpu_custom_call.1} parent=51 // pred_check
          %p3266 = pneg %p113
        $region54: #{tpu_custom_call.1} parent=51 // pred_check_branch
          %3268 = sbr.rel (%p3266) target = $region56
        $region55: #{tpu_custom_call.1} parent=51 // pred_region
          %s3269 = sand.u32 %s98, 1
          %s3270 = scalar_lea.sflag [#allocation4], %s3269
          %s3271 = sand.u32 %s98, 1
          %s3272 = smul.addr %s3271, 768
          %s3273 = scalar_lea.vmem [#allocation8], %s3272
          %3274 = dma.done %s3270, 12288
        $region56: #{tpu_custom_call.1} parent=51 // pred_fallthru
          _
      $region52: #{tpu_custom_call.1} parent=5 // pred_fallthru
        _
    $region6: #{tpu_custom_call.1} parent=1 // loop_footer
      %s20 = sadd.s32 1, %s16
    $region7: #{tpu_custom_call.1} parent=1 // loop_footer_branch
      %15 = sbr.rel target = $region3
    $region8: #{tpu_custom_call.1} parent=1 // loop_exit
      _
    %3275 = vsyncpa [#allocation3], 1
    %s3276 = scalar_lea.sflag [#allocation3], 1
    %3277 = vsyncpa %s3276, 1
    %3278 = vsyncpa [#allocation6], 1
    %3279 = vsyncpa [#allocation4], 1
    %s3280 = scalar_lea.sflag [#allocation4], 1
    %3281 = vsyncpa %s3280, 1

</llo_original>
